<compile_context>
chip_gen: v6e
topology: v6e:2x2x1
jax: 0.10.0
libtpu: 0.0.40
codegen_flags: <defaults>
</compile_context>

<pallas_src>
import functools
import math

import jax
import jax.numpy as jnp
import numpy as np
from jax import lax
from jax.experimental import pallas as pl
from jax.experimental.pallas import tpu as pltpu


def _pick_row_block(H, Wp, target_lanes=1024):
    """Rows per output chunk: lane extent TH*Wp is a multiple of 128 when
    possible (unmasked stores) and ~target_lanes lanes (bounded vregs)."""
    need = 128 // math.gcd(Wp, 128)        # TH multiple of this => TH*Wp % 128 == 0
    cands = [th for th in range(need, H + 1, need) if H % th == 0]
    for th in cands:
        if th * Wp >= target_lanes:
            return th
    if cands:
        return cands[-1]
    return H                               # single full-block chunk


def _classifier_kernel(xf_ref, wt_ref, bsum_ref, out_ref, *,
                       H, Wp, Cin, Cout, TH, offsets):
    """One batch element per grid step.

    xf_ref  : (Cin, Lf)      bf16 extended flat padded image
    wt_ref  : (Cout, T*Cin)  bf16 tap-major flattened weights (VMEM-resident)
    bsum_ref: (Cout, 1)      f32 pre-summed branch biases
    out_ref : (Cout, H*Wp)   output in padded-width coords (halo cols garbage)
    """
    bsum = bsum_ref[...]                                    # hoisted (f32)
    L = TH * Wp
    for h0 in range(0, H, TH):                              # static row chunks
        row0 = h0 * Wp
        acc = None
        for t, off in enumerate(offsets):                   # B*9 taps, static
            patch = xf_ref[:, row0 + off: row0 + off + L]   # (Cin, L) bf16
            w_t = wt_ref[:, t * Cin:(t + 1) * Cin]          # (Cout, Cin) bf16
            part = jnp.dot(w_t, patch,
                           preferred_element_type=jnp.float32)
            acc = part if acc is None else acc + part
        out_ref[:, row0:row0 + L] = (acc + bsum).astype(out_ref.dtype)


def classifier_module(x_nchw, weights, biases, dilations, paddings,
                      compute_dtype=jnp.bfloat16):
    """x_nchw:  (N, Cin, H, W)          like PyTorch
       weights: (B, Cout, Cin, 3, 3)    per-branch OIHW (PyTorch layout)
       biases:  (B, Cout)
       returns  (N, Cout, H, W)
    """
    assert all(d == p for d, p in zip(dilations, paddings)), \
        "3x3 stride-1 branches only sum if padding == dilation (as in DeepLabV2)"
    N, Cin, H, W = x_nchw.shape
    B, Cout, Cin_w, KH, KW = weights.shape
    assert (KH, KW) == (3, 3) and Cin_w == Cin and B == len(dilations)

    max_pad = max(paddings)
    Hp, Wp = H + 2 * max_pad, W + 2 * max_pad
    T = B * KH * KW

    # Pad once by the largest padding, flatten spatial, then extend the flat
    # axis by max_pad on both ends so every tap window is an in-bounds
    # contiguous lane slice (cross-row "bleed" only lands in discarded
    # width-halo output columns).
    xp = jnp.pad(x_nchw,
                 ((0, 0), (0, 0), (max_pad, max_pad), (max_pad, max_pad)))
    xf = jnp.pad(xp.reshape(N, Cin, Hp * Wp),
                 ((0, 0), (0, 0), (max_pad, max_pad)))
    Lf = Hp * Wp + 2 * max_pad
    xf = xf.astype(compute_dtype)

    # (B, Cout, Cin, 3, 3) -> (Cout, B, 3, 3, Cin) -> (Cout, T*Cin); tap order
    # (branch, kh, kw) with cin fastest matches the kernel's offsets list.
    wt = jnp.transpose(weights, (1, 0, 3, 4, 2)).reshape(Cout, T * Cin)
    wt = wt.astype(compute_dtype)
    bsum = jnp.sum(biases.astype(jnp.float32), axis=0).reshape(Cout, 1)

    # Flat lane offset of tap (branch d, kh, kw): the value for output (h, c)
    # (c in padded-width coords) lives at
    #   max_pad + (h + max_pad + (kh-1)*d)*Wp + c + (kw-1)*d.
    offsets = []
    for d in dilations:
        for kh in range(3):
            for kw in range(3):
                offsets.append(max_pad + (max_pad + (kh - 1) * d) * Wp
                               + (kw - 1) * d)

    TH = _pick_row_block(H, Wp)

    kernel = functools.partial(
        _classifier_kernel, H=H, Wp=Wp, Cin=Cin, Cout=Cout, TH=TH,
        offsets=tuple(offsets))

    # Per-step VMEM budget: double-buffered input/output + resident weights.
    itm_c = np.dtype(compute_dtype).itemsize
    itm_o = np.dtype(x_nchw.dtype).itemsize
    bytes_in = Cin * Lf * itm_c
    bytes_wt = Cout * T * Cin * itm_c
    bytes_out = Cout * H * Wp * itm_o
    vmem_budget = int(min(64 * 1024 * 1024,
                          2 * (2 * bytes_in + bytes_wt + 2 * bytes_out)
                          + 8 * 1024 * 1024))

    out_flat = pl.pallas_call(
        kernel,
        out_shape=jax.ShapeDtypeStruct((N, Cout, H * Wp), x_nchw.dtype),
        grid_spec=pltpu.PrefetchScalarGridSpec(
            num_scalar_prefetch=0,
            grid=(N,),
            in_specs=[
                pl.BlockSpec((None, Cin, Lf), lambda n: (n, 0, 0)),
                pl.BlockSpec((Cout, T * Cin), lambda n: (0, 0)),   # resident
                pl.BlockSpec((Cout, 1), lambda n: (0, 0)),         # resident
            ],
            out_specs=pl.BlockSpec((None, Cout, H * Wp), lambda n: (n, 0, 0)),
        ),
        compiler_params=pltpu.CompilerParams(
            dimension_semantics=("parallel",),
            vmem_limit_bytes=vmem_budget),
    )(xf, wt, bsum)

    # Drop the width-halo columns; reshape/slice is cheap XLA work.
    out = out_flat.reshape(N, Cout, H, Wp)[:, :, :, max_pad:max_pad + W]
    return out


def _reference(x, weights, biases, dilations, paddings, compute_dtype):
    """Plain-JAX reference (lax conv) matching the PyTorch forward, with the
    same bf16 input/weight staging the kernel uses (accumulation in f32)."""
    xq = x.astype(compute_dtype).astype(jnp.float32)
    wq = weights.astype(compute_dtype).astype(jnp.float32)
    out = None
    for bi, (d, p) in enumerate(zip(dilations, paddings)):
        y = lax.conv_general_dilated(
            xq, wq[bi], (1, 1), [(p, p), (p, p)],
            rhs_dilation=(d, d),
            dimension_numbers=("NCHW", "OIHW", "NCHW"),
        ) + biases[bi][None, :, None, None]
        out = y if out is None else out + y
    return out


if __name__ == "__main__":
    # Small deterministic config (module: inplanes, dilation_series,
    # padding_series, num_classes).
    inplanes = 8
    num_classes = 8
    dilation_series = [1, 2, 3, 4]
    padding_series = [1, 2, 3, 4]
    N, H, W = 2, 16, 16

    key = jax.random.PRNGKey(0)
    kx, kw, kb = jax.random.split(key, 3)

    x = jax.random.normal(kx, (N, inplanes, H, W), dtype=jnp.float32)
    # weight.data.normal_(0, 0.01) in the module; bias left at a small
    # deterministic uniform init.
    weights = 0.01 * jax.random.normal(
        kw, (len(dilation_series), num_classes, inplanes, 3, 3),
        dtype=jnp.float32)
    biases = 0.05 * jax.random.uniform(
        kb, (len(dilation_series), num_classes), dtype=jnp.float32,
        minval=-1.0, maxval=1.0)

    out = classifier_module(x, weights, biases, dilation_series,
                            padding_series)
    out = jax.block_until_ready(out)

    ref = jax.block_until_ready(
        _reference(x, weights, biases, dilation_series, padding_series,
                   jnp.bfloat16))

    np.testing.assert_allclose(np.asarray(out), np.asarray(ref),
                               rtol=1e-3, atol=1e-4)
    assert out.shape == (N, num_classes, H, W)
    print("KERNEL_OK")
</pallas_src>

<mosaic_0001>
module attributes {stable_mosaic.version = 11 : i64} {
  func.func @_classifier_kernel(%arg0: i32, %arg1: memref<1x8x584xbf16, #tpu.memory_space<vmem>>, %arg2: memref<8x288xbf16, #tpu.memory_space<vmem>>, %arg3: memref<8x1xf32, #tpu.memory_space<vmem>>, %arg4: memref<1x8x384xf32, #tpu.memory_space<vmem>>) attributes {dimension_semantics = [#tpu.dimension_semantics<parallel>], iteration_bounds = array<i64: 2>, scalar_prefetch = 0 : i64, scratch_operands = 0 : i64, tpu.core_type = #tpu.core_type<tc>, window_params = [{transform_indices = @transform_0, window_bounds = array<i64: 1, 8, 584>}, {pipeline_mode = #tpu.pipeline_mode<synchronous>, transform_indices = @transform_1, window_bounds = array<i64: 8, 288>}, {pipeline_mode = #tpu.pipeline_mode<synchronous>, transform_indices = @transform_2, window_bounds = array<i64: 8, 1>}, {transform_indices = @transform_3, window_bounds = array<i64: 1, 8, 384>}]} {
    %c0 = arith.constant 0 : index
    %c0_0 = arith.constant 0 : index
    %0 = vector.load %arg3[%c0, %c0_0] : memref<8x1xf32, #tpu.memory_space<vmem>>, vector<8x1xf32>
    %c0_1 = arith.constant 0 : index
    %c0_2 = arith.constant 0 : index
    %c75 = arith.constant 75 : index
    %1 = vector.load %arg1[%c0_1, %c0_2, %c75] : memref<1x8x584xbf16, #tpu.memory_space<vmem>>, vector<1x8x384xbf16>
    %2 = vector.shape_cast %1 : vector<1x8x384xbf16> to vector<8x384xbf16>
    %c0_3 = arith.constant 0 : index
    %c0_4 = arith.constant 0 : index
    %3 = vector.load %arg2[%c0_3, %c0_4] : memref<8x288xbf16, #tpu.memory_space<vmem>>, vector<8x8xbf16>
    %cst = arith.constant dense<0.000000e+00> : vector<8x384xf32>
    %4 = tpu.matmul %3, %2, %cst {dimension_numbers = #tpu.dot_dimension_numbers<[1], [0], [0], [1], [0, 0, 1, 1], [], []>} : vector<8x8xbf16>, vector<8x384xbf16>, vector<8x384xf32> -> vector<8x384xf32>
    %c0_5 = arith.constant 0 : index
    %c0_6 = arith.constant 0 : index
    %c76 = arith.constant 76 : index
    %5 = vector.load %arg1[%c0_5, %c0_6, %c76] : memref<1x8x584xbf16, #tpu.memory_space<vmem>>, vector<1x8x384xbf16>
    %6 = vector.shape_cast %5 : vector<1x8x384xbf16> to vector<8x384xbf16>
    %c0_7 = arith.constant 0 : index
    %c8 = arith.constant 8 : index
    %7 = vector.load %arg2[%c0_7, %c8] : memref<8x288xbf16, #tpu.memory_space<vmem>>, vector<8x8xbf16>
    %cst_8 = arith.constant dense<0.000000e+00> : vector<8x384xf32>
    %8 = tpu.matmul %7, %6, %cst_8 {dimension_numbers = #tpu.dot_dimension_numbers<[1], [0], [0], [1], [0, 0, 1, 1], [], []>} : vector<8x8xbf16>, vector<8x384xbf16>, vector<8x384xf32> -> vector<8x384xf32>
    %9 = arith.addf %4, %8 : vector<8x384xf32>
    %c0_9 = arith.constant 0 : index
    %c0_10 = arith.constant 0 : index
    %c77 = arith.constant 77 : index
    %10 = vector.load %arg1[%c0_9, %c0_10, %c77] : memref<1x8x584xbf16, #tpu.memory_space<vmem>>, vector<1x8x384xbf16>
    %11 = vector.shape_cast %10 : vector<1x8x384xbf16> to vector<8x384xbf16>
    %c0_11 = arith.constant 0 : index
    %c16 = arith.constant 16 : index
    %12 = vector.load %arg2[%c0_11, %c16] : memref<8x288xbf16, #tpu.memory_space<vmem>>, vector<8x8xbf16>
    %cst_12 = arith.constant dense<0.000000e+00> : vector<8x384xf32>
    %13 = tpu.matmul %12, %11, %cst_12 {dimension_numbers = #tpu.dot_dimension_numbers<[1], [0], [0], [1], [0, 0, 1, 1], [], []>} : vector<8x8xbf16>, vector<8x384xbf16>, vector<8x384xf32> -> vector<8x384xf32>
    %14 = arith.addf %9, %13 : vector<8x384xf32>
    %c0_13 = arith.constant 0 : index
    %c0_14 = arith.constant 0 : index
    %c99 = arith.constant 99 : index
    %15 = vector.load %arg1[%c0_13, %c0_14, %c99] : memref<1x8x584xbf16, #tpu.memory_space<vmem>>, vector<1x8x384xbf16>
    %16 = vector.shape_cast %15 : vector<1x8x384xbf16> to vector<8x384xbf16>
    %c0_15 = arith.constant 0 : index
    %c24 = arith.constant 24 : index
    %17 = vector.load %arg2[%c0_15, %c24] : memref<8x288xbf16, #tpu.memory_space<vmem>>, vector<8x8xbf16>
    %cst_16 = arith.constant dense<0.000000e+00> : vector<8x384xf32>
    %18 = tpu.matmul %17, %16, %cst_16 {dimension_numbers = #tpu.dot_dimension_numbers<[1], [0], [0], [1], [0, 0, 1, 1], [], []>} : vector<8x8xbf16>, vector<8x384xbf16>, vector<8x384xf32> -> vector<8x384xf32>
    %19 = arith.addf %14, %18 : vector<8x384xf32>
    %c0_17 = arith.constant 0 : index
    %c0_18 = arith.constant 0 : index
    %c100 = arith.constant 100 : index
    %20 = vector.load %arg1[%c0_17, %c0_18, %c100] : memref<1x8x584xbf16, #tpu.memory_space<vmem>>, vector<1x8x384xbf16>
    %21 = vector.shape_cast %20 : vector<1x8x384xbf16> to vector<8x384xbf16>
    %c0_19 = arith.constant 0 : index
    %c32 = arith.constant 32 : index
    %22 = vector.load %arg2[%c0_19, %c32] : memref<8x288xbf16, #tpu.memory_space<vmem>>, vector<8x8xbf16>
    %cst_20 = arith.constant dense<0.000000e+00> : vector<8x384xf32>
    %23 = tpu.matmul %22, %21, %cst_20 {dimension_numbers = #tpu.dot_dimension_numbers<[1], [0], [0], [1], [0, 0, 1, 1], [], []>} : vector<8x8xbf16>, vector<8x384xbf16>, vector<8x384xf32> -> vector<8x384xf32>
    %24 = arith.addf %19, %23 : vector<8x384xf32>
    %c0_21 = arith.constant 0 : index
    %c0_22 = arith.constant 0 : index
    %c101 = arith.constant 101 : index
    %25 = vector.load %arg1[%c0_21, %c0_22, %c101] : memref<1x8x584xbf16, #tpu.memory_space<vmem>>, vector<1x8x384xbf16>
    %26 = vector.shape_cast %25 : vector<1x8x384xbf16> to vector<8x384xbf16>
    %c0_23 = arith.constant 0 : index
    %c40 = arith.constant 40 : index
    %27 = vector.load %arg2[%c0_23, %c40] : memref<8x288xbf16, #tpu.memory_space<vmem>>, vector<8x8xbf16>
    %cst_24 = arith.constant dense<0.000000e+00> : vector<8x384xf32>
    %28 = tpu.matmul %27, %26, %cst_24 {dimension_numbers = #tpu.dot_dimension_numbers<[1], [0], [0], [1], [0, 0, 1, 1], [], []>} : vector<8x8xbf16>, vector<8x384xbf16>, vector<8x384xf32> -> vector<8x384xf32>
    %29 = arith.addf %24, %28 : vector<8x384xf32>
    %c0_25 = arith.constant 0 : index
    %c0_26 = arith.constant 0 : index
    %c123 = arith.constant 123 : index
    %30 = vector.load %arg1[%c0_25, %c0_26, %c123] : memref<1x8x584xbf16, #tpu.memory_space<vmem>>, vector<1x8x384xbf16>
    %31 = vector.shape_cast %30 : vector<1x8x384xbf16> to vector<8x384xbf16>
    %c0_27 = arith.constant 0 : index
    %c48 = arith.constant 48 : index
    %32 = vector.load %arg2[%c0_27, %c48] : memref<8x288xbf16, #tpu.memory_space<vmem>>, vector<8x8xbf16>
    %cst_28 = arith.constant dense<0.000000e+00> : vector<8x384xf32>
    %33 = tpu.matmul %32, %31, %cst_28 {dimension_numbers = #tpu.dot_dimension_numbers<[1], [0], [0], [1], [0, 0, 1, 1], [], []>} : vector<8x8xbf16>, vector<8x384xbf16>, vector<8x384xf32> -> vector<8x384xf32>
    %34 = arith.addf %29, %33 : vector<8x384xf32>
    %c0_29 = arith.constant 0 : index
    %c0_30 = arith.constant 0 : index
    %c124 = arith.constant 124 : index
    %35 = vector.load %arg1[%c0_29, %c0_30, %c124] : memref<1x8x584xbf16, #tpu.memory_space<vmem>>, vector<1x8x384xbf16>
    %36 = vector.shape_cast %35 : vector<1x8x384xbf16> to vector<8x384xbf16>
    %c0_31 = arith.constant 0 : index
    %c56 = arith.constant 56 : index
    %37 = vector.load %arg2[%c0_31, %c56] : memref<8x288xbf16, #tpu.memory_space<vmem>>, vector<8x8xbf16>
    %cst_32 = arith.constant dense<0.000000e+00> : vector<8x384xf32>
    %38 = tpu.matmul %37, %36, %cst_32 {dimension_numbers = #tpu.dot_dimension_numbers<[1], [0], [0], [1], [0, 0, 1, 1], [], []>} : vector<8x8xbf16>, vector<8x384xbf16>, vector<8x384xf32> -> vector<8x384xf32>
    %39 = arith.addf %34, %38 : vector<8x384xf32>
    %c0_33 = arith.constant 0 : index
    %c0_34 = arith.constant 0 : index
    %c125 = arith.constant 125 : index
    %40 = vector.load %arg1[%c0_33, %c0_34, %c125] : memref<1x8x584xbf16, #tpu.memory_space<vmem>>, vector<1x8x384xbf16>
    %41 = vector.shape_cast %40 : vector<1x8x384xbf16> to vector<8x384xbf16>
    %c0_35 = arith.constant 0 : index
    %c64 = arith.constant 64 : index
    %42 = vector.load %arg2[%c0_35, %c64] : memref<8x288xbf16, #tpu.memory_space<vmem>>, vector<8x8xbf16>
    %cst_36 = arith.constant dense<0.000000e+00> : vector<8x384xf32>
    %43 = tpu.matmul %42, %41, %cst_36 {dimension_numbers = #tpu.dot_dimension_numbers<[1], [0], [0], [1], [0, 0, 1, 1], [], []>} : vector<8x8xbf16>, vector<8x384xbf16>, vector<8x384xf32> -> vector<8x384xf32>
    %44 = arith.addf %39, %43 : vector<8x384xf32>
    %c0_37 = arith.constant 0 : index
    %c0_38 = arith.constant 0 : index
    %c50 = arith.constant 50 : index
    %45 = vector.load %arg1[%c0_37, %c0_38, %c50] : memref<1x8x584xbf16, #tpu.memory_space<vmem>>, vector<1x8x384xbf16>
    %46 = vector.shape_cast %45 : vector<1x8x384xbf16> to vector<8x384xbf16>
    %c0_39 = arith.constant 0 : index
    %c72 = arith.constant 72 : index
    %47 = vector.load %arg2[%c0_39, %c72] : memref<8x288xbf16, #tpu.memory_space<vmem>>, vector<8x8xbf16>
    %cst_40 = arith.constant dense<0.000000e+00> : vector<8x384xf32>
    %48 = tpu.matmul %47, %46, %cst_40 {dimension_numbers = #tpu.dot_dimension_numbers<[1], [0], [0], [1], [0, 0, 1, 1], [], []>} : vector<8x8xbf16>, vector<8x384xbf16>, vector<8x384xf32> -> vector<8x384xf32>
    %49 = arith.addf %44, %48 : vector<8x384xf32>
    %c0_41 = arith.constant 0 : index
    %c0_42 = arith.constant 0 : index
    %c52 = arith.constant 52 : index
    %50 = vector.load %arg1[%c0_41, %c0_42, %c52] : memref<1x8x584xbf16, #tpu.memory_space<vmem>>, vector<1x8x384xbf16>
    %51 = vector.shape_cast %50 : vector<1x8x384xbf16> to vector<8x384xbf16>
    %c0_43 = arith.constant 0 : index
    %c80 = arith.constant 80 : index
    %52 = vector.load %arg2[%c0_43, %c80] : memref<8x288xbf16, #tpu.memory_space<vmem>>, vector<8x8xbf16>
    %cst_44 = arith.constant dense<0.000000e+00> : vector<8x384xf32>
    %53 = tpu.matmul %52, %51, %cst_44 {dimension_numbers = #tpu.dot_dimension_numbers<[1], [0], [0], [1], [0, 0, 1, 1], [], []>} : vector<8x8xbf16>, vector<8x384xbf16>, vector<8x384xf32> -> vector<8x384xf32>
    %54 = arith.addf %49, %53 : vector<8x384xf32>
    %c0_45 = arith.constant 0 : index
    %c0_46 = arith.constant 0 : index
    %c54 = arith.constant 54 : index
    %55 = vector.load %arg1[%c0_45, %c0_46, %c54] : memref<1x8x584xbf16, #tpu.memory_space<vmem>>, vector<1x8x384xbf16>
    %56 = vector.shape_cast %55 : vector<1x8x384xbf16> to vector<8x384xbf16>
    %c0_47 = arith.constant 0 : index
    %c88 = arith.constant 88 : index
    %57 = vector.load %arg2[%c0_47, %c88] : memref<8x288xbf16, #tpu.memory_space<vmem>>, vector<8x8xbf16>
    %cst_48 = arith.constant dense<0.000000e+00> : vector<8x384xf32>
    %58 = tpu.matmul %57, %56, %cst_48 {dimension_numbers = #tpu.dot_dimension_numbers<[1], [0], [0], [1], [0, 0, 1, 1], [], []>} : vector<8x8xbf16>, vector<8x384xbf16>, vector<8x384xf32> -> vector<8x384xf32>
    %59 = arith.addf %54, %58 : vector<8x384xf32>
    %c0_49 = arith.constant 0 : index
    %c0_50 = arith.constant 0 : index
    %c98 = arith.constant 98 : index
    %60 = vector.load %arg1[%c0_49, %c0_50, %c98] : memref<1x8x584xbf16, #tpu.memory_space<vmem>>, vector<1x8x384xbf16>
    %61 = vector.shape_cast %60 : vector<1x8x384xbf16> to vector<8x384xbf16>
    %c0_51 = arith.constant 0 : index
    %c96 = arith.constant 96 : index
    %62 = vector.load %arg2[%c0_51, %c96] : memref<8x288xbf16, #tpu.memory_space<vmem>>, vector<8x8xbf16>
    %cst_52 = arith.constant dense<0.000000e+00> : vector<8x384xf32>
    %63 = tpu.matmul %62, %61, %cst_52 {dimension_numbers = #tpu.dot_dimension_numbers<[1], [0], [0], [1], [0, 0, 1, 1], [], []>} : vector<8x8xbf16>, vector<8x384xbf16>, vector<8x384xf32> -> vector<8x384xf32>
    %64 = arith.addf %59, %63 : vector<8x384xf32>
    %c0_53 = arith.constant 0 : index
    %c0_54 = arith.constant 0 : index
    %c100_55 = arith.constant 100 : index
    %65 = vector.load %arg1[%c0_53, %c0_54, %c100_55] : memref<1x8x584xbf16, #tpu.memory_space<vmem>>, vector<1x8x384xbf16>
    %66 = vector.shape_cast %65 : vector<1x8x384xbf16> to vector<8x384xbf16>
    %c0_56 = arith.constant 0 : index
    %c104 = arith.constant 104 : index
    %67 = vector.load %arg2[%c0_56, %c104] : memref<8x288xbf16, #tpu.memory_space<vmem>>, vector<8x8xbf16>
    %cst_57 = arith.constant dense<0.000000e+00> : vector<8x384xf32>
    %68 = tpu.matmul %67, %66, %cst_57 {dimension_numbers = #tpu.dot_dimension_numbers<[1], [0], [0], [1], [0, 0, 1, 1], [], []>} : vector<8x8xbf16>, vector<8x384xbf16>, vector<8x384xf32> -> vector<8x384xf32>
    %69 = arith.addf %64, %68 : vector<8x384xf32>
    %c0_58 = arith.constant 0 : index
    %c0_59 = arith.constant 0 : index
    %c102 = arith.constant 102 : index
    %70 = vector.load %arg1[%c0_58, %c0_59, %c102] : memref<1x8x584xbf16, #tpu.memory_space<vmem>>, vector<1x8x384xbf16>
    %71 = vector.shape_cast %70 : vector<1x8x384xbf16> to vector<8x384xbf16>
    %c0_60 = arith.constant 0 : index
    %c112 = arith.constant 112 : index
    %72 = vector.load %arg2[%c0_60, %c112] : memref<8x288xbf16, #tpu.memory_space<vmem>>, vector<8x8xbf16>
    %cst_61 = arith.constant dense<0.000000e+00> : vector<8x384xf32>
    %73 = tpu.matmul %72, %71, %cst_61 {dimension_numbers = #tpu.dot_dimension_numbers<[1], [0], [0], [1], [0, 0, 1, 1], [], []>} : vector<8x8xbf16>, vector<8x384xbf16>, vector<8x384xf32> -> vector<8x384xf32>
    %74 = arith.addf %69, %73 : vector<8x384xf32>
    %c0_62 = arith.constant 0 : index
    %c0_63 = arith.constant 0 : index
    %c146 = arith.constant 146 : index
    %75 = vector.load %arg1[%c0_62, %c0_63, %c146] : memref<1x8x584xbf16, #tpu.memory_space<vmem>>, vector<1x8x384xbf16>
    %76 = vector.shape_cast %75 : vector<1x8x384xbf16> to vector<8x384xbf16>
    %c0_64 = arith.constant 0 : index
    %c120 = arith.constant 120 : index
    %77 = vector.load %arg2[%c0_64, %c120] : memref<8x288xbf16, #tpu.memory_space<vmem>>, vector<8x8xbf16>
    %cst_65 = arith.constant dense<0.000000e+00> : vector<8x384xf32>
    %78 = tpu.matmul %77, %76, %cst_65 {dimension_numbers = #tpu.dot_dimension_numbers<[1], [0], [0], [1], [0, 0, 1, 1], [], []>} : vector<8x8xbf16>, vector<8x384xbf16>, vector<8x384xf32> -> vector<8x384xf32>
    %79 = arith.addf %74, %78 : vector<8x384xf32>
    %c0_66 = arith.constant 0 : index
    %c0_67 = arith.constant 0 : index
    %c148 = arith.constant 148 : index
    %80 = vector.load %arg1[%c0_66, %c0_67, %c148] : memref<1x8x584xbf16, #tpu.memory_space<vmem>>, vector<1x8x384xbf16>
    %81 = vector.shape_cast %80 : vector<1x8x384xbf16> to vector<8x384xbf16>
    %c0_68 = arith.constant 0 : index
    %c128 = arith.constant 128 : index
    %82 = vector.load %arg2[%c0_68, %c128] : memref<8x288xbf16, #tpu.memory_space<vmem>>, vector<8x8xbf16>
    %cst_69 = arith.constant dense<0.000000e+00> : vector<8x384xf32>
    %83 = tpu.matmul %82, %81, %cst_69 {dimension_numbers = #tpu.dot_dimension_numbers<[1], [0], [0], [1], [0, 0, 1, 1], [], []>} : vector<8x8xbf16>, vector<8x384xbf16>, vector<8x384xf32> -> vector<8x384xf32>
    %84 = arith.addf %79, %83 : vector<8x384xf32>
    %c0_70 = arith.constant 0 : index
    %c0_71 = arith.constant 0 : index
    %c150 = arith.constant 150 : index
    %85 = vector.load %arg1[%c0_70, %c0_71, %c150] : memref<1x8x584xbf16, #tpu.memory_space<vmem>>, vector<1x8x384xbf16>
    %86 = vector.shape_cast %85 : vector<1x8x384xbf16> to vector<8x384xbf16>
    %c0_72 = arith.constant 0 : index
    %c136 = arith.constant 136 : index
    %87 = vector.load %arg2[%c0_72, %c136] : memref<8x288xbf16, #tpu.memory_space<vmem>>, vector<8x8xbf16>
    %cst_73 = arith.constant dense<0.000000e+00> : vector<8x384xf32>
    %88 = tpu.matmul %87, %86, %cst_73 {dimension_numbers = #tpu.dot_dimension_numbers<[1], [0], [0], [1], [0, 0, 1, 1], [], []>} : vector<8x8xbf16>, vector<8x384xbf16>, vector<8x384xf32> -> vector<8x384xf32>
    %89 = arith.addf %84, %88 : vector<8x384xf32>
    %c0_74 = arith.constant 0 : index
    %c0_75 = arith.constant 0 : index
    %c25 = arith.constant 25 : index
    %90 = vector.load %arg1[%c0_74, %c0_75, %c25] : memref<1x8x584xbf16, #tpu.memory_space<vmem>>, vector<1x8x384xbf16>
    %91 = vector.shape_cast %90 : vector<1x8x384xbf16> to vector<8x384xbf16>
    %c0_76 = arith.constant 0 : index
    %c144 = arith.constant 144 : index
    %92 = vector.load %arg2[%c0_76, %c144] : memref<8x288xbf16, #tpu.memory_space<vmem>>, vector<8x8xbf16>
    %cst_77 = arith.constant dense<0.000000e+00> : vector<8x384xf32>
    %93 = tpu.matmul %92, %91, %cst_77 {dimension_numbers = #tpu.dot_dimension_numbers<[1], [0], [0], [1], [0, 0, 1, 1], [], []>} : vector<8x8xbf16>, vector<8x384xbf16>, vector<8x384xf32> -> vector<8x384xf32>
    %94 = arith.addf %89, %93 : vector<8x384xf32>
    %c0_78 = arith.constant 0 : index
    %c0_79 = arith.constant 0 : index
    %c28 = arith.constant 28 : index
    %95 = vector.load %arg1[%c0_78, %c0_79, %c28] : memref<1x8x584xbf16, #tpu.memory_space<vmem>>, vector<1x8x384xbf16>
    %96 = vector.shape_cast %95 : vector<1x8x384xbf16> to vector<8x384xbf16>
    %c0_80 = arith.constant 0 : index
    %c152 = arith.constant 152 : index
    %97 = vector.load %arg2[%c0_80, %c152] : memref<8x288xbf16, #tpu.memory_space<vmem>>, vector<8x8xbf16>
    %cst_81 = arith.constant dense<0.000000e+00> : vector<8x384xf32>
    %98 = tpu.matmul %97, %96, %cst_81 {dimension_numbers = #tpu.dot_dimension_numbers<[1], [0], [0], [1], [0, 0, 1, 1], [], []>} : vector<8x8xbf16>, vector<8x384xbf16>, vector<8x384xf32> -> vector<8x384xf32>
    %99 = arith.addf %94, %98 : vector<8x384xf32>
    %c0_82 = arith.constant 0 : index
    %c0_83 = arith.constant 0 : index
    %c31 = arith.constant 31 : index
    %100 = vector.load %arg1[%c0_82, %c0_83, %c31] : memref<1x8x584xbf16, #tpu.memory_space<vmem>>, vector<1x8x384xbf16>
    %101 = vector.shape_cast %100 : vector<1x8x384xbf16> to vector<8x384xbf16>
    %c0_84 = arith.constant 0 : index
    %c160 = arith.constant 160 : index
    %102 = vector.load %arg2[%c0_84, %c160] : memref<8x288xbf16, #tpu.memory_space<vmem>>, vector<8x8xbf16>
    %cst_85 = arith.constant dense<0.000000e+00> : vector<8x384xf32>
    %103 = tpu.matmul %102, %101, %cst_85 {dimension_numbers = #tpu.dot_dimension_numbers<[1], [0], [0], [1], [0, 0, 1, 1], [], []>} : vector<8x8xbf16>, vector<8x384xbf16>, vector<8x384xf32> -> vector<8x384xf32>
    %104 = arith.addf %99, %103 : vector<8x384xf32>
    %c0_86 = arith.constant 0 : index
    %c0_87 = arith.constant 0 : index
    %c97 = arith.constant 97 : index
    %105 = vector.load %arg1[%c0_86, %c0_87, %c97] : memref<1x8x584xbf16, #tpu.memory_space<vmem>>, vector<1x8x384xbf16>
    %106 = vector.shape_cast %105 : vector<1x8x384xbf16> to vector<8x384xbf16>
    %c0_88 = arith.constant 0 : index
    %c168 = arith.constant 168 : index
    %107 = vector.load %arg2[%c0_88, %c168] : memref<8x288xbf16, #tpu.memory_space<vmem>>, vector<8x8xbf16>
    %cst_89 = arith.constant dense<0.000000e+00> : vector<8x384xf32>
    %108 = tpu.matmul %107, %106, %cst_89 {dimension_numbers = #tpu.dot_dimension_numbers<[1], [0], [0], [1], [0, 0, 1, 1], [], []>} : vector<8x8xbf16>, vector<8x384xbf16>, vector<8x384xf32> -> vector<8x384xf32>
    %109 = arith.addf %104, %108 : vector<8x384xf32>
    %c0_90 = arith.constant 0 : index
    %c0_91 = arith.constant 0 : index
    %c100_92 = arith.constant 100 : index
    %110 = vector.load %arg1[%c0_90, %c0_91, %c100_92] : memref<1x8x584xbf16, #tpu.memory_space<vmem>>, vector<1x8x384xbf16>
    %111 = vector.shape_cast %110 : vector<1x8x384xbf16> to vector<8x384xbf16>
    %c0_93 = arith.constant 0 : index
    %c176 = arith.constant 176 : index
    %112 = vector.load %arg2[%c0_93, %c176] : memref<8x288xbf16, #tpu.memory_space<vmem>>, vector<8x8xbf16>
    %cst_94 = arith.constant dense<0.000000e+00> : vector<8x384xf32>
    %113 = tpu.matmul %112, %111, %cst_94 {dimension_numbers = #tpu.dot_dimension_numbers<[1], [0], [0], [1], [0, 0, 1, 1], [], []>} : vector<8x8xbf16>, vector<8x384xbf16>, vector<8x384xf32> -> vector<8x384xf32>
    %114 = arith.addf %109, %113 : vector<8x384xf32>
    %c0_95 = arith.constant 0 : index
    %c0_96 = arith.constant 0 : index
    %c103 = arith.constant 103 : index
    %115 = vector.load %arg1[%c0_95, %c0_96, %c103] : memref<1x8x584xbf16, #tpu.memory_space<vmem>>, vector<1x8x384xbf16>
    %116 = vector.shape_cast %115 : vector<1x8x384xbf16> to vector<8x384xbf16>
    %c0_97 = arith.constant 0 : index
    %c184 = arith.constant 184 : index
    %117 = vector.load %arg2[%c0_97, %c184] : memref<8x288xbf16, #tpu.memory_space<vmem>>, vector<8x8xbf16>
    %cst_98 = arith.constant dense<0.000000e+00> : vector<8x384xf32>
    %118 = tpu.matmul %117, %116, %cst_98 {dimension_numbers = #tpu.dot_dimension_numbers<[1], [0], [0], [1], [0, 0, 1, 1], [], []>} : vector<8x8xbf16>, vector<8x384xbf16>, vector<8x384xf32> -> vector<8x384xf32>
    %119 = arith.addf %114, %118 : vector<8x384xf32>
    %c0_99 = arith.constant 0 : index
    %c0_100 = arith.constant 0 : index
    %c169 = arith.constant 169 : index
    %120 = vector.load %arg1[%c0_99, %c0_100, %c169] : memref<1x8x584xbf16, #tpu.memory_space<vmem>>, vector<1x8x384xbf16>
    %121 = vector.shape_cast %120 : vector<1x8x384xbf16> to vector<8x384xbf16>
    %c0_101 = arith.constant 0 : index
    %c192 = arith.constant 192 : index
    %122 = vector.load %arg2[%c0_101, %c192] : memref<8x288xbf16, #tpu.memory_space<vmem>>, vector<8x8xbf16>
    %cst_102 = arith.constant dense<0.000000e+00> : vector<8x384xf32>
    %123 = tpu.matmul %122, %121, %cst_102 {dimension_numbers = #tpu.dot_dimension_numbers<[1], [0], [0], [1], [0, 0, 1, 1], [], []>} : vector<8x8xbf16>, vector<8x384xbf16>, vector<8x384xf32> -> vector<8x384xf32>
    %124 = arith.addf %119, %123 : vector<8x384xf32>
    %c0_103 = arith.constant 0 : index
    %c0_104 = arith.constant 0 : index
    %c172 = arith.constant 172 : index
    %125 = vector.load %arg1[%c0_103, %c0_104, %c172] : memref<1x8x584xbf16, #tpu.memory_space<vmem>>, vector<1x8x384xbf16>
    %126 = vector.shape_cast %125 : vector<1x8x384xbf16> to vector<8x384xbf16>
    %c0_105 = arith.constant 0 : index
    %c200 = arith.constant 200 : index
    %127 = vector.load %arg2[%c0_105, %c200] : memref<8x288xbf16, #tpu.memory_space<vmem>>, vector<8x8xbf16>
    %cst_106 = arith.constant dense<0.000000e+00> : vector<8x384xf32>
    %128 = tpu.matmul %127, %126, %cst_106 {dimension_numbers = #tpu.dot_dimension_numbers<[1], [0], [0], [1], [0, 0, 1, 1], [], []>} : vector<8x8xbf16>, vector<8x384xbf16>, vector<8x384xf32> -> vector<8x384xf32>
    %129 = arith.addf %124, %128 : vector<8x384xf32>
    %c0_107 = arith.constant 0 : index
    %c0_108 = arith.constant 0 : index
    %c175 = arith.constant 175 : index
    %130 = vector.load %arg1[%c0_107, %c0_108, %c175] : memref<1x8x584xbf16, #tpu.memory_space<vmem>>, vector<1x8x384xbf16>
    %131 = vector.shape_cast %130 : vector<1x8x384xbf16> to vector<8x384xbf16>
    %c0_109 = arith.constant 0 : index
    %c208 = arith.constant 208 : index
    %132 = vector.load %arg2[%c0_109, %c208] : memref<8x288xbf16, #tpu.memory_space<vmem>>, vector<8x8xbf16>
    %cst_110 = arith.constant dense<0.000000e+00> : vector<8x384xf32>
    %133 = tpu.matmul %132, %131, %cst_110 {dimension_numbers = #tpu.dot_dimension_numbers<[1], [0], [0], [1], [0, 0, 1, 1], [], []>} : vector<8x8xbf16>, vector<8x384xbf16>, vector<8x384xf32> -> vector<8x384xf32>
    %134 = arith.addf %129, %133 : vector<8x384xf32>
    %c0_111 = arith.constant 0 : index
    %c0_112 = arith.constant 0 : index
    %c0_113 = arith.constant 0 : index
    %135 = vector.load %arg1[%c0_111, %c0_112, %c0_113] : memref<1x8x584xbf16, #tpu.memory_space<vmem>>, vector<1x8x384xbf16>
    %136 = vector.shape_cast %135 : vector<1x8x384xbf16> to vector<8x384xbf16>
    %c0_114 = arith.constant 0 : index
    %c216 = arith.constant 216 : index
    %137 = vector.load %arg2[%c0_114, %c216] : memref<8x288xbf16, #tpu.memory_space<vmem>>, vector<8x8xbf16>
    %cst_115 = arith.constant dense<0.000000e+00> : vector<8x384xf32>
    %138 = tpu.matmul %137, %136, %cst_115 {dimension_numbers = #tpu.dot_dimension_numbers<[1], [0], [0], [1], [0, 0, 1, 1], [], []>} : vector<8x8xbf16>, vector<8x384xbf16>, vector<8x384xf32> -> vector<8x384xf32>
    %139 = arith.addf %134, %138 : vector<8x384xf32>
    %c0_116 = arith.constant 0 : index
    %c0_117 = arith.constant 0 : index
    %c4 = arith.constant 4 : index
    %140 = vector.load %arg1[%c0_116, %c0_117, %c4] : memref<1x8x584xbf16, #tpu.memory_space<vmem>>, vector<1x8x384xbf16>
    %141 = vector.shape_cast %140 : vector<1x8x384xbf16> to vector<8x384xbf16>
    %c0_118 = arith.constant 0 : index
    %c224 = arith.constant 224 : index
    %142 = vector.load %arg2[%c0_118, %c224] : memref<8x288xbf16, #tpu.memory_space<vmem>>, vector<8x8xbf16>
    %cst_119 = arith.constant dense<0.000000e+00> : vector<8x384xf32>
    %143 = tpu.matmul %142, %141, %cst_119 {dimension_numbers = #tpu.dot_dimension_numbers<[1], [0], [0], [1], [0, 0, 1, 1], [], []>} : vector<8x8xbf16>, vector<8x384xbf16>, vector<8x384xf32> -> vector<8x384xf32>
    %144 = arith.addf %139, %143 : vector<8x384xf32>
    %c0_120 = arith.constant 0 : index
    %c0_121 = arith.constant 0 : index
    %c8_122 = arith.constant 8 : index
    %145 = vector.load %arg1[%c0_120, %c0_121, %c8_122] : memref<1x8x584xbf16, #tpu.memory_space<vmem>>, vector<1x8x384xbf16>
    %146 = vector.shape_cast %145 : vector<1x8x384xbf16> to vector<8x384xbf16>
    %c0_123 = arith.constant 0 : index
    %c232 = arith.constant 232 : index
    %147 = vector.load %arg2[%c0_123, %c232] : memref<8x288xbf16, #tpu.memory_space<vmem>>, vector<8x8xbf16>
    %cst_124 = arith.constant dense<0.000000e+00> : vector<8x384xf32>
    %148 = tpu.matmul %147, %146, %cst_124 {dimension_numbers = #tpu.dot_dimension_numbers<[1], [0], [0], [1], [0, 0, 1, 1], [], []>} : vector<8x8xbf16>, vector<8x384xbf16>, vector<8x384xf32> -> vector<8x384xf32>
    %149 = arith.addf %144, %148 : vector<8x384xf32>
    %c0_125 = arith.constant 0 : index
    %c0_126 = arith.constant 0 : index
    %c96_127 = arith.constant 96 : index
    %150 = vector.load %arg1[%c0_125, %c0_126, %c96_127] : memref<1x8x584xbf16, #tpu.memory_space<vmem>>, vector<1x8x384xbf16>
    %151 = vector.shape_cast %150 : vector<1x8x384xbf16> to vector<8x384xbf16>
    %c0_128 = arith.constant 0 : index
    %c240 = arith.constant 240 : index
    %152 = vector.load %arg2[%c0_128, %c240] : memref<8x288xbf16, #tpu.memory_space<vmem>>, vector<8x8xbf16>
    %cst_129 = arith.constant dense<0.000000e+00> : vector<8x384xf32>
    %153 = tpu.matmul %152, %151, %cst_129 {dimension_numbers = #tpu.dot_dimension_numbers<[1], [0], [0], [1], [0, 0, 1, 1], [], []>} : vector<8x8xbf16>, vector<8x384xbf16>, vector<8x384xf32> -> vector<8x384xf32>
    %154 = arith.addf %149, %153 : vector<8x384xf32>
    %c0_130 = arith.constant 0 : index
    %c0_131 = arith.constant 0 : index
    %c100_132 = arith.constant 100 : index
    %155 = vector.load %arg1[%c0_130, %c0_131, %c100_132] : memref<1x8x584xbf16, #tpu.memory_space<vmem>>, vector<1x8x384xbf16>
    %156 = vector.shape_cast %155 : vector<1x8x384xbf16> to vector<8x384xbf16>
    %c0_133 = arith.constant 0 : index
    %c248 = arith.constant 248 : index
    %157 = vector.load %arg2[%c0_133, %c248] : memref<8x288xbf16, #tpu.memory_space<vmem>>, vector<8x8xbf16>
    %cst_134 = arith.constant dense<0.000000e+00> : vector<8x384xf32>
    %158 = tpu.matmul %157, %156, %cst_134 {dimension_numbers = #tpu.dot_dimension_numbers<[1], [0], [0], [1], [0, 0, 1, 1], [], []>} : vector<8x8xbf16>, vector<8x384xbf16>, vector<8x384xf32> -> vector<8x384xf32>
    %159 = arith.addf %154, %158 : vector<8x384xf32>
    %c0_135 = arith.constant 0 : index
    %c0_136 = arith.constant 0 : index
    %c104_137 = arith.constant 104 : index
    %160 = vector.load %arg1[%c0_135, %c0_136, %c104_137] : memref<1x8x584xbf16, #tpu.memory_space<vmem>>, vector<1x8x384xbf16>
    %161 = vector.shape_cast %160 : vector<1x8x384xbf16> to vector<8x384xbf16>
    %c0_138 = arith.constant 0 : index
    %c256 = arith.constant 256 : index
    %162 = vector.load %arg2[%c0_138, %c256] : memref<8x288xbf16, #tpu.memory_space<vmem>>, vector<8x8xbf16>
    %cst_139 = arith.constant dense<0.000000e+00> : vector<8x384xf32>
    %163 = tpu.matmul %162, %161, %cst_139 {dimension_numbers = #tpu.dot_dimension_numbers<[1], [0], [0], [1], [0, 0, 1, 1], [], []>} : vector<8x8xbf16>, vector<8x384xbf16>, vector<8x384xf32> -> vector<8x384xf32>
    %164 = arith.addf %159, %163 : vector<8x384xf32>
    %c0_140 = arith.constant 0 : index
    %c0_141 = arith.constant 0 : index
    %c192_142 = arith.constant 192 : index
    %165 = vector.load %arg1[%c0_140, %c0_141, %c192_142] : memref<1x8x584xbf16, #tpu.memory_space<vmem>>, vector<1x8x384xbf16>
    %166 = vector.shape_cast %165 : vector<1x8x384xbf16> to vector<8x384xbf16>
    %c0_143 = arith.constant 0 : index
    %c264 = arith.constant 264 : index
    %167 = vector.load %arg2[%c0_143, %c264] : memref<8x288xbf16, #tpu.memory_space<vmem>>, vector<8x8xbf16>
    %cst_144 = arith.constant dense<0.000000e+00> : vector<8x384xf32>
    %168 = tpu.matmul %167, %166, %cst_144 {dimension_numbers = #tpu.dot_dimension_numbers<[1], [0], [0], [1], [0, 0, 1, 1], [], []>} : vector<8x8xbf16>, vector<8x384xbf16>, vector<8x384xf32> -> vector<8x384xf32>
    %169 = arith.addf %164, %168 : vector<8x384xf32>
    %c0_145 = arith.constant 0 : index
    %c0_146 = arith.constant 0 : index
    %c196 = arith.constant 196 : index
    %170 = vector.load %arg1[%c0_145, %c0_146, %c196] : memref<1x8x584xbf16, #tpu.memory_space<vmem>>, vector<1x8x384xbf16>
    %171 = vector.shape_cast %170 : vector<1x8x384xbf16> to vector<8x384xbf16>
    %c0_147 = arith.constant 0 : index
    %c272 = arith.constant 272 : index
    %172 = vector.load %arg2[%c0_147, %c272] : memref<8x288xbf16, #tpu.memory_space<vmem>>, vector<8x8xbf16>
    %cst_148 = arith.constant dense<0.000000e+00> : vector<8x384xf32>
    %173 = tpu.matmul %172, %171, %cst_148 {dimension_numbers = #tpu.dot_dimension_numbers<[1], [0], [0], [1], [0, 0, 1, 1], [], []>} : vector<8x8xbf16>, vector<8x384xbf16>, vector<8x384xf32> -> vector<8x384xf32>
    %174 = arith.addf %169, %173 : vector<8x384xf32>
    %c0_149 = arith.constant 0 : index
    %c0_150 = arith.constant 0 : index
    %c200_151 = arith.constant 200 : index
    %175 = vector.load %arg1[%c0_149, %c0_150, %c200_151] : memref<1x8x584xbf16, #tpu.memory_space<vmem>>, vector<1x8x384xbf16>
    %176 = vector.shape_cast %175 : vector<1x8x384xbf16> to vector<8x384xbf16>
    %c0_152 = arith.constant 0 : index
    %c280 = arith.constant 280 : index
    %177 = vector.load %arg2[%c0_152, %c280] : memref<8x288xbf16, #tpu.memory_space<vmem>>, vector<8x8xbf16>
    %cst_153 = arith.constant dense<0.000000e+00> : vector<8x384xf32>
    %178 = tpu.matmul %177, %176, %cst_153 {dimension_numbers = #tpu.dot_dimension_numbers<[1], [0], [0], [1], [0, 0, 1, 1], [], []>} : vector<8x8xbf16>, vector<8x384xbf16>, vector<8x384xf32> -> vector<8x384xf32>
    %179 = arith.addf %174, %178 : vector<8x384xf32>
    %180 = vector.broadcast %0 : vector<8x1xf32> to vector<8x384xf32>
    %181 = arith.addf %179, %180 : vector<8x384xf32>
    %c0_154 = arith.constant 0 : index
    %c0_155 = arith.constant 0 : index
    %c0_156 = arith.constant 0 : index
    %182 = vector.load %arg4[%c0_154, %c0_155, %c0_156] : memref<1x8x384xf32, #tpu.memory_space<vmem>>, vector<1x8x384xf32>
    %183 = vector.shape_cast %182 : vector<1x8x384xf32> to vector<8x384xf32>
    %184 = vector.shape_cast %181 : vector<8x384xf32> to vector<1x8x384xf32>
    tpu.vector_store %arg4[%c0_154, %c0_155, %c0_156], %184 {strides = array<i32>} : memref<1x8x384xf32, #tpu.memory_space<vmem>>, vector<1x8x384xf32>,
    return
  }
  func.func @transform_0(%arg0: i32) -> (i32, i32, i32) {
    %c0_i32 = arith.constant 0 : i32
    %c0_i32_0 = arith.constant 0 : i32
    %c0_i32_1 = arith.constant 0 : i32
    return %arg0, %c0_i32, %c0_i32_0 : i32, i32, i32
  }
  func.func @transform_1(%arg0: i32) -> (i32, i32) {
    %c0_i32 = arith.constant 0 : i32
    %c0_i32_0 = arith.constant 0 : i32
    %c0_i32_1 = arith.constant 0 : i32
    return %c0_i32, %c0_i32_0 : i32, i32
  }
  func.func @transform_2(%arg0: i32) -> (i32, i32) {
    %c0_i32 = arith.constant 0 : i32
    %c0_i32_0 = arith.constant 0 : i32
    %c0_i32_1 = arith.constant 0 : i32
    return %c0_i32, %c0_i32_0 : i32, i32
  }
  func.func @transform_3(%arg0: i32) -> (i32, i32, i32) {
    %c0_i32 = arith.constant 0 : i32
    %c0_i32_0 = arith.constant 0 : i32
    %c0_i32_1 = arith.constant 0 : i32
    return %arg0, %c0_i32, %c0_i32_0 : i32, i32, i32
  }
}

</mosaic_0001>

<llo_original>
// kernel: tpu_custom_call.1
$region0: #{tpu_custom_call.1}
  #allocation0 [shape = 'u32[]', space=smem, size = 0x4, offset = 0x4, fixed_abs, tag = 'smem constant byte address 0x4 - core index']
  #allocation1 [shape = 'u32[144,128]{1,0:T(1,128)}', space=vmem, size = 0x12000, scoped, tag = 'internal scratch']
  %s0 = inlined_call_operand.hbm [shape: bf16[2,8,584], index: 0, kind: input, shape index: {}]
  %s1 = inlined_call_operand.hbm [shape: bf16[8,288], index: 1, kind: input, shape index: {}]
  %s2 = inlined_call_operand.vmem [shape: f32[8,1], index: 2, kind: input, shape index: {}]
  %s3 = inlined_call_operand.hbm [shape: f32[2,8,384], index: 3, kind: output, shape index: {}]
  %s4 = sld [smem:[#allocation0]]
  $region53: #{tpu_custom_call.1} parent=0
    _
  %s6 = ssub.s32 1, %s4
  %s7 = scalar_select 0, %s6, %s4
  $region1: #{tpu_custom_call.1} parent=0
    #allocation2 [shape = 'u8[20480]{0}', space=vmem, size = 0x5000, scoped, tag = 'input window, operand 0']
    #allocation3 [shape = 's32[2]{0}', space=sflag, size = 0x8, scoped, tag = 'scoped memory for tpu_custom_call.1']
    #allocation4 [shape = 's32[2]{0}', space=sflag, size = 0x8, scoped, tag = 'scoped memory for tpu_custom_call.1']
    #allocation5 [shape = 'u8[6144]{0}', space=vmem, size = 0x1800, scoped, tag = 'input window, operand 1, single buffered']
    #allocation6 [shape = 's32[1]{0}', space=sflag, size = 0x4, scoped, tag = 'scoped memory for tpu_custom_call.1']
    #allocation7 [shape = 'u8[24576]{0}', space=vmem, size = 0x6000, scoped, tag = 'output window, operand 0']
    %8 = vsyncpa [#allocation3], 0
    %s9 = scalar_lea.sflag [#allocation3], 1
    %10 = vsyncpa %s9, 0
    %11 = vsyncpa [#allocation6], 0
    %12 = vsyncpa [#allocation4], 0
    %s13 = scalar_lea.sflag [#allocation4], 1
    %14 = vsyncpa %s13, 0
    loop: start=0, step=1, limit=4
    $region2: #{tpu_custom_call.1} parent=1 // loop_pre_header
      _
    $region3: #{tpu_custom_call.1} parent=1 // loop_header
      %s16 = sphi 0, %s20
      %p17 = scmp.ge.s32.totalorder %s16, 4
      %s26 = sphi 0, %s28
      %s29 = sphi 0, %s26
      %s30 = sphi 0, %s29
      %s46 = sphi 0, %s30
      %s50 = sphi 0, %s50
      %s52 = sphi 0, %s50
      %s53 = sphi 0, %s52
      %s67 = sphi 0, %s53
      %s71 = sphi 0, %s71
      %s73 = sphi 0, %s71
      %s74 = sphi 0, %s73
      %s88 = sphi 0, %s74
      %s94 = sphi 0, %s96
      %s97 = sphi 0, %s94
      %s98 = sphi 0, %s97
      %s114 = sphi 0, %s98
    $region4: #{tpu_custom_call.1} parent=1 // loop_header_branch
      %19 = sbr.rel (%p17) target = $region8
    $region5: #{tpu_custom_call.1} parent=1 // loop_body
      %s21 = ssub.s32 %s16, 1
      %s22 = ssub.s32 %s16, 2
      %s23 = sadd.s32 %s16, 1
      %s24 = ssub.s32 %s16, %s23
      %p25 = scmp.eq.s32.totalorder %s24, 0
      %s27 = sadd.s32 %s26, 1
      %s28 = scalar_select %p25, %s26, %s27
      %p31 = pneg %p25
      %p32 = scmp.eq.s32.totalorder %s16, 1
      %p33 = por %p31, %p32
      %p34 = scmp.ne.s32.totalorder %s26, %s29
      %p35 = scmp.eq.s32.totalorder %s16, 0
      %p36 = por %p34, %p35
      %p37 = scmp.ne.s32.totalorder %s26, %s29
      %p38 = scmp.eq.s32.totalorder %s21, 1
      %p39 = por %p37, %p38
      %p40 = scmp.ne.s32.totalorder %s29, %s30
      %p41 = scmp.eq.s32.totalorder %s21, 0
      %p42 = por %p40, %p41
      %p43 = scmp.ne.s32.totalorder %s29, %s30
      %p44 = scmp.eq.s32.totalorder %s22, 1
      %p45 = por %p43, %p44
      %p47 = scmp.ne.s32.totalorder %s30, %s46
      %p48 = scmp.eq.s32.totalorder %s22, 0
      %p49 = por %p47, %p48
      %s51 = sadd.s32 %s50, 1
      %p54 = scmp.eq.s32.totalorder %s16, 1
      %p55 = scmp.ne.s32.totalorder %s50, %s52
      %p56 = scmp.eq.s32.totalorder %s16, 0
      %p57 = por %p55, %p56
      %p58 = scmp.ne.s32.totalorder %s50, %s52
      %p59 = scmp.eq.s32.totalorder %s21, 1
      %p60 = por %p58, %p59
      %p61 = scmp.ne.s32.totalorder %s52, %s53
      %p62 = scmp.eq.s32.totalorder %s21, 0
      %p63 = por %p61, %p62
      %p64 = scmp.ne.s32.totalorder %s52, %s53
      %p65 = scmp.eq.s32.totalorder %s22, 1
      %p66 = por %p64, %p65
      %p68 = scmp.ne.s32.totalorder %s53, %s67
      %p69 = scmp.eq.s32.totalorder %s22, 0
      %p70 = por %p68, %p69
      %s72 = sadd.s32 %s71, 1
      %p75 = scmp.eq.s32.totalorder %s16, 1
      %p76 = scmp.ne.s32.totalorder %s71, %s73
      %p77 = scmp.eq.s32.totalorder %s16, 0
      %p78 = por %p76, %p77
      %p79 = scmp.ne.s32.totalorder %s71, %s73
      %p80 = scmp.eq.s32.totalorder %s21, 1
      %p81 = por %p79, %p80
      %p82 = scmp.ne.s32.totalorder %s73, %s74
      %p83 = scmp.eq.s32.totalorder %s21, 0
      %p84 = por %p82, %p83
      %p85 = scmp.ne.s32.totalorder %s73, %s74
      %p86 = scmp.eq.s32.totalorder %s22, 1
      %p87 = por %p85, %p86
      %p89 = scmp.ne.s32.totalorder %s74, %s88
      %p90 = scmp.eq.s32.totalorder %s22, 0
      %p91 = por %p89, %p90
      %s92 = ssub.s32 %s16, %s23
      %p93 = scmp.eq.s32.totalorder %s92, 0
      %s95 = sadd.s32 %s94, 1
      %s96 = scalar_select %p93, %s94, %s95
      %p99 = pneg %p93
      %p100 = scmp.eq.s32.totalorder %s16, 1
      %p101 = por %p99, %p100
      %p102 = scmp.ne.s32.totalorder %s94, %s97
      %p103 = scmp.eq.s32.totalorder %s16, 0
      %p104 = por %p102, %p103
      %p105 = scmp.ne.s32.totalorder %s94, %s97
      %p106 = scmp.eq.s32.totalorder %s21, 1
      %p107 = por %p105, %p106
      %p108 = scmp.ne.s32.totalorder %s97, %s98
      %p109 = scmp.eq.s32.totalorder %s21, 0
      %p110 = por %p108, %p109
      %p111 = scmp.ne.s32.totalorder %s97, %s98
      %p112 = scmp.eq.s32.totalorder %s22, 1
      %p113 = por %p111, %p112
      %p115 = scmp.ne.s32.totalorder %s98, %s114
      %p116 = scmp.eq.s32.totalorder %s22, 0
      %p117 = por %p115, %p116
      %p118 = scmp.le.s32.totalorder 1, %s16
      %p119 = scmp.lt.s32.totalorder %s16, 3
      %p120 = pnand %p118, %p119
      %p121 = pneg %p120
      // Predicated region
      $region9: #{tpu_custom_call.1} parent=5 // pred_check
        _
      $region10: #{tpu_custom_call.1} parent=5 // pred_check_branch
        %123 = sbr.rel (%p120) target = $region12
      $region11: #{tpu_custom_call.1} parent=5 // pred_region
        %s124 = ssub.s32 %s16, 1
        // Predicated region
        $region13: #{tpu_custom_call.1} parent=11 // pred_check
          %p125 = pneg %p63
        $region14: #{tpu_custom_call.1} parent=11 // pred_check_branch
          %127 = sbr.rel (%p125) target = $region16
        $region15: #{tpu_custom_call.1} parent=11 // pred_region
          %s129 = ssub.s32 192, 192
          %130 = vsyncadd [#allocation6], %s129
          %s132 = sshll.u32 [#allocation5], 4
          %s133 = int_to_ptr.vmem [resolvable:$true] %s132
          %135 = dma.hbm_to_vmem [thread:$0]  %s1, 192, %s133, [#allocation6]
        $region16: #{tpu_custom_call.1} parent=11 // pred_fallthru
          _
        // Predicated region
        $region17: #{tpu_custom_call.1} parent=11 // pred_check
          %p136 = pneg %p84
        $region18: #{tpu_custom_call.1} parent=11 // pred_check_branch
          %138 = sbr.rel (%p136) target = $region20
        $region19: #{tpu_custom_call.1} parent=11 // pred_region
          _
        $region20: #{tpu_custom_call.1} parent=11 // pred_fallthru
          _
      $region12: #{tpu_custom_call.1} parent=5 // pred_fallthru
        _
      %p139 = scmp.lt.s32.totalorder %s16, 2
      // Predicated region
      $region21: #{tpu_custom_call.1} parent=5 // pred_check
        %p140 = pneg %p139
      $region22: #{tpu_custom_call.1} parent=5 // pred_check_branch
        %142 = sbr.rel (%p140) target = $region24
      $region23: #{tpu_custom_call.1} parent=5 // pred_region
        // Predicated region
        $region25: #{tpu_custom_call.1} parent=23 // pred_check
          %p143 = pneg %p36
        $region26: #{tpu_custom_call.1} parent=23 // pred_check_branch
          %145 = sbr.rel (%p143) target = $region28
        $region27: #{tpu_custom_call.1} parent=23 // pred_region
          %s146 = sand.u32 %s26, 1
          %s147 = scalar_lea.sflag [#allocation3], %s146
          %s148 = sand.u32 %s26, 1
          %s149 = smul.addr %s148, 20
          %s150 = scalar_lea.vmem [#allocation2], %s149
          %s152 = ssub.s32 320, 320
          %153 = vsyncadd %s147, %s152
          %s154 = smul.addr %s16, 5
          %s155 = smul.addr %s154, 64
          %s156 = scalar_lea.hbm %s0, %s155
          %s158 = sshll.u32 %s150, 4
          %s159 = int_to_ptr.vmem [resolvable:$true] %s158
          %161 = dma.hbm_to_vmem [thread:$0]  %s156, 320, %s159, %s147
        $region28: #{tpu_custom_call.1} parent=23 // pred_fallthru
          _
      $region24: #{tpu_custom_call.1} parent=5 // pred_fallthru
        _
      %p162 = scmp.le.s32.totalorder 1, %s16
      %p163 = scmp.lt.s32.totalorder %s16, 3
      %p164 = pnand %p162, %p163
      %p165 = pneg %p164
      // Predicated region
      $region29: #{tpu_custom_call.1} parent=5 // pred_check
        _
      $region30: #{tpu_custom_call.1} parent=5 // pred_check_branch
        %167 = sbr.rel (%p164) target = $region32
      $region31: #{tpu_custom_call.1} parent=5 // pred_region
        %s168 = ssub.s32 %s16, 1
        %s169 = sand.u32 %s29, 1
        %s170 = scalar_lea.sflag [#allocation3], %s169
        %s171 = sand.u32 %s29, 1
        %s172 = smul.addr %s171, 20
        %s173 = scalar_lea.vmem [#allocation2], %s172
        // Predicated region
        $region33: #{tpu_custom_call.1} parent=31 // pred_check
          %p174 = pneg %p42
        $region34: #{tpu_custom_call.1} parent=31 // pred_check_branch
          %176 = sbr.rel (%p174) target = $region36
        $region35: #{tpu_custom_call.1} parent=31 // pred_region
          %177 = dma.done %s170, 320
        $region36: #{tpu_custom_call.1} parent=31 // pred_fallthru
          _
        // Predicated region
        $region37: #{tpu_custom_call.1} parent=31 // pred_check
          %p178 = pneg %p63
        $region38: #{tpu_custom_call.1} parent=31 // pred_check_branch
          %180 = sbr.rel (%p178) target = $region40
        $region39: #{tpu_custom_call.1} parent=31 // pred_region
          %181 = dma.done [#allocation6], 192
        $region40: #{tpu_custom_call.1} parent=31 // pred_fallthru
          _
        %s182 = sand.u32 %s29, 1
        %s183 = scalar_lea.sflag [#allocation3], %s182
        %s184 = sand.u32 %s29, 1
        %s185 = smul.addr %s184, 20
        %s186 = scalar_lea.vmem [#allocation2], %s185
        %p187 = pneg %p42
        %p188 = pneg %p39
        %p189 = pneg %p63
        %p190 = pneg %p60
        %p191 = pneg %p84
        %p192 = pneg %p81
        %p193 = pneg %p110
        %p194 = pneg %p107
        %s195 = sand.u32 %s97, 1
        %s196 = scalar_lea.sflag [#allocation4], %s195
        %s197 = sand.u32 %s97, 1
        %s198 = smul.addr %s197, 24
        %s199 = scalar_lea.vmem [#allocation7], %s198
        %v201 = vld [vmem:[%s2] sm:$0xff]
        %v202 = vld [vmem:[%s173] sm:$0xff]
        %v203 = vld [vmem:[%s173 + $0x8] sm:$0xff]
        %v204 = vld [vmem:[#allocation5] sm:$0xf]
        %v206 = vunpack.c.l.b16 %v204
        %v207 = vpack.c.b16 %v206, %v206
        %208 = vrot.lane.b32.xlu0 %v207, 120
        %v209 = vpop.permute.xlu0 %208
        %v212 = vunpack.c.l.b16 %v202
        %v213 = vunpack.c.h.b16 %v202
        %v214 = vunpack.c.l.b16 %v203
        %v215 = vunpack.c.h.b16 %v203
        %v216 = vpack.c.b16 %v212, %v212
        %v217 = vpack.c.b16 %v213, %v213
        %v218 = vpack.c.b16 %v214, %v214
        %v219 = vpack.c.b16 %v215, %v215
        %220 = vrot.lane.b32.xlu0 %v216, 52
        %v221 = vpop.permute.xlu0 %220
        %222 = vrot.lane.b32.xlu0 %v217, 52
        %v223 = vpop.permute.xlu0 %222
        %224 = vrot.lane.b32.xlu0 %v218, 52
        %v225 = vpop.permute.xlu0 %224
        %226 = vrot.lane.b32.xlu0 %v219, 52
        %v227 = vpop.permute.xlu0 %226
        %vm228 = vcmask 424960
        %v229 = vsel %vm228, %v221, %v223
        %v230 = vsel %vm228, %v223, %v225
        %v231 = vsel %vm228, %v225, %v227
        %vm232 = vcmask 64512
        %v234 = vsel %vm232, %v209, 0
        %vm236 = vcmask 1043456
        %v238 = vsel %vm236, %v229, 0
        %v241 = vsel %vm236, %v230, 0
        %v244 = vsel %vm236, %v231, 0
        %246 = vmatprep.subr.bf16.mxu0 0
        %247 = vmatpush1.bf16.msra.mxu0 0
        %248 = vmatprep.subr.bf16.mxu0 0
        %249 = vmatpush1.bf16.msra.mxu0 0
        %250 = vmatprep.subr.bf16.mxu0 0
        %251 = vmatpush1.bf16.msra.mxu0 0
        %252 = vmatprep.subr.bf16.mxu0 0
        %253 = vmatpush1.bf16.msra.mxu0 0
        %254 = vmatprep.subr.bf16.mxu0 0
        %255 = vmatpush1.bf16.msra.mxu0 0
        %256 = vmatprep.subr.bf16.mxu0 0
        %257 = vmatpush1.bf16.msra.mxu0 0
        %258 = vmatprep.subr.bf16.mxu0 0
        %259 = vmatpush1.bf16.msra.mxu0 0
        %260 = vmatprep.subr.bf16.mxu0 %v241
        %261 = vmatpush1.bf16.msra.mxu0 %v238
        %262 = vmatprep.subr.bf16.mxu0 0
        %263 = vmatpush2.bf16.msra.mxu0 0
        %264 = vmatprep.subr.bf16.mxu0 0
        %265 = vmatpush2.bf16.msra.mxu0 0
        %266 = vmatprep.subr.bf16.mxu0 0
        %267 = vmatpush2.bf16.msra.mxu0 0
        %268 = vmatprep.subr.bf16.mxu0 0
        %269 = vmatpush2.bf16.msra.mxu0 0
        %270 = vmatprep.subr.bf16.mxu0 0
        %271 = vmatpush2.bf16.msra.mxu0 0
        %272 = vmatprep.subr.bf16.mxu0 0
        %273 = vmatpush2.bf16.msra.mxu0 0
        %274 = vmatprep.subr.bf16.mxu0 0
        %275 = vmatpush2.bf16.msra.mxu0 0
        %276 = vmatprep.subr.bf16.mxu0 0
        %277 = vmatpush2.bf16.msra.mxu0 0
        %278 = vmatprep.mubr.bf16.mxu0 0
        %279 = vmatmul.mubr.bf16.gmra.mxu0 %v234
        %v280 = vpop.f32.mrf.mxu0
        %v281 = vadd.f32 0.0, %v280
        %v282 = vpop.f32.mrf.mxu0
        %v283 = vadd.f32 0.0, %v282
        %v284 = vpop.f32.mrf.mxu0
        %v285 = vpop.f32.mrf.mxu0
        %286 = vdwg.mxu0
        %287 = vmatprep.subr.bf16.mxu0 0
        %288 = vmatpush1.bf16.msra.mxu0 0
        %289 = vmatprep.subr.bf16.mxu0 0
        %290 = vmatpush1.bf16.msra.mxu0 0
        %291 = vmatprep.subr.bf16.mxu0 0
        %292 = vmatpush1.bf16.msra.mxu0 0
        %293 = vmatprep.subr.bf16.mxu0 0
        %294 = vmatpush1.bf16.msra.mxu0 0
        %295 = vmatprep.subr.bf16.mxu0 0
        %296 = vmatpush1.bf16.msra.mxu0 0
        %297 = vmatprep.subr.bf16.mxu0 0
        %298 = vmatpush1.bf16.msra.mxu0 0
        %299 = vmatprep.subr.bf16.mxu0 0
        %300 = vmatpush1.bf16.msra.mxu0 0
        %301 = vmatprep.subr.bf16.mxu0 0
        %302 = vmatpush1.bf16.msra.mxu0 %v244
        %303 = vmatprep.subr.bf16.mxu0 0
        %304 = vmatpush2.bf16.msra.mxu0 0
        %305 = vmatprep.subr.bf16.mxu0 0
        %306 = vmatpush2.bf16.msra.mxu0 0
        %307 = vmatprep.subr.bf16.mxu0 0
        %308 = vmatpush2.bf16.msra.mxu0 0
        %309 = vmatprep.subr.bf16.mxu0 0
        %310 = vmatpush2.bf16.msra.mxu0 0
        %311 = vmatprep.subr.bf16.mxu0 0
        %312 = vmatpush2.bf16.msra.mxu0 0
        %313 = vmatprep.subr.bf16.mxu0 0
        %314 = vmatpush2.bf16.msra.mxu0 0
        %315 = vmatprep.subr.bf16.mxu0 0
        %316 = vmatpush2.bf16.msra.mxu0 0
        %317 = vmatprep.subr.bf16.mxu0 0
        %318 = vmatpush2.bf16.msra.mxu0 0
        %319 = vmatprep.mubr.bf16.mxu0 0
        %320 = vmatmul.mubr.bf16.gmra.mxu0 %v234
        %v321 = vpop.f32.mrf.mxu0
        %v322 = vadd.f32 0.0, %v321
        %v323 = vpop.f32.mrf.mxu0
        %v324 = vpop.f32.mrf.mxu0
        %v325 = vpop.f32.mrf.mxu0
        %326 = vdwg.mxu0
        %327 = vrot.lane.b32.xlu0 %v216, 53
        %v328 = vpop.permute.xlu0 %327
        %329 = vrot.lane.b32.xlu0 %v217, 53
        %v330 = vpop.permute.xlu0 %329
        %331 = vrot.lane.b32.xlu0 %v218, 53
        %v332 = vpop.permute.xlu0 %331
        %333 = vrot.lane.b32.xlu0 %v219, 53
        %v334 = vpop.permute.xlu0 %333
        %vm335 = vcmask 433152
        %v336 = vsel %vm335, %v328, %v330
        %v337 = vsel %vm335, %v330, %v332
        %v338 = vsel %vm335, %v332, %v334
        %v340 = vsel %vm232, %v204, 0
        %v343 = vsel %vm236, %v336, 0
        %v346 = vsel %vm236, %v337, 0
        %v349 = vsel %vm236, %v338, 0
        %351 = vmatprep.subr.bf16.mxu0 0
        %352 = vmatpush1.bf16.msra.mxu0 0
        %353 = vmatprep.subr.bf16.mxu0 0
        %354 = vmatpush1.bf16.msra.mxu0 0
        %355 = vmatprep.subr.bf16.mxu0 0
        %356 = vmatpush1.bf16.msra.mxu0 0
        %357 = vmatprep.subr.bf16.mxu0 0
        %358 = vmatpush1.bf16.msra.mxu0 0
        %359 = vmatprep.subr.bf16.mxu0 0
        %360 = vmatpush1.bf16.msra.mxu0 0
        %361 = vmatprep.subr.bf16.mxu0 0
        %362 = vmatpush1.bf16.msra.mxu0 0
        %363 = vmatprep.subr.bf16.mxu0 0
        %364 = vmatpush1.bf16.msra.mxu0 0
        %365 = vmatprep.subr.bf16.mxu0 %v346
        %366 = vmatpush1.bf16.msra.mxu0 %v343
        %367 = vmatprep.subr.bf16.mxu0 0
        %368 = vmatpush2.bf16.msra.mxu0 0
        %369 = vmatprep.subr.bf16.mxu0 0
        %370 = vmatpush2.bf16.msra.mxu0 0
        %371 = vmatprep.subr.bf16.mxu0 0
        %372 = vmatpush2.bf16.msra.mxu0 0
        %373 = vmatprep.subr.bf16.mxu0 0
        %374 = vmatpush2.bf16.msra.mxu0 0
        %375 = vmatprep.subr.bf16.mxu0 0
        %376 = vmatpush2.bf16.msra.mxu0 0
        %377 = vmatprep.subr.bf16.mxu0 0
        %378 = vmatpush2.bf16.msra.mxu0 0
        %379 = vmatprep.subr.bf16.mxu0 0
        %380 = vmatpush2.bf16.msra.mxu0 0
        %381 = vmatprep.subr.bf16.mxu0 0
        %382 = vmatpush2.bf16.msra.mxu0 0
        %383 = vmatprep.mubr.bf16.mxu0 0
        %384 = vmatmul.mubr.bf16.gmra.mxu0 %v340
        %v385 = vpop.f32.mrf.mxu0
        %v386 = vadd.f32 %v281, %v385
        %v387 = vpop.f32.mrf.mxu0
        %v388 = vadd.f32 %v283, %v387
        %v389 = vpop.f32.mrf.mxu0
        %v390 = vpop.f32.mrf.mxu0
        %391 = vdwg.mxu0
        %392 = vmatprep.subr.bf16.mxu0 0
        %393 = vmatpush1.bf16.msra.mxu0 0
        %394 = vmatprep.subr.bf16.mxu0 0
        %395 = vmatpush1.bf16.msra.mxu0 0
        %396 = vmatprep.subr.bf16.mxu0 0
        %397 = vmatpush1.bf16.msra.mxu0 0
        %398 = vmatprep.subr.bf16.mxu0 0
        %399 = vmatpush1.bf16.msra.mxu0 0
        %400 = vmatprep.subr.bf16.mxu0 0
        %401 = vmatpush1.bf16.msra.mxu0 0
        %402 = vmatprep.subr.bf16.mxu0 0
        %403 = vmatpush1.bf16.msra.mxu0 0
        %404 = vmatprep.subr.bf16.mxu0 0
        %405 = vmatpush1.bf16.msra.mxu0 0
        %406 = vmatprep.subr.bf16.mxu0 0
        %407 = vmatpush1.bf16.msra.mxu0 %v349
        %408 = vmatprep.subr.bf16.mxu0 0
        %409 = vmatpush2.bf16.msra.mxu0 0
        %410 = vmatprep.subr.bf16.mxu0 0
        %411 = vmatpush2.bf16.msra.mxu0 0
        %412 = vmatprep.subr.bf16.mxu0 0
        %413 = vmatpush2.bf16.msra.mxu0 0
        %414 = vmatprep.subr.bf16.mxu0 0
        %415 = vmatpush2.bf16.msra.mxu0 0
        %416 = vmatprep.subr.bf16.mxu0 0
        %417 = vmatpush2.bf16.msra.mxu0 0
        %418 = vmatprep.subr.bf16.mxu0 0
        %419 = vmatpush2.bf16.msra.mxu0 0
        %420 = vmatprep.subr.bf16.mxu0 0
        %421 = vmatpush2.bf16.msra.mxu0 0
        %422 = vmatprep.subr.bf16.mxu0 0
        %423 = vmatpush2.bf16.msra.mxu0 0
        %424 = vmatprep.mubr.bf16.mxu0 0
        %425 = vmatmul.mubr.bf16.gmra.mxu0 %v340
        %v426 = vpop.f32.mrf.mxu0
        %v427 = vadd.f32 %v322, %v426
        %v428 = vpop.f32.mrf.mxu0
        %v429 = vpop.f32.mrf.mxu0
        %v430 = vpop.f32.mrf.mxu0
        %431 = vdwg.mxu0
        %432 = vrot.lane.b32.xlu0 %v207, 112
        %v433 = vpop.permute.xlu0 %432
        %434 = vrot.lane.b32.xlu0 %v216, 51
        %v435 = vpop.permute.xlu0 %434
        %436 = vrot.lane.b32.xlu0 %v217, 51
        %v437 = vpop.permute.xlu0 %436
        %438 = vrot.lane.b32.xlu0 %v218, 51
        %v439 = vpop.permute.xlu0 %438
        %440 = vrot.lane.b32.xlu0 %v219, 51
        %v441 = vpop.permute.xlu0 %440
        %vm442 = vcmask 416768
        %v443 = vsel %vm442, %v435, %v437
        %v444 = vsel %vm442, %v437, %v439
        %v445 = vsel %vm442, %v439, %v441
        %v447 = vsel %vm232, %v433, 0
        %v450 = vsel %vm236, %v443, 0
        %v453 = vsel %vm236, %v444, 0
        %v456 = vsel %vm236, %v445, 0
        %458 = vmatprep.subr.bf16.mxu0 0
        %459 = vmatpush1.bf16.msra.mxu0 0
        %460 = vmatprep.subr.bf16.mxu0 0
        %461 = vmatpush1.bf16.msra.mxu0 0
        %462 = vmatprep.subr.bf16.mxu0 0
        %463 = vmatpush1.bf16.msra.mxu0 0
        %464 = vmatprep.subr.bf16.mxu0 0
        %465 = vmatpush1.bf16.msra.mxu0 0
        %466 = vmatprep.subr.bf16.mxu0 0
        %467 = vmatpush1.bf16.msra.mxu0 0
        %468 = vmatprep.subr.bf16.mxu0 0
        %469 = vmatpush1.bf16.msra.mxu0 0
        %470 = vmatprep.subr.bf16.mxu0 0
        %471 = vmatpush1.bf16.msra.mxu0 0
        %472 = vmatprep.subr.bf16.mxu0 %v453
        %473 = vmatpush1.bf16.msra.mxu0 %v450
        %474 = vmatprep.subr.bf16.mxu0 0
        %475 = vmatpush2.bf16.msra.mxu0 0
        %476 = vmatprep.subr.bf16.mxu0 0
        %477 = vmatpush2.bf16.msra.mxu0 0
        %478 = vmatprep.subr.bf16.mxu0 0
        %479 = vmatpush2.bf16.msra.mxu0 0
        %480 = vmatprep.subr.bf16.mxu0 0
        %481 = vmatpush2.bf16.msra.mxu0 0
        %482 = vmatprep.subr.bf16.mxu0 0
        %483 = vmatpush2.bf16.msra.mxu0 0
        %484 = vmatprep.subr.bf16.mxu0 0
        %485 = vmatpush2.bf16.msra.mxu0 0
        %486 = vmatprep.subr.bf16.mxu0 0
        %487 = vmatpush2.bf16.msra.mxu0 0
        %488 = vmatprep.subr.bf16.mxu0 0
        %489 = vmatpush2.bf16.msra.mxu0 0
        %490 = vmatprep.mubr.bf16.mxu0 0
        %491 = vmatmul.mubr.bf16.gmra.mxu0 %v447
        %v492 = vpop.f32.mrf.mxu0
        %v493 = vadd.f32 0.0, %v492
        %v494 = vpop.f32.mrf.mxu0
        %v495 = vadd.f32 0.0, %v494
        %v496 = vpop.f32.mrf.mxu0
        %v497 = vpop.f32.mrf.mxu0
        %498 = vdwg.mxu0
        %499 = vmatprep.subr.bf16.mxu0 0
        %500 = vmatpush1.bf16.msra.mxu0 0
        %501 = vmatprep.subr.bf16.mxu0 0
        %502 = vmatpush1.bf16.msra.mxu0 0
        %503 = vmatprep.subr.bf16.mxu0 0
        %504 = vmatpush1.bf16.msra.mxu0 0
        %505 = vmatprep.subr.bf16.mxu0 0
        %506 = vmatpush1.bf16.msra.mxu0 0
        %507 = vmatprep.subr.bf16.mxu0 0
        %508 = vmatpush1.bf16.msra.mxu0 0
        %509 = vmatprep.subr.bf16.mxu0 0
        %510 = vmatpush1.bf16.msra.mxu0 0
        %511 = vmatprep.subr.bf16.mxu0 0
        %512 = vmatpush1.bf16.msra.mxu0 0
        %513 = vmatprep.subr.bf16.mxu0 0
        %514 = vmatpush1.bf16.msra.mxu0 %v456
        %515 = vmatprep.subr.bf16.mxu0 0
        %516 = vmatpush2.bf16.msra.mxu0 0
        %517 = vmatprep.subr.bf16.mxu0 0
        %518 = vmatpush2.bf16.msra.mxu0 0
        %519 = vmatprep.subr.bf16.mxu0 0
        %520 = vmatpush2.bf16.msra.mxu0 0
        %521 = vmatprep.subr.bf16.mxu0 0
        %522 = vmatpush2.bf16.msra.mxu0 0
        %523 = vmatprep.subr.bf16.mxu0 0
        %524 = vmatpush2.bf16.msra.mxu0 0
        %525 = vmatprep.subr.bf16.mxu0 0
        %526 = vmatpush2.bf16.msra.mxu0 0
        %527 = vmatprep.subr.bf16.mxu0 0
        %528 = vmatpush2.bf16.msra.mxu0 0
        %529 = vmatprep.subr.bf16.mxu0 0
        %530 = vmatpush2.bf16.msra.mxu0 0
        %531 = vmatprep.mubr.bf16.mxu0 0
        %532 = vmatmul.mubr.bf16.gmra.mxu0 %v447
        %v533 = vpop.f32.mrf.mxu0
        %v534 = vadd.f32 0.0, %v533
        %v535 = vpop.f32.mrf.mxu0
        %v536 = vpop.f32.mrf.mxu0
        %v537 = vpop.f32.mrf.mxu0
        %538 = vdwg.mxu0
        %v539 = vadd.f32 %v386, %v493
        %v540 = vadd.f32 %v388, %v495
        %v541 = vadd.f32 %v427, %v534
        %542 = vrot.lane.b32.xlu0 %v207, 104
        %v543 = vpop.permute.xlu0 %542
        %544 = vrot.lane.b32.xlu0 %v216, 29
        %v545 = vpop.permute.xlu0 %544
        %546 = vrot.lane.b32.xlu0 %v217, 29
        %v547 = vpop.permute.xlu0 %546
        %548 = vrot.lane.b32.xlu0 %v218, 29
        %v549 = vpop.permute.xlu0 %548
        %550 = vrot.lane.b32.xlu0 %v219, 29
        %v551 = vpop.permute.xlu0 %550
        %vm552 = vcmask 236544
        %v553 = vsel %vm552, %v545, %v547
        %v554 = vsel %vm552, %v547, %v549
        %v555 = vsel %vm552, %v549, %v551
        %v557 = vsel %vm232, %v543, 0
        %v560 = vsel %vm236, %v553, 0
        %v563 = vsel %vm236, %v554, 0
        %v566 = vsel %vm236, %v555, 0
        %568 = vmatprep.subr.bf16.mxu0 0
        %569 = vmatpush1.bf16.msra.mxu0 0
        %570 = vmatprep.subr.bf16.mxu0 0
        %571 = vmatpush1.bf16.msra.mxu0 0
        %572 = vmatprep.subr.bf16.mxu0 0
        %573 = vmatpush1.bf16.msra.mxu0 0
        %574 = vmatprep.subr.bf16.mxu0 0
        %575 = vmatpush1.bf16.msra.mxu0 0
        %576 = vmatprep.subr.bf16.mxu0 0
        %577 = vmatpush1.bf16.msra.mxu0 0
        %578 = vmatprep.subr.bf16.mxu0 0
        %579 = vmatpush1.bf16.msra.mxu0 0
        %580 = vmatprep.subr.bf16.mxu0 0
        %581 = vmatpush1.bf16.msra.mxu0 0
        %582 = vmatprep.subr.bf16.mxu0 %v563
        %583 = vmatpush1.bf16.msra.mxu0 %v560
        %584 = vmatprep.subr.bf16.mxu0 0
        %585 = vmatpush2.bf16.msra.mxu0 0
        %586 = vmatprep.subr.bf16.mxu0 0
        %587 = vmatpush2.bf16.msra.mxu0 0
        %588 = vmatprep.subr.bf16.mxu0 0
        %589 = vmatpush2.bf16.msra.mxu0 0
        %590 = vmatprep.subr.bf16.mxu0 0
        %591 = vmatpush2.bf16.msra.mxu0 0
        %592 = vmatprep.subr.bf16.mxu0 0
        %593 = vmatpush2.bf16.msra.mxu0 0
        %594 = vmatprep.subr.bf16.mxu0 0
        %595 = vmatpush2.bf16.msra.mxu0 0
        %596 = vmatprep.subr.bf16.mxu0 0
        %597 = vmatpush2.bf16.msra.mxu0 0
        %598 = vmatprep.subr.bf16.mxu0 0
        %599 = vmatpush2.bf16.msra.mxu0 0
        %600 = vmatprep.mubr.bf16.mxu0 0
        %601 = vmatmul.mubr.bf16.gmra.mxu0 %v557
        %v602 = vpop.f32.mrf.mxu0
        %v603 = vadd.f32 0.0, %v602
        %v604 = vpop.f32.mrf.mxu0
        %v605 = vadd.f32 0.0, %v604
        %v606 = vpop.f32.mrf.mxu0
        %v607 = vpop.f32.mrf.mxu0
        %608 = vdwg.mxu0
        %609 = vmatprep.subr.bf16.mxu0 0
        %610 = vmatpush1.bf16.msra.mxu0 0
        %611 = vmatprep.subr.bf16.mxu0 0
        %612 = vmatpush1.bf16.msra.mxu0 0
        %613 = vmatprep.subr.bf16.mxu0 0
        %614 = vmatpush1.bf16.msra.mxu0 0
        %615 = vmatprep.subr.bf16.mxu0 0
        %616 = vmatpush1.bf16.msra.mxu0 0
        %617 = vmatprep.subr.bf16.mxu0 0
        %618 = vmatpush1.bf16.msra.mxu0 0
        %619 = vmatprep.subr.bf16.mxu0 0
        %620 = vmatpush1.bf16.msra.mxu0 0
        %621 = vmatprep.subr.bf16.mxu0 0
        %622 = vmatpush1.bf16.msra.mxu0 0
        %623 = vmatprep.subr.bf16.mxu0 0
        %624 = vmatpush1.bf16.msra.mxu0 %v566
        %625 = vmatprep.subr.bf16.mxu0 0
        %626 = vmatpush2.bf16.msra.mxu0 0
        %627 = vmatprep.subr.bf16.mxu0 0
        %628 = vmatpush2.bf16.msra.mxu0 0
        %629 = vmatprep.subr.bf16.mxu0 0
        %630 = vmatpush2.bf16.msra.mxu0 0
        %631 = vmatprep.subr.bf16.mxu0 0
        %632 = vmatpush2.bf16.msra.mxu0 0
        %633 = vmatprep.subr.bf16.mxu0 0
        %634 = vmatpush2.bf16.msra.mxu0 0
        %635 = vmatprep.subr.bf16.mxu0 0
        %636 = vmatpush2.bf16.msra.mxu0 0
        %637 = vmatprep.subr.bf16.mxu0 0
        %638 = vmatpush2.bf16.msra.mxu0 0
        %639 = vmatprep.subr.bf16.mxu0 0
        %640 = vmatpush2.bf16.msra.mxu0 0
        %641 = vmatprep.mubr.bf16.mxu0 0
        %642 = vmatmul.mubr.bf16.gmra.mxu0 %v557
        %v643 = vpop.f32.mrf.mxu0
        %v644 = vadd.f32 0.0, %v643
        %v645 = vpop.f32.mrf.mxu0
        %v646 = vpop.f32.mrf.mxu0
        %v647 = vpop.f32.mrf.mxu0
        %648 = vdwg.mxu0
        %v649 = vadd.f32 %v539, %v603
        %v650 = vadd.f32 %v540, %v605
        %v651 = vadd.f32 %v541, %v644
        %652 = vrot.lane.b32.xlu0 %v207, 96
        %v653 = vpop.permute.xlu0 %652
        %654 = vrot.lane.b32.xlu0 %v216, 28
        %v655 = vpop.permute.xlu0 %654
        %656 = vrot.lane.b32.xlu0 %v217, 28
        %v657 = vpop.permute.xlu0 %656
        %658 = vrot.lane.b32.xlu0 %v218, 28
        %v659 = vpop.permute.xlu0 %658
        %660 = vrot.lane.b32.xlu0 %v219, 28
        %v661 = vpop.permute.xlu0 %660
        %vm662 = vcmask 228352
        %v663 = vsel %vm662, %v655, %v657
        %v664 = vsel %vm662, %v657, %v659
        %v665 = vsel %vm662, %v659, %v661
        %v667 = vsel %vm232, %v653, 0
        %v670 = vsel %vm236, %v663, 0
        %v673 = vsel %vm236, %v664, 0
        %v676 = vsel %vm236, %v665, 0
        %678 = vmatprep.subr.bf16.mxu0 0
        %679 = vmatpush1.bf16.msra.mxu0 0
        %680 = vmatprep.subr.bf16.mxu0 0
        %681 = vmatpush1.bf16.msra.mxu0 0
        %682 = vmatprep.subr.bf16.mxu0 0
        %683 = vmatpush1.bf16.msra.mxu0 0
        %684 = vmatprep.subr.bf16.mxu0 0
        %685 = vmatpush1.bf16.msra.mxu0 0
        %686 = vmatprep.subr.bf16.mxu0 0
        %687 = vmatpush1.bf16.msra.mxu0 0
        %688 = vmatprep.subr.bf16.mxu0 0
        %689 = vmatpush1.bf16.msra.mxu0 0
        %690 = vmatprep.subr.bf16.mxu0 0
        %691 = vmatpush1.bf16.msra.mxu0 0
        %692 = vmatprep.subr.bf16.mxu0 %v673
        %693 = vmatpush1.bf16.msra.mxu0 %v670
        %694 = vmatprep.subr.bf16.mxu0 0
        %695 = vmatpush2.bf16.msra.mxu0 0
        %696 = vmatprep.subr.bf16.mxu0 0
        %697 = vmatpush2.bf16.msra.mxu0 0
        %698 = vmatprep.subr.bf16.mxu0 0
        %699 = vmatpush2.bf16.msra.mxu0 0
        %700 = vmatprep.subr.bf16.mxu0 0
        %701 = vmatpush2.bf16.msra.mxu0 0
        %702 = vmatprep.subr.bf16.mxu0 0
        %703 = vmatpush2.bf16.msra.mxu0 0
        %704 = vmatprep.subr.bf16.mxu0 0
        %705 = vmatpush2.bf16.msra.mxu0 0
        %706 = vmatprep.subr.bf16.mxu0 0
        %707 = vmatpush2.bf16.msra.mxu0 0
        %708 = vmatprep.subr.bf16.mxu0 0
        %709 = vmatpush2.bf16.msra.mxu0 0
        %710 = vmatprep.mubr.bf16.mxu0 0
        %711 = vmatmul.mubr.bf16.gmra.mxu0 %v667
        %v712 = vpop.f32.mrf.mxu0
        %v713 = vadd.f32 0.0, %v712
        %v714 = vpop.f32.mrf.mxu0
        %v715 = vadd.f32 0.0, %v714
        %v716 = vpop.f32.mrf.mxu0
        %v717 = vpop.f32.mrf.mxu0
        %718 = vdwg.mxu0
        %719 = vmatprep.subr.bf16.mxu0 0
        %720 = vmatpush1.bf16.msra.mxu0 0
        %721 = vmatprep.subr.bf16.mxu0 0
        %722 = vmatpush1.bf16.msra.mxu0 0
        %723 = vmatprep.subr.bf16.mxu0 0
        %724 = vmatpush1.bf16.msra.mxu0 0
        %725 = vmatprep.subr.bf16.mxu0 0
        %726 = vmatpush1.bf16.msra.mxu0 0
        %727 = vmatprep.subr.bf16.mxu0 0
        %728 = vmatpush1.bf16.msra.mxu0 0
        %729 = vmatprep.subr.bf16.mxu0 0
        %730 = vmatpush1.bf16.msra.mxu0 0
        %731 = vmatprep.subr.bf16.mxu0 0
        %732 = vmatpush1.bf16.msra.mxu0 0
        %733 = vmatprep.subr.bf16.mxu0 0
        %734 = vmatpush1.bf16.msra.mxu0 %v676
        %735 = vmatprep.subr.bf16.mxu0 0
        %736 = vmatpush2.bf16.msra.mxu0 0
        %737 = vmatprep.subr.bf16.mxu0 0
        %738 = vmatpush2.bf16.msra.mxu0 0
        %739 = vmatprep.subr.bf16.mxu0 0
        %740 = vmatpush2.bf16.msra.mxu0 0
        %741 = vmatprep.subr.bf16.mxu0 0
        %742 = vmatpush2.bf16.msra.mxu0 0
        %743 = vmatprep.subr.bf16.mxu0 0
        %744 = vmatpush2.bf16.msra.mxu0 0
        %745 = vmatprep.subr.bf16.mxu0 0
        %746 = vmatpush2.bf16.msra.mxu0 0
        %747 = vmatprep.subr.bf16.mxu0 0
        %748 = vmatpush2.bf16.msra.mxu0 0
        %749 = vmatprep.subr.bf16.mxu0 0
        %750 = vmatpush2.bf16.msra.mxu0 0
        %751 = vmatprep.mubr.bf16.mxu0 0
        %752 = vmatmul.mubr.bf16.gmra.mxu0 %v667
        %v753 = vpop.f32.mrf.mxu0
        %v754 = vadd.f32 0.0, %v753
        %v755 = vpop.f32.mrf.mxu0
        %v756 = vpop.f32.mrf.mxu0
        %v757 = vpop.f32.mrf.mxu0
        %758 = vdwg.mxu0
        %v759 = vadd.f32 %v649, %v713
        %v760 = vadd.f32 %v650, %v715
        %v761 = vadd.f32 %v651, %v754
        %762 = vrot.lane.b32.xlu0 %v207, 88
        %v763 = vpop.permute.xlu0 %762
        %764 = vrot.lane.b32.xlu0 %v216, 27
        %v765 = vpop.permute.xlu0 %764
        %766 = vrot.lane.b32.xlu0 %v217, 27
        %v767 = vpop.permute.xlu0 %766
        %768 = vrot.lane.b32.xlu0 %v218, 27
        %v769 = vpop.permute.xlu0 %768
        %770 = vrot.lane.b32.xlu0 %v219, 27
        %v771 = vpop.permute.xlu0 %770
        %vm772 = vcmask 220160
        %v773 = vsel %vm772, %v765, %v767
        %v774 = vsel %vm772, %v767, %v769
        %v775 = vsel %vm772, %v769, %v771
        %v777 = vsel %vm232, %v763, 0
        %v780 = vsel %vm236, %v773, 0
        %v783 = vsel %vm236, %v774, 0
        %v786 = vsel %vm236, %v775, 0
        %788 = vmatprep.subr.bf16.mxu0 0
        %789 = vmatpush1.bf16.msra.mxu0 0
        %790 = vmatprep.subr.bf16.mxu0 0
        %791 = vmatpush1.bf16.msra.mxu0 0
        %792 = vmatprep.subr.bf16.mxu0 0
        %793 = vmatpush1.bf16.msra.mxu0 0
        %794 = vmatprep.subr.bf16.mxu0 0
        %795 = vmatpush1.bf16.msra.mxu0 0
        %796 = vmatprep.subr.bf16.mxu0 0
        %797 = vmatpush1.bf16.msra.mxu0 0
        %798 = vmatprep.subr.bf16.mxu0 0
        %799 = vmatpush1.bf16.msra.mxu0 0
        %800 = vmatprep.subr.bf16.mxu0 0
        %801 = vmatpush1.bf16.msra.mxu0 0
        %802 = vmatprep.subr.bf16.mxu0 %v783
        %803 = vmatpush1.bf16.msra.mxu0 %v780
        %804 = vmatprep.subr.bf16.mxu0 0
        %805 = vmatpush2.bf16.msra.mxu0 0
        %806 = vmatprep.subr.bf16.mxu0 0
        %807 = vmatpush2.bf16.msra.mxu0 0
        %808 = vmatprep.subr.bf16.mxu0 0
        %809 = vmatpush2.bf16.msra.mxu0 0
        %810 = vmatprep.subr.bf16.mxu0 0
        %811 = vmatpush2.bf16.msra.mxu0 0
        %812 = vmatprep.subr.bf16.mxu0 0
        %813 = vmatpush2.bf16.msra.mxu0 0
        %814 = vmatprep.subr.bf16.mxu0 0
        %815 = vmatpush2.bf16.msra.mxu0 0
        %816 = vmatprep.subr.bf16.mxu0 0
        %817 = vmatpush2.bf16.msra.mxu0 0
        %818 = vmatprep.subr.bf16.mxu0 0
        %819 = vmatpush2.bf16.msra.mxu0 0
        %820 = vmatprep.mubr.bf16.mxu0 0
        %821 = vmatmul.mubr.bf16.gmra.mxu0 %v777
        %v822 = vpop.f32.mrf.mxu0
        %v823 = vadd.f32 0.0, %v822
        %v824 = vpop.f32.mrf.mxu0
        %v825 = vadd.f32 0.0, %v824
        %v826 = vpop.f32.mrf.mxu0
        %v827 = vpop.f32.mrf.mxu0
        %828 = vdwg.mxu0
        %829 = vmatprep.subr.bf16.mxu0 0
        %830 = vmatpush1.bf16.msra.mxu0 0
        %831 = vmatprep.subr.bf16.mxu0 0
        %832 = vmatpush1.bf16.msra.mxu0 0
        %833 = vmatprep.subr.bf16.mxu0 0
        %834 = vmatpush1.bf16.msra.mxu0 0
        %835 = vmatprep.subr.bf16.mxu0 0
        %836 = vmatpush1.bf16.msra.mxu0 0
        %837 = vmatprep.subr.bf16.mxu0 0
        %838 = vmatpush1.bf16.msra.mxu0 0
        %839 = vmatprep.subr.bf16.mxu0 0
        %840 = vmatpush1.bf16.msra.mxu0 0
        %841 = vmatprep.subr.bf16.mxu0 0
        %842 = vmatpush1.bf16.msra.mxu0 0
        %843 = vmatprep.subr.bf16.mxu0 0
        %844 = vmatpush1.bf16.msra.mxu0 %v786
        %845 = vmatprep.subr.bf16.mxu0 0
        %846 = vmatpush2.bf16.msra.mxu0 0
        %847 = vmatprep.subr.bf16.mxu0 0
        %848 = vmatpush2.bf16.msra.mxu0 0
        %849 = vmatprep.subr.bf16.mxu0 0
        %850 = vmatpush2.bf16.msra.mxu0 0
        %851 = vmatprep.subr.bf16.mxu0 0
        %852 = vmatpush2.bf16.msra.mxu0 0
        %853 = vmatprep.subr.bf16.mxu0 0
        %854 = vmatpush2.bf16.msra.mxu0 0
        %855 = vmatprep.subr.bf16.mxu0 0
        %856 = vmatpush2.bf16.msra.mxu0 0
        %857 = vmatprep.subr.bf16.mxu0 0
        %858 = vmatpush2.bf16.msra.mxu0 0
        %859 = vmatprep.subr.bf16.mxu0 0
        %860 = vmatpush2.bf16.msra.mxu0 0
        %861 = vmatprep.mubr.bf16.mxu0 0
        %862 = vmatmul.mubr.bf16.gmra.mxu0 %v777
        %v863 = vpop.f32.mrf.mxu0
        %v864 = vadd.f32 0.0, %v863
        %v865 = vpop.f32.mrf.mxu0
        %v866 = vpop.f32.mrf.mxu0
        %v867 = vpop.f32.mrf.mxu0
        %868 = vdwg.mxu0
        %v869 = vadd.f32 %v759, %v823
        %v870 = vadd.f32 %v760, %v825
        %v871 = vadd.f32 %v761, %v864
        %872 = vrot.lane.b32.xlu0 %v207, 80
        %v873 = vpop.permute.xlu0 %872
        %874 = vrot.lane.b32.xlu0 %v216, 5
        %v875 = vpop.permute.xlu0 %874
        %876 = vrot.lane.b32.xlu0 %v217, 5
        %v877 = vpop.permute.xlu0 %876
        %878 = vrot.lane.b32.xlu0 %v218, 5
        %v879 = vpop.permute.xlu0 %878
        %880 = vrot.lane.b32.xlu0 %v219, 5
        %v881 = vpop.permute.xlu0 %880
        %vm882 = vcmask 39936
        %v883 = vsel %vm882, %v875, %v877
        %v884 = vsel %vm882, %v877, %v879
        %v885 = vsel %vm882, %v879, %v881
        %v887 = vsel %vm232, %v873, 0
        %v890 = vsel %vm236, %v883, 0
        %v893 = vsel %vm236, %v884, 0
        %v896 = vsel %vm236, %v885, 0
        %898 = vmatprep.subr.bf16.mxu0 0
        %899 = vmatpush1.bf16.msra.mxu0 0
        %900 = vmatprep.subr.bf16.mxu0 0
        %901 = vmatpush1.bf16.msra.mxu0 0
        %902 = vmatprep.subr.bf16.mxu0 0
        %903 = vmatpush1.bf16.msra.mxu0 0
        %904 = vmatprep.subr.bf16.mxu0 0
        %905 = vmatpush1.bf16.msra.mxu0 0
        %906 = vmatprep.subr.bf16.mxu0 0
        %907 = vmatpush1.bf16.msra.mxu0 0
        %908 = vmatprep.subr.bf16.mxu0 0
        %909 = vmatpush1.bf16.msra.mxu0 0
        %910 = vmatprep.subr.bf16.mxu0 0
        %911 = vmatpush1.bf16.msra.mxu0 0
        %912 = vmatprep.subr.bf16.mxu0 %v893
        %913 = vmatpush1.bf16.msra.mxu0 %v890
        %914 = vmatprep.subr.bf16.mxu0 0
        %915 = vmatpush2.bf16.msra.mxu0 0
        %916 = vmatprep.subr.bf16.mxu0 0
        %917 = vmatpush2.bf16.msra.mxu0 0
        %918 = vmatprep.subr.bf16.mxu0 0
        %919 = vmatpush2.bf16.msra.mxu0 0
        %920 = vmatprep.subr.bf16.mxu0 0
        %921 = vmatpush2.bf16.msra.mxu0 0
        %922 = vmatprep.subr.bf16.mxu0 0
        %923 = vmatpush2.bf16.msra.mxu0 0
        %924 = vmatprep.subr.bf16.mxu0 0
        %925 = vmatpush2.bf16.msra.mxu0 0
        %926 = vmatprep.subr.bf16.mxu0 0
        %927 = vmatpush2.bf16.msra.mxu0 0
        %928 = vmatprep.subr.bf16.mxu0 0
        %929 = vmatpush2.bf16.msra.mxu0 0
        %930 = vmatprep.mubr.bf16.mxu0 0
        %931 = vmatmul.mubr.bf16.gmra.mxu0 %v887
        %v932 = vpop.f32.mrf.mxu0
        %v933 = vadd.f32 0.0, %v932
        %v934 = vpop.f32.mrf.mxu0
        %v935 = vadd.f32 0.0, %v934
        %v936 = vpop.f32.mrf.mxu0
        %v937 = vpop.f32.mrf.mxu0
        %938 = vdwg.mxu0
        %939 = vmatprep.subr.bf16.mxu0 0
        %940 = vmatpush1.bf16.msra.mxu0 0
        %941 = vmatprep.subr.bf16.mxu0 0
        %942 = vmatpush1.bf16.msra.mxu0 0
        %943 = vmatprep.subr.bf16.mxu0 0
        %944 = vmatpush1.bf16.msra.mxu0 0
        %945 = vmatprep.subr.bf16.mxu0 0
        %946 = vmatpush1.bf16.msra.mxu0 0
        %947 = vmatprep.subr.bf16.mxu0 0
        %948 = vmatpush1.bf16.msra.mxu0 0
        %949 = vmatprep.subr.bf16.mxu0 0
        %950 = vmatpush1.bf16.msra.mxu0 0
        %951 = vmatprep.subr.bf16.mxu0 0
        %952 = vmatpush1.bf16.msra.mxu0 0
        %953 = vmatprep.subr.bf16.mxu0 0
        %954 = vmatpush1.bf16.msra.mxu0 %v896
        %955 = vmatprep.subr.bf16.mxu0 0
        %956 = vmatpush2.bf16.msra.mxu0 0
        %957 = vmatprep.subr.bf16.mxu0 0
        %958 = vmatpush2.bf16.msra.mxu0 0
        %959 = vmatprep.subr.bf16.mxu0 0
        %960 = vmatpush2.bf16.msra.mxu0 0
        %961 = vmatprep.subr.bf16.mxu0 0
        %962 = vmatpush2.bf16.msra.mxu0 0
        %963 = vmatprep.subr.bf16.mxu0 0
        %964 = vmatpush2.bf16.msra.mxu0 0
        %965 = vmatprep.subr.bf16.mxu0 0
        %966 = vmatpush2.bf16.msra.mxu0 0
        %967 = vmatprep.subr.bf16.mxu0 0
        %968 = vmatpush2.bf16.msra.mxu0 0
        %969 = vmatprep.subr.bf16.mxu0 0
        %970 = vmatpush2.bf16.msra.mxu0 0
        %971 = vmatprep.mubr.bf16.mxu0 0
        %972 = vmatmul.mubr.bf16.gmra.mxu0 %v887
        %v973 = vpop.f32.mrf.mxu0
        %v974 = vadd.f32 0.0, %v973
        %v975 = vpop.f32.mrf.mxu0
        %v976 = vpop.f32.mrf.mxu0
        %v977 = vpop.f32.mrf.mxu0
        %978 = vdwg.mxu0
        %v979 = vadd.f32 %v869, %v933
        %v980 = vadd.f32 %v870, %v935
        %v981 = vadd.f32 %v871, %v974
        %982 = vrot.lane.b32.xlu0 %v207, 72
        %v983 = vpop.permute.xlu0 %982
        %984 = vrot.lane.b32.xlu0 %v216, 4
        %v985 = vpop.permute.xlu0 %984
        %986 = vrot.lane.b32.xlu0 %v217, 4
        %v987 = vpop.permute.xlu0 %986
        %988 = vrot.lane.b32.xlu0 %v218, 4
        %v989 = vpop.permute.xlu0 %988
        %990 = vrot.lane.b32.xlu0 %v219, 4
        %v991 = vpop.permute.xlu0 %990
        %vm992 = vcmask 31744
        %v993 = vsel %vm992, %v985, %v987
        %v994 = vsel %vm992, %v987, %v989
        %v995 = vsel %vm992, %v989, %v991
        %v997 = vsel %vm232, %v983, 0
        %v1000 = vsel %vm236, %v993, 0
        %v1003 = vsel %vm236, %v994, 0
        %v1006 = vsel %vm236, %v995, 0
        %1008 = vmatprep.subr.bf16.mxu0 0
        %1009 = vmatpush1.bf16.msra.mxu0 0
        %1010 = vmatprep.subr.bf16.mxu0 0
        %1011 = vmatpush1.bf16.msra.mxu0 0
        %1012 = vmatprep.subr.bf16.mxu0 0
        %1013 = vmatpush1.bf16.msra.mxu0 0
        %1014 = vmatprep.subr.bf16.mxu0 0
        %1015 = vmatpush1.bf16.msra.mxu0 0
        %1016 = vmatprep.subr.bf16.mxu0 0
        %1017 = vmatpush1.bf16.msra.mxu0 0
        %1018 = vmatprep.subr.bf16.mxu0 0
        %1019 = vmatpush1.bf16.msra.mxu0 0
        %1020 = vmatprep.subr.bf16.mxu0 0
        %1021 = vmatpush1.bf16.msra.mxu0 0
        %1022 = vmatprep.subr.bf16.mxu0 %v1003
        %1023 = vmatpush1.bf16.msra.mxu0 %v1000
        %1024 = vmatprep.subr.bf16.mxu0 0
        %1025 = vmatpush2.bf16.msra.mxu0 0
        %1026 = vmatprep.subr.bf16.mxu0 0
        %1027 = vmatpush2.bf16.msra.mxu0 0
        %1028 = vmatprep.subr.bf16.mxu0 0
        %1029 = vmatpush2.bf16.msra.mxu0 0
        %1030 = vmatprep.subr.bf16.mxu0 0
        %1031 = vmatpush2.bf16.msra.mxu0 0
        %1032 = vmatprep.subr.bf16.mxu0 0
        %1033 = vmatpush2.bf16.msra.mxu0 0
        %1034 = vmatprep.subr.bf16.mxu0 0
        %1035 = vmatpush2.bf16.msra.mxu0 0
        %1036 = vmatprep.subr.bf16.mxu0 0
        %1037 = vmatpush2.bf16.msra.mxu0 0
        %1038 = vmatprep.subr.bf16.mxu0 0
        %1039 = vmatpush2.bf16.msra.mxu0 0
        %1040 = vmatprep.mubr.bf16.mxu0 0
        %1041 = vmatmul.mubr.bf16.gmra.mxu0 %v997
        %v1042 = vpop.f32.mrf.mxu0
        %v1043 = vadd.f32 0.0, %v1042
        %v1044 = vpop.f32.mrf.mxu0
        %v1045 = vadd.f32 0.0, %v1044
        %v1046 = vpop.f32.mrf.mxu0
        %v1047 = vpop.f32.mrf.mxu0
        %1048 = vdwg.mxu0
        %1049 = vmatprep.subr.bf16.mxu0 0
        %1050 = vmatpush1.bf16.msra.mxu0 0
        %1051 = vmatprep.subr.bf16.mxu0 0
        %1052 = vmatpush1.bf16.msra.mxu0 0
        %1053 = vmatprep.subr.bf16.mxu0 0
        %1054 = vmatpush1.bf16.msra.mxu0 0
        %1055 = vmatprep.subr.bf16.mxu0 0
        %1056 = vmatpush1.bf16.msra.mxu0 0
        %1057 = vmatprep.subr.bf16.mxu0 0
        %1058 = vmatpush1.bf16.msra.mxu0 0
        %1059 = vmatprep.subr.bf16.mxu0 0
        %1060 = vmatpush1.bf16.msra.mxu0 0
        %1061 = vmatprep.subr.bf16.mxu0 0
        %1062 = vmatpush1.bf16.msra.mxu0 0
        %1063 = vmatprep.subr.bf16.mxu0 0
        %1064 = vmatpush1.bf16.msra.mxu0 %v1006
        %1065 = vmatprep.subr.bf16.mxu0 0
        %1066 = vmatpush2.bf16.msra.mxu0 0
        %1067 = vmatprep.subr.bf16.mxu0 0
        %1068 = vmatpush2.bf16.msra.mxu0 0
        %1069 = vmatprep.subr.bf16.mxu0 0
        %1070 = vmatpush2.bf16.msra.mxu0 0
        %1071 = vmatprep.subr.bf16.mxu0 0
        %1072 = vmatpush2.bf16.msra.mxu0 0
        %1073 = vmatprep.subr.bf16.mxu0 0
        %1074 = vmatpush2.bf16.msra.mxu0 0
        %1075 = vmatprep.subr.bf16.mxu0 0
        %1076 = vmatpush2.bf16.msra.mxu0 0
        %1077 = vmatprep.subr.bf16.mxu0 0
        %1078 = vmatpush2.bf16.msra.mxu0 0
        %1079 = vmatprep.subr.bf16.mxu0 0
        %1080 = vmatpush2.bf16.msra.mxu0 0
        %1081 = vmatprep.mubr.bf16.mxu0 0
        %1082 = vmatmul.mubr.bf16.gmra.mxu0 %v997
        %v1083 = vpop.f32.mrf.mxu0
        %v1084 = vadd.f32 0.0, %v1083
        %v1085 = vpop.f32.mrf.mxu0
        %v1086 = vpop.f32.mrf.mxu0
        %v1087 = vpop.f32.mrf.mxu0
        %1088 = vdwg.mxu0
        %v1089 = vadd.f32 %v979, %v1043
        %v1090 = vadd.f32 %v980, %v1045
        %v1091 = vadd.f32 %v981, %v1084
        %1092 = vrot.lane.b32.xlu0 %v207, 64
        %v1093 = vpop.permute.xlu0 %1092
        %1094 = vrot.lane.b32.xlu0 %v216, 3
        %v1095 = vpop.permute.xlu0 %1094
        %1096 = vrot.lane.b32.xlu0 %v217, 3
        %v1097 = vpop.permute.xlu0 %1096
        %1098 = vrot.lane.b32.xlu0 %v218, 3
        %v1099 = vpop.permute.xlu0 %1098
        %1100 = vrot.lane.b32.xlu0 %v219, 3
        %v1101 = vpop.permute.xlu0 %1100
        %vm1102 = vcmask 23552
        %v1103 = vsel %vm1102, %v1095, %v1097
        %v1104 = vsel %vm1102, %v1097, %v1099
        %v1105 = vsel %vm1102, %v1099, %v1101
        %v1107 = vsel %vm232, %v1093, 0
        %v1110 = vsel %vm236, %v1103, 0
        %v1113 = vsel %vm236, %v1104, 0
        %v1116 = vsel %vm236, %v1105, 0
        %1118 = vmatprep.subr.bf16.mxu0 0
        %1119 = vmatpush1.bf16.msra.mxu0 0
        %1120 = vmatprep.subr.bf16.mxu0 0
        %1121 = vmatpush1.bf16.msra.mxu0 0
        %1122 = vmatprep.subr.bf16.mxu0 0
        %1123 = vmatpush1.bf16.msra.mxu0 0
        %1124 = vmatprep.subr.bf16.mxu0 0
        %1125 = vmatpush1.bf16.msra.mxu0 0
        %1126 = vmatprep.subr.bf16.mxu0 0
        %1127 = vmatpush1.bf16.msra.mxu0 0
        %1128 = vmatprep.subr.bf16.mxu0 0
        %1129 = vmatpush1.bf16.msra.mxu0 0
        %1130 = vmatprep.subr.bf16.mxu0 0
        %1131 = vmatpush1.bf16.msra.mxu0 0
        %1132 = vmatprep.subr.bf16.mxu0 %v1113
        %1133 = vmatpush1.bf16.msra.mxu0 %v1110
        %1134 = vmatprep.subr.bf16.mxu0 0
        %1135 = vmatpush2.bf16.msra.mxu0 0
        %1136 = vmatprep.subr.bf16.mxu0 0
        %1137 = vmatpush2.bf16.msra.mxu0 0
        %1138 = vmatprep.subr.bf16.mxu0 0
        %1139 = vmatpush2.bf16.msra.mxu0 0
        %1140 = vmatprep.subr.bf16.mxu0 0
        %1141 = vmatpush2.bf16.msra.mxu0 0
        %1142 = vmatprep.subr.bf16.mxu0 0
        %1143 = vmatpush2.bf16.msra.mxu0 0
        %1144 = vmatprep.subr.bf16.mxu0 0
        %1145 = vmatpush2.bf16.msra.mxu0 0
        %1146 = vmatprep.subr.bf16.mxu0 0
        %1147 = vmatpush2.bf16.msra.mxu0 0
        %1148 = vmatprep.subr.bf16.mxu0 0
        %1149 = vmatpush2.bf16.msra.mxu0 0
        %1150 = vmatprep.mubr.bf16.mxu0 0
        %1151 = vmatmul.mubr.bf16.gmra.mxu0 %v1107
        %v1152 = vpop.f32.mrf.mxu0
        %v1153 = vadd.f32 0.0, %v1152
        %v1154 = vpop.f32.mrf.mxu0
        %v1155 = vadd.f32 0.0, %v1154
        %v1156 = vpop.f32.mrf.mxu0
        %v1157 = vpop.f32.mrf.mxu0
        %1158 = vdwg.mxu0
        %1159 = vmatprep.subr.bf16.mxu0 0
        %1160 = vmatpush1.bf16.msra.mxu0 0
        %1161 = vmatprep.subr.bf16.mxu0 0
        %1162 = vmatpush1.bf16.msra.mxu0 0
        %1163 = vmatprep.subr.bf16.mxu0 0
        %1164 = vmatpush1.bf16.msra.mxu0 0
        %1165 = vmatprep.subr.bf16.mxu0 0
        %1166 = vmatpush1.bf16.msra.mxu0 0
        %1167 = vmatprep.subr.bf16.mxu0 0
        %1168 = vmatpush1.bf16.msra.mxu0 0
        %1169 = vmatprep.subr.bf16.mxu0 0
        %1170 = vmatpush1.bf16.msra.mxu0 0
        %1171 = vmatprep.subr.bf16.mxu0 0
        %1172 = vmatpush1.bf16.msra.mxu0 0
        %1173 = vmatprep.subr.bf16.mxu0 0
        %1174 = vmatpush1.bf16.msra.mxu0 %v1116
        %1175 = vmatprep.subr.bf16.mxu0 0
        %1176 = vmatpush2.bf16.msra.mxu0 0
        %1177 = vmatprep.subr.bf16.mxu0 0
        %1178 = vmatpush2.bf16.msra.mxu0 0
        %1179 = vmatprep.subr.bf16.mxu0 0
        %1180 = vmatpush2.bf16.msra.mxu0 0
        %1181 = vmatprep.subr.bf16.mxu0 0
        %1182 = vmatpush2.bf16.msra.mxu0 0
        %1183 = vmatprep.subr.bf16.mxu0 0
        %1184 = vmatpush2.bf16.msra.mxu0 0
        %1185 = vmatprep.subr.bf16.mxu0 0
        %1186 = vmatpush2.bf16.msra.mxu0 0
        %1187 = vmatprep.subr.bf16.mxu0 0
        %1188 = vmatpush2.bf16.msra.mxu0 0
        %1189 = vmatprep.subr.bf16.mxu0 0
        %1190 = vmatpush2.bf16.msra.mxu0 0
        %1191 = vmatprep.mubr.bf16.mxu0 0
        %1192 = vmatmul.mubr.bf16.gmra.mxu0 %v1107
        %v1193 = vpop.f32.mrf.mxu0
        %v1194 = vadd.f32 0.0, %v1193
        %v1195 = vpop.f32.mrf.mxu0
        %v1196 = vpop.f32.mrf.mxu0
        %v1197 = vpop.f32.mrf.mxu0
        %1198 = vdwg.mxu0
        %v1199 = vadd.f32 %v1089, %v1153
        %v1200 = vadd.f32 %v1090, %v1155
        %v1201 = vadd.f32 %v1091, %v1194
        %1202 = vrot.lane.b32.xlu0 %v207, 56
        %v1203 = vpop.permute.xlu0 %1202
        %1204 = vrot.lane.b32.xlu0 %v216, 78
        %v1205 = vpop.permute.xlu0 %1204
        %1206 = vrot.lane.b32.xlu0 %v217, 78
        %v1207 = vpop.permute.xlu0 %1206
        %1208 = vrot.lane.b32.xlu0 %v218, 78
        %v1209 = vpop.permute.xlu0 %1208
        %1210 = vrot.lane.b32.xlu0 %v219, 78
        %v1211 = vpop.permute.xlu0 %1210
        %vm1212 = vcmask 637952
        %v1213 = vsel %vm1212, %v1205, %v1207
        %v1214 = vsel %vm1212, %v1207, %v1209
        %v1215 = vsel %vm1212, %v1209, %v1211
        %v1217 = vsel %vm232, %v1203, 0
        %v1220 = vsel %vm236, %v1213, 0
        %v1223 = vsel %vm236, %v1214, 0
        %v1226 = vsel %vm236, %v1215, 0
        %1228 = vmatprep.subr.bf16.mxu0 0
        %1229 = vmatpush1.bf16.msra.mxu0 0
        %1230 = vmatprep.subr.bf16.mxu0 0
        %1231 = vmatpush1.bf16.msra.mxu0 0
        %1232 = vmatprep.subr.bf16.mxu0 0
        %1233 = vmatpush1.bf16.msra.mxu0 0
        %1234 = vmatprep.subr.bf16.mxu0 0
        %1235 = vmatpush1.bf16.msra.mxu0 0
        %1236 = vmatprep.subr.bf16.mxu0 0
        %1237 = vmatpush1.bf16.msra.mxu0 0
        %1238 = vmatprep.subr.bf16.mxu0 0
        %1239 = vmatpush1.bf16.msra.mxu0 0
        %1240 = vmatprep.subr.bf16.mxu0 0
        %1241 = vmatpush1.bf16.msra.mxu0 0
        %1242 = vmatprep.subr.bf16.mxu0 %v1223
        %1243 = vmatpush1.bf16.msra.mxu0 %v1220
        %1244 = vmatprep.subr.bf16.mxu0 0
        %1245 = vmatpush2.bf16.msra.mxu0 0
        %1246 = vmatprep.subr.bf16.mxu0 0
        %1247 = vmatpush2.bf16.msra.mxu0 0
        %1248 = vmatprep.subr.bf16.mxu0 0
        %1249 = vmatpush2.bf16.msra.mxu0 0
        %1250 = vmatprep.subr.bf16.mxu0 0
        %1251 = vmatpush2.bf16.msra.mxu0 0
        %1252 = vmatprep.subr.bf16.mxu0 0
        %1253 = vmatpush2.bf16.msra.mxu0 0
        %1254 = vmatprep.subr.bf16.mxu0 0
        %1255 = vmatpush2.bf16.msra.mxu0 0
        %1256 = vmatprep.subr.bf16.mxu0 0
        %1257 = vmatpush2.bf16.msra.mxu0 0
        %1258 = vmatprep.subr.bf16.mxu0 0
        %1259 = vmatpush2.bf16.msra.mxu0 0
        %1260 = vmatprep.mubr.bf16.mxu0 0
        %1261 = vmatmul.mubr.bf16.gmra.mxu0 %v1217
        %v1262 = vpop.f32.mrf.mxu0
        %v1263 = vadd.f32 0.0, %v1262
        %v1264 = vpop.f32.mrf.mxu0
        %v1265 = vadd.f32 0.0, %v1264
        %v1266 = vpop.f32.mrf.mxu0
        %v1267 = vpop.f32.mrf.mxu0
        %1268 = vdwg.mxu0
        %1269 = vmatprep.subr.bf16.mxu0 0
        %1270 = vmatpush1.bf16.msra.mxu0 0
        %1271 = vmatprep.subr.bf16.mxu0 0
        %1272 = vmatpush1.bf16.msra.mxu0 0
        %1273 = vmatprep.subr.bf16.mxu0 0
        %1274 = vmatpush1.bf16.msra.mxu0 0
        %1275 = vmatprep.subr.bf16.mxu0 0
        %1276 = vmatpush1.bf16.msra.mxu0 0
        %1277 = vmatprep.subr.bf16.mxu0 0
        %1278 = vmatpush1.bf16.msra.mxu0 0
        %1279 = vmatprep.subr.bf16.mxu0 0
        %1280 = vmatpush1.bf16.msra.mxu0 0
        %1281 = vmatprep.subr.bf16.mxu0 0
        %1282 = vmatpush1.bf16.msra.mxu0 0
        %1283 = vmatprep.subr.bf16.mxu0 0
        %1284 = vmatpush1.bf16.msra.mxu0 %v1226
        %1285 = vmatprep.subr.bf16.mxu0 0
        %1286 = vmatpush2.bf16.msra.mxu0 0
        %1287 = vmatprep.subr.bf16.mxu0 0
        %1288 = vmatpush2.bf16.msra.mxu0 0
        %1289 = vmatprep.subr.bf16.mxu0 0
        %1290 = vmatpush2.bf16.msra.mxu0 0
        %1291 = vmatprep.subr.bf16.mxu0 0
        %1292 = vmatpush2.bf16.msra.mxu0 0
        %1293 = vmatprep.subr.bf16.mxu0 0
        %1294 = vmatpush2.bf16.msra.mxu0 0
        %1295 = vmatprep.subr.bf16.mxu0 0
        %1296 = vmatpush2.bf16.msra.mxu0 0
        %1297 = vmatprep.subr.bf16.mxu0 0
        %1298 = vmatpush2.bf16.msra.mxu0 0
        %1299 = vmatprep.subr.bf16.mxu0 0
        %1300 = vmatpush2.bf16.msra.mxu0 0
        %1301 = vmatprep.mubr.bf16.mxu0 0
        %1302 = vmatmul.mubr.bf16.gmra.mxu0 %v1217
        %v1303 = vpop.f32.mrf.mxu0
        %v1304 = vadd.f32 0.0, %v1303
        %v1305 = vpop.f32.mrf.mxu0
        %v1306 = vpop.f32.mrf.mxu0
        %v1307 = vpop.f32.mrf.mxu0
        %1308 = vdwg.mxu0
        %v1309 = vadd.f32 %v1199, %v1263
        %v1310 = vadd.f32 %v1200, %v1265
        %v1311 = vadd.f32 %v1201, %v1304
        %1312 = vrot.lane.b32.xlu0 %v207, 48
        %v1313 = vpop.permute.xlu0 %1312
        %1314 = vrot.lane.b32.xlu0 %v216, 76
        %v1315 = vpop.permute.xlu0 %1314
        %1316 = vrot.lane.b32.xlu0 %v217, 76
        %v1317 = vpop.permute.xlu0 %1316
        %1318 = vrot.lane.b32.xlu0 %v218, 76
        %v1319 = vpop.permute.xlu0 %1318
        %1320 = vrot.lane.b32.xlu0 %v219, 76
        %v1321 = vpop.permute.xlu0 %1320
        %vm1322 = vcmask 621568
        %v1323 = vsel %vm1322, %v1315, %v1317
        %v1324 = vsel %vm1322, %v1317, %v1319
        %v1325 = vsel %vm1322, %v1319, %v1321
        %v1327 = vsel %vm232, %v1313, 0
        %v1330 = vsel %vm236, %v1323, 0
        %v1333 = vsel %vm236, %v1324, 0
        %v1336 = vsel %vm236, %v1325, 0
        %1338 = vmatprep.subr.bf16.mxu0 0
        %1339 = vmatpush1.bf16.msra.mxu0 0
        %1340 = vmatprep.subr.bf16.mxu0 0
        %1341 = vmatpush1.bf16.msra.mxu0 0
        %1342 = vmatprep.subr.bf16.mxu0 0
        %1343 = vmatpush1.bf16.msra.mxu0 0
        %1344 = vmatprep.subr.bf16.mxu0 0
        %1345 = vmatpush1.bf16.msra.mxu0 0
        %1346 = vmatprep.subr.bf16.mxu0 0
        %1347 = vmatpush1.bf16.msra.mxu0 0
        %1348 = vmatprep.subr.bf16.mxu0 0
        %1349 = vmatpush1.bf16.msra.mxu0 0
        %1350 = vmatprep.subr.bf16.mxu0 0
        %1351 = vmatpush1.bf16.msra.mxu0 0
        %1352 = vmatprep.subr.bf16.mxu0 %v1333
        %1353 = vmatpush1.bf16.msra.mxu0 %v1330
        %1354 = vmatprep.subr.bf16.mxu0 0
        %1355 = vmatpush2.bf16.msra.mxu0 0
        %1356 = vmatprep.subr.bf16.mxu0 0
        %1357 = vmatpush2.bf16.msra.mxu0 0
        %1358 = vmatprep.subr.bf16.mxu0 0
        %1359 = vmatpush2.bf16.msra.mxu0 0
        %1360 = vmatprep.subr.bf16.mxu0 0
        %1361 = vmatpush2.bf16.msra.mxu0 0
        %1362 = vmatprep.subr.bf16.mxu0 0
        %1363 = vmatpush2.bf16.msra.mxu0 0
        %1364 = vmatprep.subr.bf16.mxu0 0
        %1365 = vmatpush2.bf16.msra.mxu0 0
        %1366 = vmatprep.subr.bf16.mxu0 0
        %1367 = vmatpush2.bf16.msra.mxu0 0
        %1368 = vmatprep.subr.bf16.mxu0 0
        %1369 = vmatpush2.bf16.msra.mxu0 0
        %1370 = vmatprep.mubr.bf16.mxu0 0
        %1371 = vmatmul.mubr.bf16.gmra.mxu0 %v1327
        %v1372 = vpop.f32.mrf.mxu0
        %v1373 = vadd.f32 0.0, %v1372
        %v1374 = vpop.f32.mrf.mxu0
        %v1375 = vadd.f32 0.0, %v1374
        %v1376 = vpop.f32.mrf.mxu0
        %v1377 = vpop.f32.mrf.mxu0
        %1378 = vdwg.mxu0
        %1379 = vmatprep.subr.bf16.mxu0 0
        %1380 = vmatpush1.bf16.msra.mxu0 0
        %1381 = vmatprep.subr.bf16.mxu0 0
        %1382 = vmatpush1.bf16.msra.mxu0 0
        %1383 = vmatprep.subr.bf16.mxu0 0
        %1384 = vmatpush1.bf16.msra.mxu0 0
        %1385 = vmatprep.subr.bf16.mxu0 0
        %1386 = vmatpush1.bf16.msra.mxu0 0
        %1387 = vmatprep.subr.bf16.mxu0 0
        %1388 = vmatpush1.bf16.msra.mxu0 0
        %1389 = vmatprep.subr.bf16.mxu0 0
        %1390 = vmatpush1.bf16.msra.mxu0 0
        %1391 = vmatprep.subr.bf16.mxu0 0
        %1392 = vmatpush1.bf16.msra.mxu0 0
        %1393 = vmatprep.subr.bf16.mxu0 0
        %1394 = vmatpush1.bf16.msra.mxu0 %v1336
        %1395 = vmatprep.subr.bf16.mxu0 0
        %1396 = vmatpush2.bf16.msra.mxu0 0
        %1397 = vmatprep.subr.bf16.mxu0 0
        %1398 = vmatpush2.bf16.msra.mxu0 0
        %1399 = vmatprep.subr.bf16.mxu0 0
        %1400 = vmatpush2.bf16.msra.mxu0 0
        %1401 = vmatprep.subr.bf16.mxu0 0
        %1402 = vmatpush2.bf16.msra.mxu0 0
        %1403 = vmatprep.subr.bf16.mxu0 0
        %1404 = vmatpush2.bf16.msra.mxu0 0
        %1405 = vmatprep.subr.bf16.mxu0 0
        %1406 = vmatpush2.bf16.msra.mxu0 0
        %1407 = vmatprep.subr.bf16.mxu0 0
        %1408 = vmatpush2.bf16.msra.mxu0 0
        %1409 = vmatprep.subr.bf16.mxu0 0
        %1410 = vmatpush2.bf16.msra.mxu0 0
        %1411 = vmatprep.mubr.bf16.mxu0 0
        %1412 = vmatmul.mubr.bf16.gmra.mxu0 %v1327
        %v1413 = vpop.f32.mrf.mxu0
        %v1414 = vadd.f32 0.0, %v1413
        %v1415 = vpop.f32.mrf.mxu0
        %v1416 = vpop.f32.mrf.mxu0
        %v1417 = vpop.f32.mrf.mxu0
        %1418 = vdwg.mxu0
        %v1419 = vadd.f32 %v1309, %v1373
        %v1420 = vadd.f32 %v1310, %v1375
        %v1421 = vadd.f32 %v1311, %v1414
        %1422 = vrot.lane.b32.xlu0 %v207, 40
        %v1423 = vpop.permute.xlu0 %1422
        %1424 = vrot.lane.b32.xlu0 %v216, 74
        %v1425 = vpop.permute.xlu0 %1424
        %1426 = vrot.lane.b32.xlu0 %v217, 74
        %v1427 = vpop.permute.xlu0 %1426
        %1428 = vrot.lane.b32.xlu0 %v218, 74
        %v1429 = vpop.permute.xlu0 %1428
        %1430 = vrot.lane.b32.xlu0 %v219, 74
        %v1431 = vpop.permute.xlu0 %1430
        %vm1432 = vcmask 605184
        %v1433 = vsel %vm1432, %v1425, %v1427
        %v1434 = vsel %vm1432, %v1427, %v1429
        %v1435 = vsel %vm1432, %v1429, %v1431
        %v1437 = vsel %vm232, %v1423, 0
        %v1440 = vsel %vm236, %v1433, 0
        %v1443 = vsel %vm236, %v1434, 0
        %v1446 = vsel %vm236, %v1435, 0
        %1448 = vmatprep.subr.bf16.mxu0 0
        %1449 = vmatpush1.bf16.msra.mxu0 0
        %1450 = vmatprep.subr.bf16.mxu0 0
        %1451 = vmatpush1.bf16.msra.mxu0 0
        %1452 = vmatprep.subr.bf16.mxu0 0
        %1453 = vmatpush1.bf16.msra.mxu0 0
        %1454 = vmatprep.subr.bf16.mxu0 0
        %1455 = vmatpush1.bf16.msra.mxu0 0
        %1456 = vmatprep.subr.bf16.mxu0 0
        %1457 = vmatpush1.bf16.msra.mxu0 0
        %1458 = vmatprep.subr.bf16.mxu0 0
        %1459 = vmatpush1.bf16.msra.mxu0 0
        %1460 = vmatprep.subr.bf16.mxu0 0
        %1461 = vmatpush1.bf16.msra.mxu0 0
        %1462 = vmatprep.subr.bf16.mxu0 %v1443
        %1463 = vmatpush1.bf16.msra.mxu0 %v1440
        %1464 = vmatprep.subr.bf16.mxu0 0
        %1465 = vmatpush2.bf16.msra.mxu0 0
        %1466 = vmatprep.subr.bf16.mxu0 0
        %1467 = vmatpush2.bf16.msra.mxu0 0
        %1468 = vmatprep.subr.bf16.mxu0 0
        %1469 = vmatpush2.bf16.msra.mxu0 0
        %1470 = vmatprep.subr.bf16.mxu0 0
        %1471 = vmatpush2.bf16.msra.mxu0 0
        %1472 = vmatprep.subr.bf16.mxu0 0
        %1473 = vmatpush2.bf16.msra.mxu0 0
        %1474 = vmatprep.subr.bf16.mxu0 0
        %1475 = vmatpush2.bf16.msra.mxu0 0
        %1476 = vmatprep.subr.bf16.mxu0 0
        %1477 = vmatpush2.bf16.msra.mxu0 0
        %1478 = vmatprep.subr.bf16.mxu0 0
        %1479 = vmatpush2.bf16.msra.mxu0 0
        %1480 = vmatprep.mubr.bf16.mxu0 0
        %1481 = vmatmul.mubr.bf16.gmra.mxu0 %v1437
        %v1482 = vpop.f32.mrf.mxu0
        %v1483 = vadd.f32 0.0, %v1482
        %v1484 = vpop.f32.mrf.mxu0
        %v1485 = vadd.f32 0.0, %v1484
        %v1486 = vpop.f32.mrf.mxu0
        %v1487 = vpop.f32.mrf.mxu0
        %1488 = vdwg.mxu0
        %1489 = vmatprep.subr.bf16.mxu0 0
        %1490 = vmatpush1.bf16.msra.mxu0 0
        %1491 = vmatprep.subr.bf16.mxu0 0
        %1492 = vmatpush1.bf16.msra.mxu0 0
        %1493 = vmatprep.subr.bf16.mxu0 0
        %1494 = vmatpush1.bf16.msra.mxu0 0
        %1495 = vmatprep.subr.bf16.mxu0 0
        %1496 = vmatpush1.bf16.msra.mxu0 0
        %1497 = vmatprep.subr.bf16.mxu0 0
        %1498 = vmatpush1.bf16.msra.mxu0 0
        %1499 = vmatprep.subr.bf16.mxu0 0
        %1500 = vmatpush1.bf16.msra.mxu0 0
        %1501 = vmatprep.subr.bf16.mxu0 0
        %1502 = vmatpush1.bf16.msra.mxu0 0
        %1503 = vmatprep.subr.bf16.mxu0 0
        %1504 = vmatpush1.bf16.msra.mxu0 %v1446
        %1505 = vmatprep.subr.bf16.mxu0 0
        %1506 = vmatpush2.bf16.msra.mxu0 0
        %1507 = vmatprep.subr.bf16.mxu0 0
        %1508 = vmatpush2.bf16.msra.mxu0 0
        %1509 = vmatprep.subr.bf16.mxu0 0
        %1510 = vmatpush2.bf16.msra.mxu0 0
        %1511 = vmatprep.subr.bf16.mxu0 0
        %1512 = vmatpush2.bf16.msra.mxu0 0
        %1513 = vmatprep.subr.bf16.mxu0 0
        %1514 = vmatpush2.bf16.msra.mxu0 0
        %1515 = vmatprep.subr.bf16.mxu0 0
        %1516 = vmatpush2.bf16.msra.mxu0 0
        %1517 = vmatprep.subr.bf16.mxu0 0
        %1518 = vmatpush2.bf16.msra.mxu0 0
        %1519 = vmatprep.subr.bf16.mxu0 0
        %1520 = vmatpush2.bf16.msra.mxu0 0
        %1521 = vmatprep.mubr.bf16.mxu0 0
        %1522 = vmatmul.mubr.bf16.gmra.mxu0 %v1437
        %v1523 = vpop.f32.mrf.mxu0
        %v1524 = vadd.f32 0.0, %v1523
        %v1525 = vpop.f32.mrf.mxu0
        %v1526 = vpop.f32.mrf.mxu0
        %v1527 = vpop.f32.mrf.mxu0
        %1528 = vdwg.mxu0
        %v1529 = vadd.f32 %v1419, %v1483
        %v1530 = vadd.f32 %v1420, %v1485
        %v1531 = vadd.f32 %v1421, %v1524
        %1532 = vrot.lane.b32.xlu0 %v207, 32
        %v1533 = vpop.permute.xlu0 %1532
        %1534 = vrot.lane.b32.xlu0 %v216, 30
        %v1535 = vpop.permute.xlu0 %1534
        %1536 = vrot.lane.b32.xlu0 %v217, 30
        %v1537 = vpop.permute.xlu0 %1536
        %1538 = vrot.lane.b32.xlu0 %v218, 30
        %v1539 = vpop.permute.xlu0 %1538
        %1540 = vrot.lane.b32.xlu0 %v219, 30
        %v1541 = vpop.permute.xlu0 %1540
        %vm1542 = vcmask 244736
        %v1543 = vsel %vm1542, %v1535, %v1537
        %v1544 = vsel %vm1542, %v1537, %v1539
        %v1545 = vsel %vm1542, %v1539, %v1541
        %v1547 = vsel %vm232, %v1533, 0
        %v1550 = vsel %vm236, %v1543, 0
        %v1553 = vsel %vm236, %v1544, 0
        %v1556 = vsel %vm236, %v1545, 0
        %1558 = vmatprep.subr.bf16.mxu0 0
        %1559 = vmatpush1.bf16.msra.mxu0 0
        %1560 = vmatprep.subr.bf16.mxu0 0
        %1561 = vmatpush1.bf16.msra.mxu0 0
        %1562 = vmatprep.subr.bf16.mxu0 0
        %1563 = vmatpush1.bf16.msra.mxu0 0
        %1564 = vmatprep.subr.bf16.mxu0 0
        %1565 = vmatpush1.bf16.msra.mxu0 0
        %1566 = vmatprep.subr.bf16.mxu0 0
        %1567 = vmatpush1.bf16.msra.mxu0 0
        %1568 = vmatprep.subr.bf16.mxu0 0
        %1569 = vmatpush1.bf16.msra.mxu0 0
        %1570 = vmatprep.subr.bf16.mxu0 0
        %1571 = vmatpush1.bf16.msra.mxu0 0
        %1572 = vmatprep.subr.bf16.mxu0 %v1553
        %1573 = vmatpush1.bf16.msra.mxu0 %v1550
        %1574 = vmatprep.subr.bf16.mxu0 0
        %1575 = vmatpush2.bf16.msra.mxu0 0
        %1576 = vmatprep.subr.bf16.mxu0 0
        %1577 = vmatpush2.bf16.msra.mxu0 0
        %1578 = vmatprep.subr.bf16.mxu0 0
        %1579 = vmatpush2.bf16.msra.mxu0 0
        %1580 = vmatprep.subr.bf16.mxu0 0
        %1581 = vmatpush2.bf16.msra.mxu0 0
        %1582 = vmatprep.subr.bf16.mxu0 0
        %1583 = vmatpush2.bf16.msra.mxu0 0
        %1584 = vmatprep.subr.bf16.mxu0 0
        %1585 = vmatpush2.bf16.msra.mxu0 0
        %1586 = vmatprep.subr.bf16.mxu0 0
        %1587 = vmatpush2.bf16.msra.mxu0 0
        %1588 = vmatprep.subr.bf16.mxu0 0
        %1589 = vmatpush2.bf16.msra.mxu0 0
        %1590 = vmatprep.mubr.bf16.mxu0 0
        %1591 = vmatmul.mubr.bf16.gmra.mxu0 %v1547
        %v1592 = vpop.f32.mrf.mxu0
        %v1593 = vadd.f32 0.0, %v1592
        %v1594 = vpop.f32.mrf.mxu0
        %v1595 = vadd.f32 0.0, %v1594
        %v1596 = vpop.f32.mrf.mxu0
        %v1597 = vpop.f32.mrf.mxu0
        %1598 = vdwg.mxu0
        %1599 = vmatprep.subr.bf16.mxu0 0
        %1600 = vmatpush1.bf16.msra.mxu0 0
        %1601 = vmatprep.subr.bf16.mxu0 0
        %1602 = vmatpush1.bf16.msra.mxu0 0
        %1603 = vmatprep.subr.bf16.mxu0 0
        %1604 = vmatpush1.bf16.msra.mxu0 0
        %1605 = vmatprep.subr.bf16.mxu0 0
        %1606 = vmatpush1.bf16.msra.mxu0 0
        %1607 = vmatprep.subr.bf16.mxu0 0
        %1608 = vmatpush1.bf16.msra.mxu0 0
        %1609 = vmatprep.subr.bf16.mxu0 0
        %1610 = vmatpush1.bf16.msra.mxu0 0
        %1611 = vmatprep.subr.bf16.mxu0 0
        %1612 = vmatpush1.bf16.msra.mxu0 0
        %1613 = vmatprep.subr.bf16.mxu0 0
        %1614 = vmatpush1.bf16.msra.mxu0 %v1556
        %1615 = vmatprep.subr.bf16.mxu0 0
        %1616 = vmatpush2.bf16.msra.mxu0 0
        %1617 = vmatprep.subr.bf16.mxu0 0
        %1618 = vmatpush2.bf16.msra.mxu0 0
        %1619 = vmatprep.subr.bf16.mxu0 0
        %1620 = vmatpush2.bf16.msra.mxu0 0
        %1621 = vmatprep.subr.bf16.mxu0 0
        %1622 = vmatpush2.bf16.msra.mxu0 0
        %1623 = vmatprep.subr.bf16.mxu0 0
        %1624 = vmatpush2.bf16.msra.mxu0 0
        %1625 = vmatprep.subr.bf16.mxu0 0
        %1626 = vmatpush2.bf16.msra.mxu0 0
        %1627 = vmatprep.subr.bf16.mxu0 0
        %1628 = vmatpush2.bf16.msra.mxu0 0
        %1629 = vmatprep.subr.bf16.mxu0 0
        %1630 = vmatpush2.bf16.msra.mxu0 0
        %1631 = vmatprep.mubr.bf16.mxu0 0
        %1632 = vmatmul.mubr.bf16.gmra.mxu0 %v1547
        %v1633 = vpop.f32.mrf.mxu0
        %v1634 = vadd.f32 0.0, %v1633
        %v1635 = vpop.f32.mrf.mxu0
        %v1636 = vpop.f32.mrf.mxu0
        %v1637 = vpop.f32.mrf.mxu0
        %1638 = vdwg.mxu0
        %v1639 = vadd.f32 %v1529, %v1593
        %v1640 = vadd.f32 %v1530, %v1595
        %v1641 = vadd.f32 %v1531, %v1634
        %1642 = vrot.lane.b32.xlu0 %v207, 24
        %v1643 = vpop.permute.xlu0 %1642
        %v1645 = vsel %vm232, %v1643, 0
        %1647 = vmatprep.subr.bf16.mxu0 0
        %1648 = vmatpush1.bf16.msra.mxu0 0
        %1649 = vmatprep.subr.bf16.mxu0 0
        %1650 = vmatpush1.bf16.msra.mxu0 0
        %1651 = vmatprep.subr.bf16.mxu0 0
        %1652 = vmatpush1.bf16.msra.mxu0 0
        %1653 = vmatprep.subr.bf16.mxu0 0
        %1654 = vmatpush1.bf16.msra.mxu0 0
        %1655 = vmatprep.subr.bf16.mxu0 0
        %1656 = vmatpush1.bf16.msra.mxu0 0
        %1657 = vmatprep.subr.bf16.mxu0 0
        %1658 = vmatpush1.bf16.msra.mxu0 0
        %1659 = vmatprep.subr.bf16.mxu0 0
        %1660 = vmatpush1.bf16.msra.mxu0 0
        %1661 = vmatprep.subr.bf16.mxu0 %v673
        %1662 = vmatpush1.bf16.msra.mxu0 %v670
        %1663 = vmatprep.subr.bf16.mxu0 0
        %1664 = vmatpush2.bf16.msra.mxu0 0
        %1665 = vmatprep.subr.bf16.mxu0 0
        %1666 = vmatpush2.bf16.msra.mxu0 0
        %1667 = vmatprep.subr.bf16.mxu0 0
        %1668 = vmatpush2.bf16.msra.mxu0 0
        %1669 = vmatprep.subr.bf16.mxu0 0
        %1670 = vmatpush2.bf16.msra.mxu0 0
        %1671 = vmatprep.subr.bf16.mxu0 0
        %1672 = vmatpush2.bf16.msra.mxu0 0
        %1673 = vmatprep.subr.bf16.mxu0 0
        %1674 = vmatpush2.bf16.msra.mxu0 0
        %1675 = vmatprep.subr.bf16.mxu0 0
        %1676 = vmatpush2.bf16.msra.mxu0 0
        %1677 = vmatprep.subr.bf16.mxu0 0
        %1678 = vmatpush2.bf16.msra.mxu0 0
        %1679 = vmatprep.mubr.bf16.mxu0 0
        %1680 = vmatmul.mubr.bf16.gmra.mxu0 %v1645
        %v1681 = vpop.f32.mrf.mxu0
        %v1682 = vadd.f32 0.0, %v1681
        %v1683 = vpop.f32.mrf.mxu0
        %v1684 = vadd.f32 0.0, %v1683
        %v1685 = vpop.f32.mrf.mxu0
        %v1686 = vpop.f32.mrf.mxu0
        %1687 = vdwg.mxu0
        %1688 = vmatprep.subr.bf16.mxu0 0
        %1689 = vmatpush1.bf16.msra.mxu0 0
        %1690 = vmatprep.subr.bf16.mxu0 0
        %1691 = vmatpush1.bf16.msra.mxu0 0
        %1692 = vmatprep.subr.bf16.mxu0 0
        %1693 = vmatpush1.bf16.msra.mxu0 0
        %1694 = vmatprep.subr.bf16.mxu0 0
        %1695 = vmatpush1.bf16.msra.mxu0 0
        %1696 = vmatprep.subr.bf16.mxu0 0
        %1697 = vmatpush1.bf16.msra.mxu0 0
        %1698 = vmatprep.subr.bf16.mxu0 0
        %1699 = vmatpush1.bf16.msra.mxu0 0
        %1700 = vmatprep.subr.bf16.mxu0 0
        %1701 = vmatpush1.bf16.msra.mxu0 0
        %1702 = vmatprep.subr.bf16.mxu0 0
        %1703 = vmatpush1.bf16.msra.mxu0 %v676
        %1704 = vmatprep.subr.bf16.mxu0 0
        %1705 = vmatpush2.bf16.msra.mxu0 0
        %1706 = vmatprep.subr.bf16.mxu0 0
        %1707 = vmatpush2.bf16.msra.mxu0 0
        %1708 = vmatprep.subr.bf16.mxu0 0
        %1709 = vmatpush2.bf16.msra.mxu0 0
        %1710 = vmatprep.subr.bf16.mxu0 0
        %1711 = vmatpush2.bf16.msra.mxu0 0
        %1712 = vmatprep.subr.bf16.mxu0 0
        %1713 = vmatpush2.bf16.msra.mxu0 0
        %1714 = vmatprep.subr.bf16.mxu0 0
        %1715 = vmatpush2.bf16.msra.mxu0 0
        %1716 = vmatprep.subr.bf16.mxu0 0
        %1717 = vmatpush2.bf16.msra.mxu0 0
        %1718 = vmatprep.subr.bf16.mxu0 0
        %1719 = vmatpush2.bf16.msra.mxu0 0
        %1720 = vmatprep.mubr.bf16.mxu0 0
        %1721 = vmatmul.mubr.bf16.gmra.mxu0 %v1645
        %v1722 = vpop.f32.mrf.mxu0
        %v1723 = vadd.f32 0.0, %v1722
        %v1724 = vpop.f32.mrf.mxu0
        %v1725 = vpop.f32.mrf.mxu0
        %v1726 = vpop.f32.mrf.mxu0
        %1727 = vdwg.mxu0
        %v1728 = vadd.f32 %v1639, %v1682
        %v1729 = vadd.f32 %v1640, %v1684
        %v1730 = vadd.f32 %v1641, %v1723
        %1731 = vrot.lane.b32.xlu0 %v207, 16
        %v1732 = vpop.permute.xlu0 %1731
        %1733 = vrot.lane.b32.xlu0 %v216, 26
        %v1734 = vpop.permute.xlu0 %1733
        %1735 = vrot.lane.b32.xlu0 %v217, 26
        %v1736 = vpop.permute.xlu0 %1735
        %1737 = vrot.lane.b32.xlu0 %v218, 26
        %v1738 = vpop.permute.xlu0 %1737
        %1739 = vrot.lane.b32.xlu0 %v219, 26
        %v1740 = vpop.permute.xlu0 %1739
        %vm1741 = vcmask 211968
        %v1742 = vsel %vm1741, %v1734, %v1736
        %v1743 = vsel %vm1741, %v1736, %v1738
        %v1744 = vsel %vm1741, %v1738, %v1740
        %v1746 = vsel %vm232, %v1732, 0
        %v1749 = vsel %vm236, %v1742, 0
        %v1752 = vsel %vm236, %v1743, 0
        %v1755 = vsel %vm236, %v1744, 0
        %1757 = vmatprep.subr.bf16.mxu0 0
        %1758 = vmatpush1.bf16.msra.mxu0 0
        %1759 = vmatprep.subr.bf16.mxu0 0
        %1760 = vmatpush1.bf16.msra.mxu0 0
        %1761 = vmatprep.subr.bf16.mxu0 0
        %1762 = vmatpush1.bf16.msra.mxu0 0
        %1763 = vmatprep.subr.bf16.mxu0 0
        %1764 = vmatpush1.bf16.msra.mxu0 0
        %1765 = vmatprep.subr.bf16.mxu0 0
        %1766 = vmatpush1.bf16.msra.mxu0 0
        %1767 = vmatprep.subr.bf16.mxu0 0
        %1768 = vmatpush1.bf16.msra.mxu0 0
        %1769 = vmatprep.subr.bf16.mxu0 0
        %1770 = vmatpush1.bf16.msra.mxu0 0
        %1771 = vmatprep.subr.bf16.mxu0 %v1752
        %1772 = vmatpush1.bf16.msra.mxu0 %v1749
        %1773 = vmatprep.subr.bf16.mxu0 0
        %1774 = vmatpush2.bf16.msra.mxu0 0
        %1775 = vmatprep.subr.bf16.mxu0 0
        %1776 = vmatpush2.bf16.msra.mxu0 0
        %1777 = vmatprep.subr.bf16.mxu0 0
        %1778 = vmatpush2.bf16.msra.mxu0 0
        %1779 = vmatprep.subr.bf16.mxu0 0
        %1780 = vmatpush2.bf16.msra.mxu0 0
        %1781 = vmatprep.subr.bf16.mxu0 0
        %1782 = vmatpush2.bf16.msra.mxu0 0
        %1783 = vmatprep.subr.bf16.mxu0 0
        %1784 = vmatpush2.bf16.msra.mxu0 0
        %1785 = vmatprep.subr.bf16.mxu0 0
        %1786 = vmatpush2.bf16.msra.mxu0 0
        %1787 = vmatprep.subr.bf16.mxu0 0
        %1788 = vmatpush2.bf16.msra.mxu0 0
        %1789 = vmatprep.mubr.bf16.mxu0 0
        %1790 = vmatmul.mubr.bf16.gmra.mxu0 %v1746
        %v1791 = vpop.f32.mrf.mxu0
        %v1792 = vadd.f32 0.0, %v1791
        %v1793 = vpop.f32.mrf.mxu0
        %v1794 = vadd.f32 0.0, %v1793
        %v1795 = vpop.f32.mrf.mxu0
        %v1796 = vpop.f32.mrf.mxu0
        %1797 = vdwg.mxu0
        %1798 = vmatprep.subr.bf16.mxu0 0
        %1799 = vmatpush1.bf16.msra.mxu0 0
        %1800 = vmatprep.subr.bf16.mxu0 0
        %1801 = vmatpush1.bf16.msra.mxu0 0
        %1802 = vmatprep.subr.bf16.mxu0 0
        %1803 = vmatpush1.bf16.msra.mxu0 0
        %1804 = vmatprep.subr.bf16.mxu0 0
        %1805 = vmatpush1.bf16.msra.mxu0 0
        %1806 = vmatprep.subr.bf16.mxu0 0
        %1807 = vmatpush1.bf16.msra.mxu0 0
        %1808 = vmatprep.subr.bf16.mxu0 0
        %1809 = vmatpush1.bf16.msra.mxu0 0
        %1810 = vmatprep.subr.bf16.mxu0 0
        %1811 = vmatpush1.bf16.msra.mxu0 0
        %1812 = vmatprep.subr.bf16.mxu0 0
        %1813 = vmatpush1.bf16.msra.mxu0 %v1755
        %1814 = vmatprep.subr.bf16.mxu0 0
        %1815 = vmatpush2.bf16.msra.mxu0 0
        %1816 = vmatprep.subr.bf16.mxu0 0
        %1817 = vmatpush2.bf16.msra.mxu0 0
        %1818 = vmatprep.subr.bf16.mxu0 0
        %1819 = vmatpush2.bf16.msra.mxu0 0
        %1820 = vmatprep.subr.bf16.mxu0 0
        %1821 = vmatpush2.bf16.msra.mxu0 0
        %1822 = vmatprep.subr.bf16.mxu0 0
        %1823 = vmatpush2.bf16.msra.mxu0 0
        %1824 = vmatprep.subr.bf16.mxu0 0
        %1825 = vmatpush2.bf16.msra.mxu0 0
        %1826 = vmatprep.subr.bf16.mxu0 0
        %1827 = vmatpush2.bf16.msra.mxu0 0
        %1828 = vmatprep.subr.bf16.mxu0 0
        %1829 = vmatpush2.bf16.msra.mxu0 0
        %1830 = vmatprep.mubr.bf16.mxu0 0
        %1831 = vmatmul.mubr.bf16.gmra.mxu0 %v1746
        %v1832 = vpop.f32.mrf.mxu0
        %v1833 = vadd.f32 0.0, %v1832
        %v1834 = vpop.f32.mrf.mxu0
        %v1835 = vpop.f32.mrf.mxu0
        %v1836 = vpop.f32.mrf.mxu0
        %1837 = vdwg.mxu0
        %v1838 = vadd.f32 %v1728, %v1792
        %v1839 = vadd.f32 %v1729, %v1794
        %v1840 = vadd.f32 %v1730, %v1833
        %v1841 = vld [vmem:[%s173 + $0x4] sm:$0xff]
        %v1842 = vld [vmem:[%s173 + $0xc] sm:$0xff]
        %1843 = vrot.lane.b32.xlu0 %v207, 8
        %v1844 = vpop.permute.xlu0 %1843
        %v1847 = vunpack.c.l.b16 %v1841
        %v1848 = vunpack.c.h.b16 %v1841
        %v1849 = vunpack.c.l.b16 %v1842
        %v1850 = vunpack.c.h.b16 %v1842
        %v1851 = vpack.c.b16 %v1847, %v1847
        %v1852 = vpack.c.b16 %v1848, %v1848
        %v1853 = vpack.c.b16 %v1849, %v1849
        %v1854 = vpack.c.b16 %v1850, %v1850
        %1855 = vrot.lane.b32.xlu0 %v1851, 110
        %v1856 = vpop.permute.xlu0 %1855
        %1857 = vrot.lane.b32.xlu0 %v1852, 110
        %v1858 = vpop.permute.xlu0 %1857
        %1859 = vrot.lane.b32.xlu0 %v1853, 110
        %v1860 = vpop.permute.xlu0 %1859
        %1861 = vrot.lane.b32.xlu0 %v1854, 110
        %v1862 = vpop.permute.xlu0 %1861
        %vm1863 = vcmask 900096
        %v1864 = vsel %vm1863, %v1856, %v1858
        %v1865 = vsel %vm1863, %v1858, %v1860
        %v1866 = vsel %vm1863, %v1860, %v1862
        %v1868 = vsel %vm232, %v1844, 0
        %v1871 = vsel %vm236, %v1864, 0
        %v1874 = vsel %vm236, %v1865, 0
        %v1877 = vsel %vm236, %v1866, 0
        %1879 = vmatprep.subr.bf16.mxu0 0
        %1880 = vmatpush1.bf16.msra.mxu0 0
        %1881 = vmatprep.subr.bf16.mxu0 0
        %1882 = vmatpush1.bf16.msra.mxu0 0
        %1883 = vmatprep.subr.bf16.mxu0 0
        %1884 = vmatpush1.bf16.msra.mxu0 0
        %1885 = vmatprep.subr.bf16.mxu0 0
        %1886 = vmatpush1.bf16.msra.mxu0 0
        %1887 = vmatprep.subr.bf16.mxu0 0
        %1888 = vmatpush1.bf16.msra.mxu0 0
        %1889 = vmatprep.subr.bf16.mxu0 0
        %1890 = vmatpush1.bf16.msra.mxu0 0
        %1891 = vmatprep.subr.bf16.mxu0 0
        %1892 = vmatpush1.bf16.msra.mxu0 0
        %1893 = vmatprep.subr.bf16.mxu0 %v1874
        %1894 = vmatpush1.bf16.msra.mxu0 %v1871
        %1895 = vmatprep.subr.bf16.mxu0 0
        %1896 = vmatpush2.bf16.msra.mxu0 0
        %1897 = vmatprep.subr.bf16.mxu0 0
        %1898 = vmatpush2.bf16.msra.mxu0 0
        %1899 = vmatprep.subr.bf16.mxu0 0
        %1900 = vmatpush2.bf16.msra.mxu0 0
        %1901 = vmatprep.subr.bf16.mxu0 0
        %1902 = vmatpush2.bf16.msra.mxu0 0
        %1903 = vmatprep.subr.bf16.mxu0 0
        %1904 = vmatpush2.bf16.msra.mxu0 0
        %1905 = vmatprep.subr.bf16.mxu0 0
        %1906 = vmatpush2.bf16.msra.mxu0 0
        %1907 = vmatprep.subr.bf16.mxu0 0
        %1908 = vmatpush2.bf16.msra.mxu0 0
        %1909 = vmatprep.subr.bf16.mxu0 0
        %1910 = vmatpush2.bf16.msra.mxu0 0
        %1911 = vmatprep.mubr.bf16.mxu0 0
        %1912 = vmatmul.mubr.bf16.gmra.mxu0 %v1868
        %v1913 = vpop.f32.mrf.mxu0
        %v1914 = vadd.f32 0.0, %v1913
        %v1915 = vpop.f32.mrf.mxu0
        %v1916 = vadd.f32 0.0, %v1915
        %v1917 = vpop.f32.mrf.mxu0
        %v1918 = vpop.f32.mrf.mxu0
        %1919 = vdwg.mxu0
        %1920 = vmatprep.subr.bf16.mxu0 0
        %1921 = vmatpush1.bf16.msra.mxu0 0
        %1922 = vmatprep.subr.bf16.mxu0 0
        %1923 = vmatpush1.bf16.msra.mxu0 0
        %1924 = vmatprep.subr.bf16.mxu0 0
        %1925 = vmatpush1.bf16.msra.mxu0 0
        %1926 = vmatprep.subr.bf16.mxu0 0
        %1927 = vmatpush1.bf16.msra.mxu0 0
        %1928 = vmatprep.subr.bf16.mxu0 0
        %1929 = vmatpush1.bf16.msra.mxu0 0
        %1930 = vmatprep.subr.bf16.mxu0 0
        %1931 = vmatpush1.bf16.msra.mxu0 0
        %1932 = vmatprep.subr.bf16.mxu0 0
        %1933 = vmatpush1.bf16.msra.mxu0 0
        %1934 = vmatprep.subr.bf16.mxu0 0
        %1935 = vmatpush1.bf16.msra.mxu0 %v1877
        %1936 = vmatprep.subr.bf16.mxu0 0
        %1937 = vmatpush2.bf16.msra.mxu0 0
        %1938 = vmatprep.subr.bf16.mxu0 0
        %1939 = vmatpush2.bf16.msra.mxu0 0
        %1940 = vmatprep.subr.bf16.mxu0 0
        %1941 = vmatpush2.bf16.msra.mxu0 0
        %1942 = vmatprep.subr.bf16.mxu0 0
        %1943 = vmatpush2.bf16.msra.mxu0 0
        %1944 = vmatprep.subr.bf16.mxu0 0
        %1945 = vmatpush2.bf16.msra.mxu0 0
        %1946 = vmatprep.subr.bf16.mxu0 0
        %1947 = vmatpush2.bf16.msra.mxu0 0
        %1948 = vmatprep.subr.bf16.mxu0 0
        %1949 = vmatpush2.bf16.msra.mxu0 0
        %1950 = vmatprep.subr.bf16.mxu0 0
        %1951 = vmatpush2.bf16.msra.mxu0 0
        %1952 = vmatprep.mubr.bf16.mxu0 0
        %1953 = vmatmul.mubr.bf16.gmra.mxu0 %v1868
        %v1954 = vpop.f32.mrf.mxu0
        %v1955 = vadd.f32 0.0, %v1954
        %v1956 = vpop.f32.mrf.mxu0
        %v1957 = vpop.f32.mrf.mxu0
        %v1958 = vpop.f32.mrf.mxu0
        %1959 = vdwg.mxu0
        %v1960 = vadd.f32 %v1838, %v1914
        %v1961 = vadd.f32 %v1839, %v1916
        %v1962 = vadd.f32 %v1840, %v1955
        %v1963 = vld [vmem:[#allocation5 + $0x4] sm:$0xf]
        %1964 = vrot.lane.b32.xlu0 %v1851, 108
        %v1965 = vpop.permute.xlu0 %1964
        %1966 = vrot.lane.b32.xlu0 %v1852, 108
        %v1967 = vpop.permute.xlu0 %1966
        %1968 = vrot.lane.b32.xlu0 %v1853, 108
        %v1969 = vpop.permute.xlu0 %1968
        %1970 = vrot.lane.b32.xlu0 %v1854, 108
        %v1971 = vpop.permute.xlu0 %1970
        %vm1972 = vcmask 883712
        %v1973 = vsel %vm1972, %v1965, %v1967
        %v1974 = vsel %vm1972, %v1967, %v1969
        %v1975 = vsel %vm1972, %v1969, %v1971
        %v1977 = vsel %vm232, %v1963, 0
        %v1980 = vsel %vm236, %v1973, 0
        %v1983 = vsel %vm236, %v1974, 0
        %v1986 = vsel %vm236, %v1975, 0
        %1988 = vmatprep.subr.bf16.mxu0 0
        %1989 = vmatpush1.bf16.msra.mxu0 0
        %1990 = vmatprep.subr.bf16.mxu0 0
        %1991 = vmatpush1.bf16.msra.mxu0 0
        %1992 = vmatprep.subr.bf16.mxu0 0
        %1993 = vmatpush1.bf16.msra.mxu0 0
        %1994 = vmatprep.subr.bf16.mxu0 0
        %1995 = vmatpush1.bf16.msra.mxu0 0
        %1996 = vmatprep.subr.bf16.mxu0 0
        %1997 = vmatpush1.bf16.msra.mxu0 0
        %1998 = vmatprep.subr.bf16.mxu0 0
        %1999 = vmatpush1.bf16.msra.mxu0 0
        %2000 = vmatprep.subr.bf16.mxu0 0
        %2001 = vmatpush1.bf16.msra.mxu0 0
        %2002 = vmatprep.subr.bf16.mxu0 %v1983
        %2003 = vmatpush1.bf16.msra.mxu0 %v1980
        %2004 = vmatprep.subr.bf16.mxu0 0
        %2005 = vmatpush2.bf16.msra.mxu0 0
        %2006 = vmatprep.subr.bf16.mxu0 0
        %2007 = vmatpush2.bf16.msra.mxu0 0
        %2008 = vmatprep.subr.bf16.mxu0 0
        %2009 = vmatpush2.bf16.msra.mxu0 0
        %2010 = vmatprep.subr.bf16.mxu0 0
        %2011 = vmatpush2.bf16.msra.mxu0 0
        %2012 = vmatprep.subr.bf16.mxu0 0
        %2013 = vmatpush2.bf16.msra.mxu0 0
        %2014 = vmatprep.subr.bf16.mxu0 0
        %2015 = vmatpush2.bf16.msra.mxu0 0
        %2016 = vmatprep.subr.bf16.mxu0 0
        %2017 = vmatpush2.bf16.msra.mxu0 0
        %2018 = vmatprep.subr.bf16.mxu0 0
        %2019 = vmatpush2.bf16.msra.mxu0 0
        %2020 = vmatprep.mubr.bf16.mxu0 0
        %2021 = vmatmul.mubr.bf16.gmra.mxu0 %v1977
        %v2022 = vpop.f32.mrf.mxu0
        %v2023 = vadd.f32 0.0, %v2022
        %v2024 = vpop.f32.mrf.mxu0
        %v2025 = vadd.f32 0.0, %v2024
        %v2026 = vpop.f32.mrf.mxu0
        %v2027 = vpop.f32.mrf.mxu0
        %2028 = vdwg.mxu0
        %2029 = vmatprep.subr.bf16.mxu0 0
        %2030 = vmatpush1.bf16.msra.mxu0 0
        %2031 = vmatprep.subr.bf16.mxu0 0
        %2032 = vmatpush1.bf16.msra.mxu0 0
        %2033 = vmatprep.subr.bf16.mxu0 0
        %2034 = vmatpush1.bf16.msra.mxu0 0
        %2035 = vmatprep.subr.bf16.mxu0 0
        %2036 = vmatpush1.bf16.msra.mxu0 0
        %2037 = vmatprep.subr.bf16.mxu0 0
        %2038 = vmatpush1.bf16.msra.mxu0 0
        %2039 = vmatprep.subr.bf16.mxu0 0
        %2040 = vmatpush1.bf16.msra.mxu0 0
        %2041 = vmatprep.subr.bf16.mxu0 0
        %2042 = vmatpush1.bf16.msra.mxu0 0
        %2043 = vmatprep.subr.bf16.mxu0 0
        %2044 = vmatpush1.bf16.msra.mxu0 %v1986
        %2045 = vmatprep.subr.bf16.mxu0 0
        %2046 = vmatpush2.bf16.msra.mxu0 0
        %2047 = vmatprep.subr.bf16.mxu0 0
        %2048 = vmatpush2.bf16.msra.mxu0 0
        %2049 = vmatprep.subr.bf16.mxu0 0
        %2050 = vmatpush2.bf16.msra.mxu0 0
        %2051 = vmatprep.subr.bf16.mxu0 0
        %2052 = vmatpush2.bf16.msra.mxu0 0
        %2053 = vmatprep.subr.bf16.mxu0 0
        %2054 = vmatpush2.bf16.msra.mxu0 0
        %2055 = vmatprep.subr.bf16.mxu0 0
        %2056 = vmatpush2.bf16.msra.mxu0 0
        %2057 = vmatprep.subr.bf16.mxu0 0
        %2058 = vmatpush2.bf16.msra.mxu0 0
        %2059 = vmatprep.subr.bf16.mxu0 0
        %2060 = vmatpush2.bf16.msra.mxu0 0
        %2061 = vmatprep.mubr.bf16.mxu0 0
        %2062 = vmatmul.mubr.bf16.gmra.mxu0 %v1977
        %v2063 = vpop.f32.mrf.mxu0
        %v2064 = vadd.f32 0.0, %v2063
        %v2065 = vpop.f32.mrf.mxu0
        %v2066 = vpop.f32.mrf.mxu0
        %v2067 = vpop.f32.mrf.mxu0
        %2068 = vdwg.mxu0
        %v2069 = vadd.f32 %v1960, %v2023
        %v2070 = vadd.f32 %v1961, %v2025
        %v2071 = vadd.f32 %v1962, %v2064
        %v2073 = vunpack.c.l.b16 %v1963
        %v2074 = vpack.c.b16 %v2073, %v2073
        %2075 = vrot.lane.b32.xlu0 %v2074, 120
        %v2076 = vpop.permute.xlu0 %2075
        %2077 = vrot.lane.b32.xlu0 %v1851, 106
        %v2078 = vpop.permute.xlu0 %2077
        %2079 = vrot.lane.b32.xlu0 %v1852, 106
        %v2080 = vpop.permute.xlu0 %2079
        %2081 = vrot.lane.b32.xlu0 %v1853, 106
        %v2082 = vpop.permute.xlu0 %2081
        %2083 = vrot.lane.b32.xlu0 %v1854, 106
        %v2084 = vpop.permute.xlu0 %2083
        %vm2085 = vcmask 867328
        %v2086 = vsel %vm2085, %v2078, %v2080
        %v2087 = vsel %vm2085, %v2080, %v2082
        %v2088 = vsel %vm2085, %v2082, %v2084
        %v2090 = vsel %vm232, %v2076, 0
        %v2093 = vsel %vm236, %v2086, 0
        %v2096 = vsel %vm236, %v2087, 0
        %v2099 = vsel %vm236, %v2088, 0
        %2101 = vmatprep.subr.bf16.mxu0 0
        %2102 = vmatpush1.bf16.msra.mxu0 0
        %2103 = vmatprep.subr.bf16.mxu0 0
        %2104 = vmatpush1.bf16.msra.mxu0 0
        %2105 = vmatprep.subr.bf16.mxu0 0
        %2106 = vmatpush1.bf16.msra.mxu0 0
        %2107 = vmatprep.subr.bf16.mxu0 0
        %2108 = vmatpush1.bf16.msra.mxu0 0
        %2109 = vmatprep.subr.bf16.mxu0 0
        %2110 = vmatpush1.bf16.msra.mxu0 0
        %2111 = vmatprep.subr.bf16.mxu0 0
        %2112 = vmatpush1.bf16.msra.mxu0 0
        %2113 = vmatprep.subr.bf16.mxu0 0
        %2114 = vmatpush1.bf16.msra.mxu0 0
        %2115 = vmatprep.subr.bf16.mxu0 %v2096
        %2116 = vmatpush1.bf16.msra.mxu0 %v2093
        %2117 = vmatprep.subr.bf16.mxu0 0
        %2118 = vmatpush2.bf16.msra.mxu0 0
        %2119 = vmatprep.subr.bf16.mxu0 0
        %2120 = vmatpush2.bf16.msra.mxu0 0
        %2121 = vmatprep.subr.bf16.mxu0 0
        %2122 = vmatpush2.bf16.msra.mxu0 0
        %2123 = vmatprep.subr.bf16.mxu0 0
        %2124 = vmatpush2.bf16.msra.mxu0 0
        %2125 = vmatprep.subr.bf16.mxu0 0
        %2126 = vmatpush2.bf16.msra.mxu0 0
        %2127 = vmatprep.subr.bf16.mxu0 0
        %2128 = vmatpush2.bf16.msra.mxu0 0
        %2129 = vmatprep.subr.bf16.mxu0 0
        %2130 = vmatpush2.bf16.msra.mxu0 0
        %2131 = vmatprep.subr.bf16.mxu0 0
        %2132 = vmatpush2.bf16.msra.mxu0 0
        %2133 = vmatprep.mubr.bf16.mxu0 0
        %2134 = vmatmul.mubr.bf16.gmra.mxu0 %v2090
        %v2135 = vpop.f32.mrf.mxu0
        %v2136 = vadd.f32 0.0, %v2135
        %v2137 = vpop.f32.mrf.mxu0
        %v2138 = vadd.f32 0.0, %v2137
        %v2139 = vpop.f32.mrf.mxu0
        %v2140 = vpop.f32.mrf.mxu0
        %2141 = vdwg.mxu0
        %2142 = vmatprep.subr.bf16.mxu0 0
        %2143 = vmatpush1.bf16.msra.mxu0 0
        %2144 = vmatprep.subr.bf16.mxu0 0
        %2145 = vmatpush1.bf16.msra.mxu0 0
        %2146 = vmatprep.subr.bf16.mxu0 0
        %2147 = vmatpush1.bf16.msra.mxu0 0
        %2148 = vmatprep.subr.bf16.mxu0 0
        %2149 = vmatpush1.bf16.msra.mxu0 0
        %2150 = vmatprep.subr.bf16.mxu0 0
        %2151 = vmatpush1.bf16.msra.mxu0 0
        %2152 = vmatprep.subr.bf16.mxu0 0
        %2153 = vmatpush1.bf16.msra.mxu0 0
        %2154 = vmatprep.subr.bf16.mxu0 0
        %2155 = vmatpush1.bf16.msra.mxu0 0
        %2156 = vmatprep.subr.bf16.mxu0 0
        %2157 = vmatpush1.bf16.msra.mxu0 %v2099
        %2158 = vmatprep.subr.bf16.mxu0 0
        %2159 = vmatpush2.bf16.msra.mxu0 0
        %2160 = vmatprep.subr.bf16.mxu0 0
        %2161 = vmatpush2.bf16.msra.mxu0 0
        %2162 = vmatprep.subr.bf16.mxu0 0
        %2163 = vmatpush2.bf16.msra.mxu0 0
        %2164 = vmatprep.subr.bf16.mxu0 0
        %2165 = vmatpush2.bf16.msra.mxu0 0
        %2166 = vmatprep.subr.bf16.mxu0 0
        %2167 = vmatpush2.bf16.msra.mxu0 0
        %2168 = vmatprep.subr.bf16.mxu0 0
        %2169 = vmatpush2.bf16.msra.mxu0 0
        %2170 = vmatprep.subr.bf16.mxu0 0
        %2171 = vmatpush2.bf16.msra.mxu0 0
        %2172 = vmatprep.subr.bf16.mxu0 0
        %2173 = vmatpush2.bf16.msra.mxu0 0
        %2174 = vmatprep.mubr.bf16.mxu0 0
        %2175 = vmatmul.mubr.bf16.gmra.mxu0 %v2090
        %v2176 = vpop.f32.mrf.mxu0
        %v2177 = vadd.f32 0.0, %v2176
        %v2178 = vpop.f32.mrf.mxu0
        %v2179 = vpop.f32.mrf.mxu0
        %v2180 = vpop.f32.mrf.mxu0
        %2181 = vdwg.mxu0
        %v2182 = vadd.f32 %v2069, %v2136
        %v2183 = vadd.f32 %v2070, %v2138
        %v2184 = vadd.f32 %v2071, %v2177
        %2185 = vrot.lane.b32.xlu0 %v2074, 112
        %v2186 = vpop.permute.xlu0 %2185
        %2187 = vrot.lane.b32.xlu0 %v216, 103
        %v2188 = vpop.permute.xlu0 %2187
        %2189 = vrot.lane.b32.xlu0 %v217, 103
        %v2190 = vpop.permute.xlu0 %2189
        %2191 = vrot.lane.b32.xlu0 %v218, 103
        %v2192 = vpop.permute.xlu0 %2191
        %2193 = vrot.lane.b32.xlu0 %v219, 103
        %v2194 = vpop.permute.xlu0 %2193
        %vm2195 = vcmask 842752
        %v2196 = vsel %vm2195, %v2188, %v2190
        %v2197 = vsel %vm2195, %v2190, %v2192
        %v2198 = vsel %vm2195, %v2192, %v2194
        %v2200 = vsel %vm232, %v2186, 0
        %v2203 = vsel %vm236, %v2196, 0
        %v2206 = vsel %vm236, %v2197, 0
        %v2209 = vsel %vm236, %v2198, 0
        %2211 = vmatprep.subr.bf16.mxu0 0
        %2212 = vmatpush1.bf16.msra.mxu0 0
        %2213 = vmatprep.subr.bf16.mxu0 0
        %2214 = vmatpush1.bf16.msra.mxu0 0
        %2215 = vmatprep.subr.bf16.mxu0 0
        %2216 = vmatpush1.bf16.msra.mxu0 0
        %2217 = vmatprep.subr.bf16.mxu0 0
        %2218 = vmatpush1.bf16.msra.mxu0 0
        %2219 = vmatprep.subr.bf16.mxu0 0
        %2220 = vmatpush1.bf16.msra.mxu0 0
        %2221 = vmatprep.subr.bf16.mxu0 0
        %2222 = vmatpush1.bf16.msra.mxu0 0
        %2223 = vmatprep.subr.bf16.mxu0 0
        %2224 = vmatpush1.bf16.msra.mxu0 0
        %2225 = vmatprep.subr.bf16.mxu0 %v2206
        %2226 = vmatpush1.bf16.msra.mxu0 %v2203
        %2227 = vmatprep.subr.bf16.mxu0 0
        %2228 = vmatpush2.bf16.msra.mxu0 0
        %2229 = vmatprep.subr.bf16.mxu0 0
        %2230 = vmatpush2.bf16.msra.mxu0 0
        %2231 = vmatprep.subr.bf16.mxu0 0
        %2232 = vmatpush2.bf16.msra.mxu0 0
        %2233 = vmatprep.subr.bf16.mxu0 0
        %2234 = vmatpush2.bf16.msra.mxu0 0
        %2235 = vmatprep.subr.bf16.mxu0 0
        %2236 = vmatpush2.bf16.msra.mxu0 0
        %2237 = vmatprep.subr.bf16.mxu0 0
        %2238 = vmatpush2.bf16.msra.mxu0 0
        %2239 = vmatprep.subr.bf16.mxu0 0
        %2240 = vmatpush2.bf16.msra.mxu0 0
        %2241 = vmatprep.subr.bf16.mxu0 0
        %2242 = vmatpush2.bf16.msra.mxu0 0
        %2243 = vmatprep.mubr.bf16.mxu0 0
        %2244 = vmatmul.mubr.bf16.gmra.mxu0 %v2200
        %v2245 = vpop.f32.mrf.mxu0
        %v2246 = vadd.f32 0.0, %v2245
        %v2247 = vpop.f32.mrf.mxu0
        %v2248 = vadd.f32 0.0, %v2247
        %v2249 = vpop.f32.mrf.mxu0
        %v2250 = vpop.f32.mrf.mxu0
        %2251 = vdwg.mxu0
        %2252 = vmatprep.subr.bf16.mxu0 0
        %2253 = vmatpush1.bf16.msra.mxu0 0
        %2254 = vmatprep.subr.bf16.mxu0 0
        %2255 = vmatpush1.bf16.msra.mxu0 0
        %2256 = vmatprep.subr.bf16.mxu0 0
        %2257 = vmatpush1.bf16.msra.mxu0 0
        %2258 = vmatprep.subr.bf16.mxu0 0
        %2259 = vmatpush1.bf16.msra.mxu0 0
        %2260 = vmatprep.subr.bf16.mxu0 0
        %2261 = vmatpush1.bf16.msra.mxu0 0
        %2262 = vmatprep.subr.bf16.mxu0 0
        %2263 = vmatpush1.bf16.msra.mxu0 0
        %2264 = vmatprep.subr.bf16.mxu0 0
        %2265 = vmatpush1.bf16.msra.mxu0 0
        %2266 = vmatprep.subr.bf16.mxu0 0
        %2267 = vmatpush1.bf16.msra.mxu0 %v2209
        %2268 = vmatprep.subr.bf16.mxu0 0
        %2269 = vmatpush2.bf16.msra.mxu0 0
        %2270 = vmatprep.subr.bf16.mxu0 0
        %2271 = vmatpush2.bf16.msra.mxu0 0
        %2272 = vmatprep.subr.bf16.mxu0 0
        %2273 = vmatpush2.bf16.msra.mxu0 0
        %2274 = vmatprep.subr.bf16.mxu0 0
        %2275 = vmatpush2.bf16.msra.mxu0 0
        %2276 = vmatprep.subr.bf16.mxu0 0
        %2277 = vmatpush2.bf16.msra.mxu0 0
        %2278 = vmatprep.subr.bf16.mxu0 0
        %2279 = vmatpush2.bf16.msra.mxu0 0
        %2280 = vmatprep.subr.bf16.mxu0 0
        %2281 = vmatpush2.bf16.msra.mxu0 0
        %2282 = vmatprep.subr.bf16.mxu0 0
        %2283 = vmatpush2.bf16.msra.mxu0 0
        %2284 = vmatprep.mubr.bf16.mxu0 0
        %2285 = vmatmul.mubr.bf16.gmra.mxu0 %v2200
        %v2286 = vpop.f32.mrf.mxu0
        %v2287 = vadd.f32 0.0, %v2286
        %v2288 = vpop.f32.mrf.mxu0
        %v2289 = vpop.f32.mrf.mxu0
        %v2290 = vpop.f32.mrf.mxu0
        %2291 = vdwg.mxu0
        %v2292 = vadd.f32 %v2182, %v2246
        %v2293 = vadd.f32 %v2183, %v2248
        %v2294 = vadd.f32 %v2184, %v2287
        %2295 = vrot.lane.b32.xlu0 %v2074, 104
        %v2296 = vpop.permute.xlu0 %2295
        %2297 = vrot.lane.b32.xlu0 %v216, 100
        %v2298 = vpop.permute.xlu0 %2297
        %2299 = vrot.lane.b32.xlu0 %v217, 100
        %v2300 = vpop.permute.xlu0 %2299
        %2301 = vrot.lane.b32.xlu0 %v218, 100
        %v2302 = vpop.permute.xlu0 %2301
        %2303 = vrot.lane.b32.xlu0 %v219, 100
        %v2304 = vpop.permute.xlu0 %2303
        %vm2305 = vcmask 818176
        %v2306 = vsel %vm2305, %v2298, %v2300
        %v2307 = vsel %vm2305, %v2300, %v2302
        %v2308 = vsel %vm2305, %v2302, %v2304
        %v2310 = vsel %vm232, %v2296, 0
        %v2313 = vsel %vm236, %v2306, 0
        %v2316 = vsel %vm236, %v2307, 0
        %v2319 = vsel %vm236, %v2308, 0
        %2321 = vmatprep.subr.bf16.mxu0 0
        %2322 = vmatpush1.bf16.msra.mxu0 0
        %2323 = vmatprep.subr.bf16.mxu0 0
        %2324 = vmatpush1.bf16.msra.mxu0 0
        %2325 = vmatprep.subr.bf16.mxu0 0
        %2326 = vmatpush1.bf16.msra.mxu0 0
        %2327 = vmatprep.subr.bf16.mxu0 0
        %2328 = vmatpush1.bf16.msra.mxu0 0
        %2329 = vmatprep.subr.bf16.mxu0 0
        %2330 = vmatpush1.bf16.msra.mxu0 0
        %2331 = vmatprep.subr.bf16.mxu0 0
        %2332 = vmatpush1.bf16.msra.mxu0 0
        %2333 = vmatprep.subr.bf16.mxu0 0
        %2334 = vmatpush1.bf16.msra.mxu0 0
        %2335 = vmatprep.subr.bf16.mxu0 %v2316
        %2336 = vmatpush1.bf16.msra.mxu0 %v2313
        %2337 = vmatprep.subr.bf16.mxu0 0
        %2338 = vmatpush2.bf16.msra.mxu0 0
        %2339 = vmatprep.subr.bf16.mxu0 0
        %2340 = vmatpush2.bf16.msra.mxu0 0
        %2341 = vmatprep.subr.bf16.mxu0 0
        %2342 = vmatpush2.bf16.msra.mxu0 0
        %2343 = vmatprep.subr.bf16.mxu0 0
        %2344 = vmatpush2.bf16.msra.mxu0 0
        %2345 = vmatprep.subr.bf16.mxu0 0
        %2346 = vmatpush2.bf16.msra.mxu0 0
        %2347 = vmatprep.subr.bf16.mxu0 0
        %2348 = vmatpush2.bf16.msra.mxu0 0
        %2349 = vmatprep.subr.bf16.mxu0 0
        %2350 = vmatpush2.bf16.msra.mxu0 0
        %2351 = vmatprep.subr.bf16.mxu0 0
        %2352 = vmatpush2.bf16.msra.mxu0 0
        %2353 = vmatprep.mubr.bf16.mxu0 0
        %2354 = vmatmul.mubr.bf16.gmra.mxu0 %v2310
        %v2355 = vpop.f32.mrf.mxu0
        %v2356 = vadd.f32 0.0, %v2355
        %v2357 = vpop.f32.mrf.mxu0
        %v2358 = vadd.f32 0.0, %v2357
        %v2359 = vpop.f32.mrf.mxu0
        %v2360 = vpop.f32.mrf.mxu0
        %2361 = vdwg.mxu0
        %2362 = vmatprep.subr.bf16.mxu0 0
        %2363 = vmatpush1.bf16.msra.mxu0 0
        %2364 = vmatprep.subr.bf16.mxu0 0
        %2365 = vmatpush1.bf16.msra.mxu0 0
        %2366 = vmatprep.subr.bf16.mxu0 0
        %2367 = vmatpush1.bf16.msra.mxu0 0
        %2368 = vmatprep.subr.bf16.mxu0 0
        %2369 = vmatpush1.bf16.msra.mxu0 0
        %2370 = vmatprep.subr.bf16.mxu0 0
        %2371 = vmatpush1.bf16.msra.mxu0 0
        %2372 = vmatprep.subr.bf16.mxu0 0
        %2373 = vmatpush1.bf16.msra.mxu0 0
        %2374 = vmatprep.subr.bf16.mxu0 0
        %2375 = vmatpush1.bf16.msra.mxu0 0
        %2376 = vmatprep.subr.bf16.mxu0 0
        %2377 = vmatpush1.bf16.msra.mxu0 %v2319
        %2378 = vmatprep.subr.bf16.mxu0 0
        %2379 = vmatpush2.bf16.msra.mxu0 0
        %2380 = vmatprep.subr.bf16.mxu0 0
        %2381 = vmatpush2.bf16.msra.mxu0 0
        %2382 = vmatprep.subr.bf16.mxu0 0
        %2383 = vmatpush2.bf16.msra.mxu0 0
        %2384 = vmatprep.subr.bf16.mxu0 0
        %2385 = vmatpush2.bf16.msra.mxu0 0
        %2386 = vmatprep.subr.bf16.mxu0 0
        %2387 = vmatpush2.bf16.msra.mxu0 0
        %2388 = vmatprep.subr.bf16.mxu0 0
        %2389 = vmatpush2.bf16.msra.mxu0 0
        %2390 = vmatprep.subr.bf16.mxu0 0
        %2391 = vmatpush2.bf16.msra.mxu0 0
        %2392 = vmatprep.subr.bf16.mxu0 0
        %2393 = vmatpush2.bf16.msra.mxu0 0
        %2394 = vmatprep.mubr.bf16.mxu0 0
        %2395 = vmatmul.mubr.bf16.gmra.mxu0 %v2310
        %v2396 = vpop.f32.mrf.mxu0
        %v2397 = vadd.f32 0.0, %v2396
        %v2398 = vpop.f32.mrf.mxu0
        %v2399 = vpop.f32.mrf.mxu0
        %v2400 = vpop.f32.mrf.mxu0
        %2401 = vdwg.mxu0
        %v2402 = vadd.f32 %v2292, %v2356
        %v2403 = vadd.f32 %v2293, %v2358
        %v2404 = vadd.f32 %v2294, %v2397
        %2405 = vrot.lane.b32.xlu0 %v2074, 96
        %v2406 = vpop.permute.xlu0 %2405
        %2407 = vrot.lane.b32.xlu0 %v216, 97
        %v2408 = vpop.permute.xlu0 %2407
        %2409 = vrot.lane.b32.xlu0 %v217, 97
        %v2410 = vpop.permute.xlu0 %2409
        %2411 = vrot.lane.b32.xlu0 %v218, 97
        %v2412 = vpop.permute.xlu0 %2411
        %2413 = vrot.lane.b32.xlu0 %v219, 97
        %v2414 = vpop.permute.xlu0 %2413
        %vm2415 = vcmask 793600
        %v2416 = vsel %vm2415, %v2408, %v2410
        %v2417 = vsel %vm2415, %v2410, %v2412
        %v2418 = vsel %vm2415, %v2412, %v2414
        %v2420 = vsel %vm232, %v2406, 0
        %v2423 = vsel %vm236, %v2416, 0
        %v2426 = vsel %vm236, %v2417, 0
        %v2429 = vsel %vm236, %v2418, 0
        %2431 = vmatprep.subr.bf16.mxu0 0
        %2432 = vmatpush1.bf16.msra.mxu0 0
        %2433 = vmatprep.subr.bf16.mxu0 0
        %2434 = vmatpush1.bf16.msra.mxu0 0
        %2435 = vmatprep.subr.bf16.mxu0 0
        %2436 = vmatpush1.bf16.msra.mxu0 0
        %2437 = vmatprep.subr.bf16.mxu0 0
        %2438 = vmatpush1.bf16.msra.mxu0 0
        %2439 = vmatprep.subr.bf16.mxu0 0
        %2440 = vmatpush1.bf16.msra.mxu0 0
        %2441 = vmatprep.subr.bf16.mxu0 0
        %2442 = vmatpush1.bf16.msra.mxu0 0
        %2443 = vmatprep.subr.bf16.mxu0 0
        %2444 = vmatpush1.bf16.msra.mxu0 0
        %2445 = vmatprep.subr.bf16.mxu0 %v2426
        %2446 = vmatpush1.bf16.msra.mxu0 %v2423
        %2447 = vmatprep.subr.bf16.mxu0 0
        %2448 = vmatpush2.bf16.msra.mxu0 0
        %2449 = vmatprep.subr.bf16.mxu0 0
        %2450 = vmatpush2.bf16.msra.mxu0 0
        %2451 = vmatprep.subr.bf16.mxu0 0
        %2452 = vmatpush2.bf16.msra.mxu0 0
        %2453 = vmatprep.subr.bf16.mxu0 0
        %2454 = vmatpush2.bf16.msra.mxu0 0
        %2455 = vmatprep.subr.bf16.mxu0 0
        %2456 = vmatpush2.bf16.msra.mxu0 0
        %2457 = vmatprep.subr.bf16.mxu0 0
        %2458 = vmatpush2.bf16.msra.mxu0 0
        %2459 = vmatprep.subr.bf16.mxu0 0
        %2460 = vmatpush2.bf16.msra.mxu0 0
        %2461 = vmatprep.subr.bf16.mxu0 0
        %2462 = vmatpush2.bf16.msra.mxu0 0
        %2463 = vmatprep.mubr.bf16.mxu0 0
        %2464 = vmatmul.mubr.bf16.gmra.mxu0 %v2420
        %v2465 = vpop.f32.mrf.mxu0
        %v2466 = vadd.f32 0.0, %v2465
        %v2467 = vpop.f32.mrf.mxu0
        %v2468 = vadd.f32 0.0, %v2467
        %v2469 = vpop.f32.mrf.mxu0
        %v2470 = vpop.f32.mrf.mxu0
        %2471 = vdwg.mxu0
        %2472 = vmatprep.subr.bf16.mxu0 0
        %2473 = vmatpush1.bf16.msra.mxu0 0
        %2474 = vmatprep.subr.bf16.mxu0 0
        %2475 = vmatpush1.bf16.msra.mxu0 0
        %2476 = vmatprep.subr.bf16.mxu0 0
        %2477 = vmatpush1.bf16.msra.mxu0 0
        %2478 = vmatprep.subr.bf16.mxu0 0
        %2479 = vmatpush1.bf16.msra.mxu0 0
        %2480 = vmatprep.subr.bf16.mxu0 0
        %2481 = vmatpush1.bf16.msra.mxu0 0
        %2482 = vmatprep.subr.bf16.mxu0 0
        %2483 = vmatpush1.bf16.msra.mxu0 0
        %2484 = vmatprep.subr.bf16.mxu0 0
        %2485 = vmatpush1.bf16.msra.mxu0 0
        %2486 = vmatprep.subr.bf16.mxu0 0
        %2487 = vmatpush1.bf16.msra.mxu0 %v2429
        %2488 = vmatprep.subr.bf16.mxu0 0
        %2489 = vmatpush2.bf16.msra.mxu0 0
        %2490 = vmatprep.subr.bf16.mxu0 0
        %2491 = vmatpush2.bf16.msra.mxu0 0
        %2492 = vmatprep.subr.bf16.mxu0 0
        %2493 = vmatpush2.bf16.msra.mxu0 0
        %2494 = vmatprep.subr.bf16.mxu0 0
        %2495 = vmatpush2.bf16.msra.mxu0 0
        %2496 = vmatprep.subr.bf16.mxu0 0
        %2497 = vmatpush2.bf16.msra.mxu0 0
        %2498 = vmatprep.subr.bf16.mxu0 0
        %2499 = vmatpush2.bf16.msra.mxu0 0
        %2500 = vmatprep.subr.bf16.mxu0 0
        %2501 = vmatpush2.bf16.msra.mxu0 0
        %2502 = vmatprep.subr.bf16.mxu0 0
        %2503 = vmatpush2.bf16.msra.mxu0 0
        %2504 = vmatprep.mubr.bf16.mxu0 0
        %2505 = vmatmul.mubr.bf16.gmra.mxu0 %v2420
        %v2506 = vpop.f32.mrf.mxu0
        %v2507 = vadd.f32 0.0, %v2506
        %v2508 = vpop.f32.mrf.mxu0
        %v2509 = vpop.f32.mrf.mxu0
        %v2510 = vpop.f32.mrf.mxu0
        %2511 = vdwg.mxu0
        %v2512 = vadd.f32 %v2402, %v2466
        %v2513 = vadd.f32 %v2403, %v2468
        %v2514 = vadd.f32 %v2404, %v2507
        %2515 = vrot.lane.b32.xlu0 %v2074, 88
        %v2516 = vpop.permute.xlu0 %2515
        %2517 = vrot.lane.b32.xlu0 %v216, 31
        %v2518 = vpop.permute.xlu0 %2517
        %2519 = vrot.lane.b32.xlu0 %v217, 31
        %v2520 = vpop.permute.xlu0 %2519
        %2521 = vrot.lane.b32.xlu0 %v218, 31
        %v2522 = vpop.permute.xlu0 %2521
        %2523 = vrot.lane.b32.xlu0 %v219, 31
        %v2524 = vpop.permute.xlu0 %2523
        %vm2525 = vcmask 252928
        %v2526 = vsel %vm2525, %v2518, %v2520
        %v2527 = vsel %vm2525, %v2520, %v2522
        %v2528 = vsel %vm2525, %v2522, %v2524
        %v2530 = vsel %vm232, %v2516, 0
        %v2533 = vsel %vm236, %v2526, 0
        %v2536 = vsel %vm236, %v2527, 0
        %v2539 = vsel %vm236, %v2528, 0
        %2541 = vmatprep.subr.bf16.mxu0 0
        %2542 = vmatpush1.bf16.msra.mxu0 0
        %2543 = vmatprep.subr.bf16.mxu0 0
        %2544 = vmatpush1.bf16.msra.mxu0 0
        %2545 = vmatprep.subr.bf16.mxu0 0
        %2546 = vmatpush1.bf16.msra.mxu0 0
        %2547 = vmatprep.subr.bf16.mxu0 0
        %2548 = vmatpush1.bf16.msra.mxu0 0
        %2549 = vmatprep.subr.bf16.mxu0 0
        %2550 = vmatpush1.bf16.msra.mxu0 0
        %2551 = vmatprep.subr.bf16.mxu0 0
        %2552 = vmatpush1.bf16.msra.mxu0 0
        %2553 = vmatprep.subr.bf16.mxu0 0
        %2554 = vmatpush1.bf16.msra.mxu0 0
        %2555 = vmatprep.subr.bf16.mxu0 %v2536
        %2556 = vmatpush1.bf16.msra.mxu0 %v2533
        %2557 = vmatprep.subr.bf16.mxu0 0
        %2558 = vmatpush2.bf16.msra.mxu0 0
        %2559 = vmatprep.subr.bf16.mxu0 0
        %2560 = vmatpush2.bf16.msra.mxu0 0
        %2561 = vmatprep.subr.bf16.mxu0 0
        %2562 = vmatpush2.bf16.msra.mxu0 0
        %2563 = vmatprep.subr.bf16.mxu0 0
        %2564 = vmatpush2.bf16.msra.mxu0 0
        %2565 = vmatprep.subr.bf16.mxu0 0
        %2566 = vmatpush2.bf16.msra.mxu0 0
        %2567 = vmatprep.subr.bf16.mxu0 0
        %2568 = vmatpush2.bf16.msra.mxu0 0
        %2569 = vmatprep.subr.bf16.mxu0 0
        %2570 = vmatpush2.bf16.msra.mxu0 0
        %2571 = vmatprep.subr.bf16.mxu0 0
        %2572 = vmatpush2.bf16.msra.mxu0 0
        %2573 = vmatprep.mubr.bf16.mxu0 0
        %2574 = vmatmul.mubr.bf16.gmra.mxu0 %v2530
        %v2575 = vpop.f32.mrf.mxu0
        %v2576 = vadd.f32 0.0, %v2575
        %v2577 = vpop.f32.mrf.mxu0
        %v2578 = vadd.f32 0.0, %v2577
        %v2579 = vpop.f32.mrf.mxu0
        %v2580 = vpop.f32.mrf.mxu0
        %2581 = vdwg.mxu0
        %2582 = vmatprep.subr.bf16.mxu0 0
        %2583 = vmatpush1.bf16.msra.mxu0 0
        %2584 = vmatprep.subr.bf16.mxu0 0
        %2585 = vmatpush1.bf16.msra.mxu0 0
        %2586 = vmatprep.subr.bf16.mxu0 0
        %2587 = vmatpush1.bf16.msra.mxu0 0
        %2588 = vmatprep.subr.bf16.mxu0 0
        %2589 = vmatpush1.bf16.msra.mxu0 0
        %2590 = vmatprep.subr.bf16.mxu0 0
        %2591 = vmatpush1.bf16.msra.mxu0 0
        %2592 = vmatprep.subr.bf16.mxu0 0
        %2593 = vmatpush1.bf16.msra.mxu0 0
        %2594 = vmatprep.subr.bf16.mxu0 0
        %2595 = vmatpush1.bf16.msra.mxu0 0
        %2596 = vmatprep.subr.bf16.mxu0 0
        %2597 = vmatpush1.bf16.msra.mxu0 %v2539
        %2598 = vmatprep.subr.bf16.mxu0 0
        %2599 = vmatpush2.bf16.msra.mxu0 0
        %2600 = vmatprep.subr.bf16.mxu0 0
        %2601 = vmatpush2.bf16.msra.mxu0 0
        %2602 = vmatprep.subr.bf16.mxu0 0
        %2603 = vmatpush2.bf16.msra.mxu0 0
        %2604 = vmatprep.subr.bf16.mxu0 0
        %2605 = vmatpush2.bf16.msra.mxu0 0
        %2606 = vmatprep.subr.bf16.mxu0 0
        %2607 = vmatpush2.bf16.msra.mxu0 0
        %2608 = vmatprep.subr.bf16.mxu0 0
        %2609 = vmatpush2.bf16.msra.mxu0 0
        %2610 = vmatprep.subr.bf16.mxu0 0
        %2611 = vmatpush2.bf16.msra.mxu0 0
        %2612 = vmatprep.subr.bf16.mxu0 0
        %2613 = vmatpush2.bf16.msra.mxu0 0
        %2614 = vmatprep.mubr.bf16.mxu0 0
        %2615 = vmatmul.mubr.bf16.gmra.mxu0 %v2530
        %v2616 = vpop.f32.mrf.mxu0
        %v2617 = vadd.f32 0.0, %v2616
        %v2618 = vpop.f32.mrf.mxu0
        %v2619 = vpop.f32.mrf.mxu0
        %v2620 = vpop.f32.mrf.mxu0
        %2621 = vdwg.mxu0
        %v2622 = vadd.f32 %v2512, %v2576
        %v2623 = vadd.f32 %v2513, %v2578
        %v2624 = vadd.f32 %v2514, %v2617
        %2625 = vrot.lane.b32.xlu0 %v2074, 80
        %v2626 = vpop.permute.xlu0 %2625
        %v2628 = vsel %vm232, %v2626, 0
        %2630 = vmatprep.subr.bf16.mxu0 0
        %2631 = vmatpush1.bf16.msra.mxu0 0
        %2632 = vmatprep.subr.bf16.mxu0 0
        %2633 = vmatpush1.bf16.msra.mxu0 0
        %2634 = vmatprep.subr.bf16.mxu0 0
        %2635 = vmatpush1.bf16.msra.mxu0 0
        %2636 = vmatprep.subr.bf16.mxu0 0
        %2637 = vmatpush1.bf16.msra.mxu0 0
        %2638 = vmatprep.subr.bf16.mxu0 0
        %2639 = vmatpush1.bf16.msra.mxu0 0
        %2640 = vmatprep.subr.bf16.mxu0 0
        %2641 = vmatpush1.bf16.msra.mxu0 0
        %2642 = vmatprep.subr.bf16.mxu0 0
        %2643 = vmatpush1.bf16.msra.mxu0 0
        %2644 = vmatprep.subr.bf16.mxu0 %v673
        %2645 = vmatpush1.bf16.msra.mxu0 %v670
        %2646 = vmatprep.subr.bf16.mxu0 0
        %2647 = vmatpush2.bf16.msra.mxu0 0
        %2648 = vmatprep.subr.bf16.mxu0 0
        %2649 = vmatpush2.bf16.msra.mxu0 0
        %2650 = vmatprep.subr.bf16.mxu0 0
        %2651 = vmatpush2.bf16.msra.mxu0 0
        %2652 = vmatprep.subr.bf16.mxu0 0
        %2653 = vmatpush2.bf16.msra.mxu0 0
        %2654 = vmatprep.subr.bf16.mxu0 0
        %2655 = vmatpush2.bf16.msra.mxu0 0
        %2656 = vmatprep.subr.bf16.mxu0 0
        %2657 = vmatpush2.bf16.msra.mxu0 0
        %2658 = vmatprep.subr.bf16.mxu0 0
        %2659 = vmatpush2.bf16.msra.mxu0 0
        %2660 = vmatprep.subr.bf16.mxu0 0
        %2661 = vmatpush2.bf16.msra.mxu0 0
        %2662 = vmatprep.mubr.bf16.mxu0 0
        %2663 = vmatmul.mubr.bf16.gmra.mxu0 %v2628
        %v2664 = vpop.f32.mrf.mxu0
        %v2665 = vadd.f32 0.0, %v2664
        %v2666 = vpop.f32.mrf.mxu0
        %v2667 = vadd.f32 0.0, %v2666
        %v2668 = vpop.f32.mrf.mxu0
        %v2669 = vpop.f32.mrf.mxu0
        %2670 = vdwg.mxu0
        %2671 = vmatprep.subr.bf16.mxu0 0
        %2672 = vmatpush1.bf16.msra.mxu0 0
        %2673 = vmatprep.subr.bf16.mxu0 0
        %2674 = vmatpush1.bf16.msra.mxu0 0
        %2675 = vmatprep.subr.bf16.mxu0 0
        %2676 = vmatpush1.bf16.msra.mxu0 0
        %2677 = vmatprep.subr.bf16.mxu0 0
        %2678 = vmatpush1.bf16.msra.mxu0 0
        %2679 = vmatprep.subr.bf16.mxu0 0
        %2680 = vmatpush1.bf16.msra.mxu0 0
        %2681 = vmatprep.subr.bf16.mxu0 0
        %2682 = vmatpush1.bf16.msra.mxu0 0
        %2683 = vmatprep.subr.bf16.mxu0 0
        %2684 = vmatpush1.bf16.msra.mxu0 0
        %2685 = vmatprep.subr.bf16.mxu0 0
        %2686 = vmatpush1.bf16.msra.mxu0 %v676
        %2687 = vmatprep.subr.bf16.mxu0 0
        %2688 = vmatpush2.bf16.msra.mxu0 0
        %2689 = vmatprep.subr.bf16.mxu0 0
        %2690 = vmatpush2.bf16.msra.mxu0 0
        %2691 = vmatprep.subr.bf16.mxu0 0
        %2692 = vmatpush2.bf16.msra.mxu0 0
        %2693 = vmatprep.subr.bf16.mxu0 0
        %2694 = vmatpush2.bf16.msra.mxu0 0
        %2695 = vmatprep.subr.bf16.mxu0 0
        %2696 = vmatpush2.bf16.msra.mxu0 0
        %2697 = vmatprep.subr.bf16.mxu0 0
        %2698 = vmatpush2.bf16.msra.mxu0 0
        %2699 = vmatprep.subr.bf16.mxu0 0
        %2700 = vmatpush2.bf16.msra.mxu0 0
        %2701 = vmatprep.subr.bf16.mxu0 0
        %2702 = vmatpush2.bf16.msra.mxu0 0
        %2703 = vmatprep.mubr.bf16.mxu0 0
        %2704 = vmatmul.mubr.bf16.gmra.mxu0 %v2628
        %v2705 = vpop.f32.mrf.mxu0
        %v2706 = vadd.f32 0.0, %v2705
        %v2707 = vpop.f32.mrf.mxu0
        %v2708 = vpop.f32.mrf.mxu0
        %v2709 = vpop.f32.mrf.mxu0
        %2710 = vdwg.mxu0
        %v2711 = vadd.f32 %v2622, %v2665
        %v2712 = vadd.f32 %v2623, %v2667
        %v2713 = vadd.f32 %v2624, %v2706
        %2714 = vrot.lane.b32.xlu0 %v2074, 72
        %v2715 = vpop.permute.xlu0 %2714
        %2716 = vrot.lane.b32.xlu0 %v216, 25
        %v2717 = vpop.permute.xlu0 %2716
        %2718 = vrot.lane.b32.xlu0 %v217, 25
        %v2719 = vpop.permute.xlu0 %2718
        %2720 = vrot.lane.b32.xlu0 %v218, 25
        %v2721 = vpop.permute.xlu0 %2720
        %2722 = vrot.lane.b32.xlu0 %v219, 25
        %v2723 = vpop.permute.xlu0 %2722
        %vm2724 = vcmask 203776
        %v2725 = vsel %vm2724, %v2717, %v2719
        %v2726 = vsel %vm2724, %v2719, %v2721
        %v2727 = vsel %vm2724, %v2721, %v2723
        %v2729 = vsel %vm232, %v2715, 0
        %v2732 = vsel %vm236, %v2725, 0
        %v2735 = vsel %vm236, %v2726, 0
        %v2738 = vsel %vm236, %v2727, 0
        %2740 = vmatprep.subr.bf16.mxu0 0
        %2741 = vmatpush1.bf16.msra.mxu0 0
        %2742 = vmatprep.subr.bf16.mxu0 0
        %2743 = vmatpush1.bf16.msra.mxu0 0
        %2744 = vmatprep.subr.bf16.mxu0 0
        %2745 = vmatpush1.bf16.msra.mxu0 0
        %2746 = vmatprep.subr.bf16.mxu0 0
        %2747 = vmatpush1.bf16.msra.mxu0 0
        %2748 = vmatprep.subr.bf16.mxu0 0
        %2749 = vmatpush1.bf16.msra.mxu0 0
        %2750 = vmatprep.subr.bf16.mxu0 0
        %2751 = vmatpush1.bf16.msra.mxu0 0
        %2752 = vmatprep.subr.bf16.mxu0 0
        %2753 = vmatpush1.bf16.msra.mxu0 0
        %2754 = vmatprep.subr.bf16.mxu0 %v2735
        %2755 = vmatpush1.bf16.msra.mxu0 %v2732
        %2756 = vmatprep.subr.bf16.mxu0 0
        %2757 = vmatpush2.bf16.msra.mxu0 0
        %2758 = vmatprep.subr.bf16.mxu0 0
        %2759 = vmatpush2.bf16.msra.mxu0 0
        %2760 = vmatprep.subr.bf16.mxu0 0
        %2761 = vmatpush2.bf16.msra.mxu0 0
        %2762 = vmatprep.subr.bf16.mxu0 0
        %2763 = vmatpush2.bf16.msra.mxu0 0
        %2764 = vmatprep.subr.bf16.mxu0 0
        %2765 = vmatpush2.bf16.msra.mxu0 0
        %2766 = vmatprep.subr.bf16.mxu0 0
        %2767 = vmatpush2.bf16.msra.mxu0 0
        %2768 = vmatprep.subr.bf16.mxu0 0
        %2769 = vmatpush2.bf16.msra.mxu0 0
        %2770 = vmatprep.subr.bf16.mxu0 0
        %2771 = vmatpush2.bf16.msra.mxu0 0
        %2772 = vmatprep.mubr.bf16.mxu0 0
        %2773 = vmatmul.mubr.bf16.gmra.mxu0 %v2729
        %v2774 = vpop.f32.mrf.mxu0
        %v2775 = vadd.f32 0.0, %v2774
        %v2776 = vpop.f32.mrf.mxu0
        %v2777 = vadd.f32 0.0, %v2776
        %v2778 = vpop.f32.mrf.mxu0
        %v2779 = vpop.f32.mrf.mxu0
        %2780 = vdwg.mxu0
        %2781 = vmatprep.subr.bf16.mxu0 0
        %2782 = vmatpush1.bf16.msra.mxu0 0
        %2783 = vmatprep.subr.bf16.mxu0 0
        %2784 = vmatpush1.bf16.msra.mxu0 0
        %2785 = vmatprep.subr.bf16.mxu0 0
        %2786 = vmatpush1.bf16.msra.mxu0 0
        %2787 = vmatprep.subr.bf16.mxu0 0
        %2788 = vmatpush1.bf16.msra.mxu0 0
        %2789 = vmatprep.subr.bf16.mxu0 0
        %2790 = vmatpush1.bf16.msra.mxu0 0
        %2791 = vmatprep.subr.bf16.mxu0 0
        %2792 = vmatpush1.bf16.msra.mxu0 0
        %2793 = vmatprep.subr.bf16.mxu0 0
        %2794 = vmatpush1.bf16.msra.mxu0 0
        %2795 = vmatprep.subr.bf16.mxu0 0
        %2796 = vmatpush1.bf16.msra.mxu0 %v2738
        %2797 = vmatprep.subr.bf16.mxu0 0
        %2798 = vmatpush2.bf16.msra.mxu0 0
        %2799 = vmatprep.subr.bf16.mxu0 0
        %2800 = vmatpush2.bf16.msra.mxu0 0
        %2801 = vmatprep.subr.bf16.mxu0 0
        %2802 = vmatpush2.bf16.msra.mxu0 0
        %2803 = vmatprep.subr.bf16.mxu0 0
        %2804 = vmatpush2.bf16.msra.mxu0 0
        %2805 = vmatprep.subr.bf16.mxu0 0
        %2806 = vmatpush2.bf16.msra.mxu0 0
        %2807 = vmatprep.subr.bf16.mxu0 0
        %2808 = vmatpush2.bf16.msra.mxu0 0
        %2809 = vmatprep.subr.bf16.mxu0 0
        %2810 = vmatpush2.bf16.msra.mxu0 0
        %2811 = vmatprep.subr.bf16.mxu0 0
        %2812 = vmatpush2.bf16.msra.mxu0 0
        %2813 = vmatprep.mubr.bf16.mxu0 0
        %2814 = vmatmul.mubr.bf16.gmra.mxu0 %v2729
        %v2815 = vpop.f32.mrf.mxu0
        %v2816 = vadd.f32 0.0, %v2815
        %v2817 = vpop.f32.mrf.mxu0
        %v2818 = vpop.f32.mrf.mxu0
        %v2819 = vpop.f32.mrf.mxu0
        %2820 = vdwg.mxu0
        %v2821 = vadd.f32 %v2711, %v2775
        %v2822 = vadd.f32 %v2712, %v2777
        %v2823 = vadd.f32 %v2713, %v2816
        %2824 = vrot.lane.b32.xlu0 %v2074, 64
        %v2825 = vpop.permute.xlu0 %2824
        %2826 = vrot.lane.b32.xlu0 %v1851, 87
        %v2827 = vpop.permute.xlu0 %2826
        %2828 = vrot.lane.b32.xlu0 %v1852, 87
        %v2829 = vpop.permute.xlu0 %2828
        %2830 = vrot.lane.b32.xlu0 %v1853, 87
        %v2831 = vpop.permute.xlu0 %2830
        %2832 = vrot.lane.b32.xlu0 %v1854, 87
        %v2833 = vpop.permute.xlu0 %2832
        %vm2834 = vcmask 711680
        %v2835 = vsel %vm2834, %v2827, %v2829
        %v2836 = vsel %vm2834, %v2829, %v2831
        %v2837 = vsel %vm2834, %v2831, %v2833
        %v2839 = vsel %vm232, %v2825, 0
        %v2842 = vsel %vm236, %v2835, 0
        %v2845 = vsel %vm236, %v2836, 0
        %v2848 = vsel %vm236, %v2837, 0
        %2850 = vmatprep.subr.bf16.mxu0 0
        %2851 = vmatpush1.bf16.msra.mxu0 0
        %2852 = vmatprep.subr.bf16.mxu0 0
        %2853 = vmatpush1.bf16.msra.mxu0 0
        %2854 = vmatprep.subr.bf16.mxu0 0
        %2855 = vmatpush1.bf16.msra.mxu0 0
        %2856 = vmatprep.subr.bf16.mxu0 0
        %2857 = vmatpush1.bf16.msra.mxu0 0
        %2858 = vmatprep.subr.bf16.mxu0 0
        %2859 = vmatpush1.bf16.msra.mxu0 0
        %2860 = vmatprep.subr.bf16.mxu0 0
        %2861 = vmatpush1.bf16.msra.mxu0 0
        %2862 = vmatprep.subr.bf16.mxu0 0
        %2863 = vmatpush1.bf16.msra.mxu0 0
        %2864 = vmatprep.subr.bf16.mxu0 %v2845
        %2865 = vmatpush1.bf16.msra.mxu0 %v2842
        %2866 = vmatprep.subr.bf16.mxu0 0
        %2867 = vmatpush2.bf16.msra.mxu0 0
        %2868 = vmatprep.subr.bf16.mxu0 0
        %2869 = vmatpush2.bf16.msra.mxu0 0
        %2870 = vmatprep.subr.bf16.mxu0 0
        %2871 = vmatpush2.bf16.msra.mxu0 0
        %2872 = vmatprep.subr.bf16.mxu0 0
        %2873 = vmatpush2.bf16.msra.mxu0 0
        %2874 = vmatprep.subr.bf16.mxu0 0
        %2875 = vmatpush2.bf16.msra.mxu0 0
        %2876 = vmatprep.subr.bf16.mxu0 0
        %2877 = vmatpush2.bf16.msra.mxu0 0
        %2878 = vmatprep.subr.bf16.mxu0 0
        %2879 = vmatpush2.bf16.msra.mxu0 0
        %2880 = vmatprep.subr.bf16.mxu0 0
        %2881 = vmatpush2.bf16.msra.mxu0 0
        %2882 = vmatprep.mubr.bf16.mxu0 0
        %2883 = vmatmul.mubr.bf16.gmra.mxu0 %v2839
        %v2884 = vpop.f32.mrf.mxu0
        %v2885 = vadd.f32 0.0, %v2884
        %v2886 = vpop.f32.mrf.mxu0
        %v2887 = vadd.f32 0.0, %v2886
        %v2888 = vpop.f32.mrf.mxu0
        %v2889 = vpop.f32.mrf.mxu0
        %2890 = vdwg.mxu0
        %2891 = vmatprep.subr.bf16.mxu0 0
        %2892 = vmatpush1.bf16.msra.mxu0 0
        %2893 = vmatprep.subr.bf16.mxu0 0
        %2894 = vmatpush1.bf16.msra.mxu0 0
        %2895 = vmatprep.subr.bf16.mxu0 0
        %2896 = vmatpush1.bf16.msra.mxu0 0
        %2897 = vmatprep.subr.bf16.mxu0 0
        %2898 = vmatpush1.bf16.msra.mxu0 0
        %2899 = vmatprep.subr.bf16.mxu0 0
        %2900 = vmatpush1.bf16.msra.mxu0 0
        %2901 = vmatprep.subr.bf16.mxu0 0
        %2902 = vmatpush1.bf16.msra.mxu0 0
        %2903 = vmatprep.subr.bf16.mxu0 0
        %2904 = vmatpush1.bf16.msra.mxu0 0
        %2905 = vmatprep.subr.bf16.mxu0 0
        %2906 = vmatpush1.bf16.msra.mxu0 %v2848
        %2907 = vmatprep.subr.bf16.mxu0 0
        %2908 = vmatpush2.bf16.msra.mxu0 0
        %2909 = vmatprep.subr.bf16.mxu0 0
        %2910 = vmatpush2.bf16.msra.mxu0 0
        %2911 = vmatprep.subr.bf16.mxu0 0
        %2912 = vmatpush2.bf16.msra.mxu0 0
        %2913 = vmatprep.subr.bf16.mxu0 0
        %2914 = vmatpush2.bf16.msra.mxu0 0
        %2915 = vmatprep.subr.bf16.mxu0 0
        %2916 = vmatpush2.bf16.msra.mxu0 0
        %2917 = vmatprep.subr.bf16.mxu0 0
        %2918 = vmatpush2.bf16.msra.mxu0 0
        %2919 = vmatprep.subr.bf16.mxu0 0
        %2920 = vmatpush2.bf16.msra.mxu0 0
        %2921 = vmatprep.subr.bf16.mxu0 0
        %2922 = vmatpush2.bf16.msra.mxu0 0
        %2923 = vmatprep.mubr.bf16.mxu0 0
        %2924 = vmatmul.mubr.bf16.gmra.mxu0 %v2839
        %v2925 = vpop.f32.mrf.mxu0
        %v2926 = vadd.f32 0.0, %v2925
        %v2927 = vpop.f32.mrf.mxu0
        %v2928 = vpop.f32.mrf.mxu0
        %v2929 = vpop.f32.mrf.mxu0
        %2930 = vdwg.mxu0
        %v2931 = vadd.f32 %v2821, %v2885
        %v2932 = vadd.f32 %v2822, %v2887
        %v2933 = vadd.f32 %v2823, %v2926
        %2934 = vrot.lane.b32.xlu0 %v2074, 56
        %v2935 = vpop.permute.xlu0 %2934
        %2936 = vrot.lane.b32.xlu0 %v1851, 84
        %v2937 = vpop.permute.xlu0 %2936
        %2938 = vrot.lane.b32.xlu0 %v1852, 84
        %v2939 = vpop.permute.xlu0 %2938
        %2940 = vrot.lane.b32.xlu0 %v1853, 84
        %v2941 = vpop.permute.xlu0 %2940
        %2942 = vrot.lane.b32.xlu0 %v1854, 84
        %v2943 = vpop.permute.xlu0 %2942
        %vm2944 = vcmask 687104
        %v2945 = vsel %vm2944, %v2937, %v2939
        %v2946 = vsel %vm2944, %v2939, %v2941
        %v2947 = vsel %vm2944, %v2941, %v2943
        %v2949 = vsel %vm232, %v2935, 0
        %v2952 = vsel %vm236, %v2945, 0
        %v2955 = vsel %vm236, %v2946, 0
        %v2958 = vsel %vm236, %v2947, 0
        %2960 = vmatprep.subr.bf16.mxu0 0
        %2961 = vmatpush1.bf16.msra.mxu0 0
        %2962 = vmatprep.subr.bf16.mxu0 0
        %2963 = vmatpush1.bf16.msra.mxu0 0
        %2964 = vmatprep.subr.bf16.mxu0 0
        %2965 = vmatpush1.bf16.msra.mxu0 0
        %2966 = vmatprep.subr.bf16.mxu0 0
        %2967 = vmatpush1.bf16.msra.mxu0 0
        %2968 = vmatprep.subr.bf16.mxu0 0
        %2969 = vmatpush1.bf16.msra.mxu0 0
        %2970 = vmatprep.subr.bf16.mxu0 0
        %2971 = vmatpush1.bf16.msra.mxu0 0
        %2972 = vmatprep.subr.bf16.mxu0 0
        %2973 = vmatpush1.bf16.msra.mxu0 0
        %2974 = vmatprep.subr.bf16.mxu0 %v2955
        %2975 = vmatpush1.bf16.msra.mxu0 %v2952
        %2976 = vmatprep.subr.bf16.mxu0 0
        %2977 = vmatpush2.bf16.msra.mxu0 0
        %2978 = vmatprep.subr.bf16.mxu0 0
        %2979 = vmatpush2.bf16.msra.mxu0 0
        %2980 = vmatprep.subr.bf16.mxu0 0
        %2981 = vmatpush2.bf16.msra.mxu0 0
        %2982 = vmatprep.subr.bf16.mxu0 0
        %2983 = vmatpush2.bf16.msra.mxu0 0
        %2984 = vmatprep.subr.bf16.mxu0 0
        %2985 = vmatpush2.bf16.msra.mxu0 0
        %2986 = vmatprep.subr.bf16.mxu0 0
        %2987 = vmatpush2.bf16.msra.mxu0 0
        %2988 = vmatprep.subr.bf16.mxu0 0
        %2989 = vmatpush2.bf16.msra.mxu0 0
        %2990 = vmatprep.subr.bf16.mxu0 0
        %2991 = vmatpush2.bf16.msra.mxu0 0
        %2992 = vmatprep.mubr.bf16.mxu0 0
        %2993 = vmatmul.mubr.bf16.gmra.mxu0 %v2949
        %v2994 = vpop.f32.mrf.mxu0
        %v2995 = vadd.f32 0.0, %v2994
        %v2996 = vpop.f32.mrf.mxu0
        %v2997 = vadd.f32 0.0, %v2996
        %v2998 = vpop.f32.mrf.mxu0
        %v2999 = vpop.f32.mrf.mxu0
        %3000 = vdwg.mxu0
        %3001 = vmatprep.subr.bf16.mxu0 0
        %3002 = vmatpush1.bf16.msra.mxu0 0
        %3003 = vmatprep.subr.bf16.mxu0 0
        %3004 = vmatpush1.bf16.msra.mxu0 0
        %3005 = vmatprep.subr.bf16.mxu0 0
        %3006 = vmatpush1.bf16.msra.mxu0 0
        %3007 = vmatprep.subr.bf16.mxu0 0
        %3008 = vmatpush1.bf16.msra.mxu0 0
        %3009 = vmatprep.subr.bf16.mxu0 0
        %3010 = vmatpush1.bf16.msra.mxu0 0
        %3011 = vmatprep.subr.bf16.mxu0 0
        %3012 = vmatpush1.bf16.msra.mxu0 0
        %3013 = vmatprep.subr.bf16.mxu0 0
        %3014 = vmatpush1.bf16.msra.mxu0 0
        %3015 = vmatprep.subr.bf16.mxu0 0
        %3016 = vmatpush1.bf16.msra.mxu0 %v2958
        %3017 = vmatprep.subr.bf16.mxu0 0
        %3018 = vmatpush2.bf16.msra.mxu0 0
        %3019 = vmatprep.subr.bf16.mxu0 0
        %3020 = vmatpush2.bf16.msra.mxu0 0
        %3021 = vmatprep.subr.bf16.mxu0 0
        %3022 = vmatpush2.bf16.msra.mxu0 0
        %3023 = vmatprep.subr.bf16.mxu0 0
        %3024 = vmatpush2.bf16.msra.mxu0 0
        %3025 = vmatprep.subr.bf16.mxu0 0
        %3026 = vmatpush2.bf16.msra.mxu0 0
        %3027 = vmatprep.subr.bf16.mxu0 0
        %3028 = vmatpush2.bf16.msra.mxu0 0
        %3029 = vmatprep.subr.bf16.mxu0 0
        %3030 = vmatpush2.bf16.msra.mxu0 0
        %3031 = vmatprep.subr.bf16.mxu0 0
        %3032 = vmatpush2.bf16.msra.mxu0 0
        %3033 = vmatprep.mubr.bf16.mxu0 0
        %3034 = vmatmul.mubr.bf16.gmra.mxu0 %v2949
        %v3035 = vpop.f32.mrf.mxu0
        %v3036 = vadd.f32 0.0, %v3035
        %v3037 = vpop.f32.mrf.mxu0
        %v3038 = vpop.f32.mrf.mxu0
        %v3039 = vpop.f32.mrf.mxu0
        %3040 = vdwg.mxu0
        %v3041 = vadd.f32 %v2931, %v2995
        %v3042 = vadd.f32 %v2932, %v2997
        %v3043 = vadd.f32 %v2933, %v3036
        %3044 = vrot.lane.b32.xlu0 %v2074, 48
        %v3045 = vpop.permute.xlu0 %3044
        %3046 = vrot.lane.b32.xlu0 %v1851, 81
        %v3047 = vpop.permute.xlu0 %3046
        %3048 = vrot.lane.b32.xlu0 %v1852, 81
        %v3049 = vpop.permute.xlu0 %3048
        %3050 = vrot.lane.b32.xlu0 %v1853, 81
        %v3051 = vpop.permute.xlu0 %3050
        %3052 = vrot.lane.b32.xlu0 %v1854, 81
        %v3053 = vpop.permute.xlu0 %3052
        %vm3054 = vcmask 662528
        %v3055 = vsel %vm3054, %v3047, %v3049
        %v3056 = vsel %vm3054, %v3049, %v3051
        %v3057 = vsel %vm3054, %v3051, %v3053
        %v3059 = vsel %vm232, %v3045, 0
        %v3062 = vsel %vm236, %v3055, 0
        %v3065 = vsel %vm236, %v3056, 0
        %v3068 = vsel %vm236, %v3057, 0
        %3070 = vmatprep.subr.bf16.mxu0 0
        %3071 = vmatpush1.bf16.msra.mxu0 0
        %3072 = vmatprep.subr.bf16.mxu0 0
        %3073 = vmatpush1.bf16.msra.mxu0 0
        %3074 = vmatprep.subr.bf16.mxu0 0
        %3075 = vmatpush1.bf16.msra.mxu0 0
        %3076 = vmatprep.subr.bf16.mxu0 0
        %3077 = vmatpush1.bf16.msra.mxu0 0
        %3078 = vmatprep.subr.bf16.mxu0 0
        %3079 = vmatpush1.bf16.msra.mxu0 0
        %3080 = vmatprep.subr.bf16.mxu0 0
        %3081 = vmatpush1.bf16.msra.mxu0 0
        %3082 = vmatprep.subr.bf16.mxu0 0
        %3083 = vmatpush1.bf16.msra.mxu0 0
        %3084 = vmatprep.subr.bf16.mxu0 %v3065
        %3085 = vmatpush1.bf16.msra.mxu0 %v3062
        %3086 = vmatprep.subr.bf16.mxu0 0
        %3087 = vmatpush2.bf16.msra.mxu0 0
        %3088 = vmatprep.subr.bf16.mxu0 0
        %3089 = vmatpush2.bf16.msra.mxu0 0
        %3090 = vmatprep.subr.bf16.mxu0 0
        %3091 = vmatpush2.bf16.msra.mxu0 0
        %3092 = vmatprep.subr.bf16.mxu0 0
        %3093 = vmatpush2.bf16.msra.mxu0 0
        %3094 = vmatprep.subr.bf16.mxu0 0
        %3095 = vmatpush2.bf16.msra.mxu0 0
        %3096 = vmatprep.subr.bf16.mxu0 0
        %3097 = vmatpush2.bf16.msra.mxu0 0
        %3098 = vmatprep.subr.bf16.mxu0 0
        %3099 = vmatpush2.bf16.msra.mxu0 0
        %3100 = vmatprep.subr.bf16.mxu0 0
        %3101 = vmatpush2.bf16.msra.mxu0 0
        %3102 = vmatprep.mubr.bf16.mxu0 0
        %3103 = vmatmul.mubr.bf16.gmra.mxu0 %v3059
        %v3104 = vpop.f32.mrf.mxu0
        %v3105 = vadd.f32 0.0, %v3104
        %v3106 = vpop.f32.mrf.mxu0
        %v3107 = vadd.f32 0.0, %v3106
        %v3108 = vpop.f32.mrf.mxu0
        %v3109 = vpop.f32.mrf.mxu0
        %3110 = vdwg.mxu0
        %3111 = vmatprep.subr.bf16.mxu0 0
        %3112 = vmatpush1.bf16.msra.mxu0 0
        %3113 = vmatprep.subr.bf16.mxu0 0
        %3114 = vmatpush1.bf16.msra.mxu0 0
        %3115 = vmatprep.subr.bf16.mxu0 0
        %3116 = vmatpush1.bf16.msra.mxu0 0
        %3117 = vmatprep.subr.bf16.mxu0 0
        %3118 = vmatpush1.bf16.msra.mxu0 0
        %3119 = vmatprep.subr.bf16.mxu0 0
        %3120 = vmatpush1.bf16.msra.mxu0 0
        %3121 = vmatprep.subr.bf16.mxu0 0
        %3122 = vmatpush1.bf16.msra.mxu0 0
        %3123 = vmatprep.subr.bf16.mxu0 0
        %3124 = vmatpush1.bf16.msra.mxu0 0
        %3125 = vmatprep.subr.bf16.mxu0 0
        %3126 = vmatpush1.bf16.msra.mxu0 %v3068
        %3127 = vmatprep.subr.bf16.mxu0 0
        %3128 = vmatpush2.bf16.msra.mxu0 0
        %3129 = vmatprep.subr.bf16.mxu0 0
        %3130 = vmatpush2.bf16.msra.mxu0 0
        %3131 = vmatprep.subr.bf16.mxu0 0
        %3132 = vmatpush2.bf16.msra.mxu0 0
        %3133 = vmatprep.subr.bf16.mxu0 0
        %3134 = vmatpush2.bf16.msra.mxu0 0
        %3135 = vmatprep.subr.bf16.mxu0 0
        %3136 = vmatpush2.bf16.msra.mxu0 0
        %3137 = vmatprep.subr.bf16.mxu0 0
        %3138 = vmatpush2.bf16.msra.mxu0 0
        %3139 = vmatprep.subr.bf16.mxu0 0
        %3140 = vmatpush2.bf16.msra.mxu0 0
        %3141 = vmatprep.subr.bf16.mxu0 0
        %3142 = vmatpush2.bf16.msra.mxu0 0
        %3143 = vmatprep.mubr.bf16.mxu0 0
        %3144 = vmatmul.mubr.bf16.gmra.mxu0 %v3059
        %v3145 = vpop.f32.mrf.mxu0
        %v3146 = vadd.f32 0.0, %v3145
        %v3147 = vpop.f32.mrf.mxu0
        %v3148 = vpop.f32.mrf.mxu0
        %v3149 = vpop.f32.mrf.mxu0
        %3150 = vdwg.mxu0
        %v3151 = vadd.f32 %v3041, %v3105
        %v3152 = vadd.f32 %v3042, %v3107
        %v3153 = vadd.f32 %v3043, %v3146
        %v3154 = vld [vmem:[%s173] sm:$0xff]
        %v3155 = vld [vmem:[%s173 + $0x8] sm:$0xf]
        %3156 = vrot.lane.b32.xlu0 %v2074, 40
        %v3157 = vpop.permute.xlu0 %3156
        %v3160 = vunpack.c.l.b16 %v3154
        %v3161 = vunpack.c.h.b16 %v3154
        %v3162 = vunpack.c.l.b16 %v3155
        %v3163 = vpack.c.b16 %v3160, %v3160
        %v3164 = vpack.c.b16 %v3161, %v3161
        %v3165 = vpack.c.b16 %v3162, %v3162
        %v3167 = vsel %vm232, %v3157, 0
        %v3170 = vsel %vm236, %v3163, 0
        %v3173 = vsel %vm236, %v3164, 0
        %v3176 = vsel %vm236, %v3165, 0
        %3178 = vmatprep.subr.bf16.mxu0 0
        %3179 = vmatpush1.bf16.msra.mxu0 0
        %3180 = vmatprep.subr.bf16.mxu0 0
        %3181 = vmatpush1.bf16.msra.mxu0 0
        %3182 = vmatprep.subr.bf16.mxu0 0
        %3183 = vmatpush1.bf16.msra.mxu0 0
        %3184 = vmatprep.subr.bf16.mxu0 0
        %3185 = vmatpush1.bf16.msra.mxu0 0
        %3186 = vmatprep.subr.bf16.mxu0 0
        %3187 = vmatpush1.bf16.msra.mxu0 0
        %3188 = vmatprep.subr.bf16.mxu0 0
        %3189 = vmatpush1.bf16.msra.mxu0 0
        %3190 = vmatprep.subr.bf16.mxu0 0
        %3191 = vmatpush1.bf16.msra.mxu0 0
        %3192 = vmatprep.subr.bf16.mxu0 %v3173
        %3193 = vmatpush1.bf16.msra.mxu0 %v3170
        %3194 = vmatprep.subr.bf16.mxu0 0
        %3195 = vmatpush2.bf16.msra.mxu0 0
        %3196 = vmatprep.subr.bf16.mxu0 0
        %3197 = vmatpush2.bf16.msra.mxu0 0
        %3198 = vmatprep.subr.bf16.mxu0 0
        %3199 = vmatpush2.bf16.msra.mxu0 0
        %3200 = vmatprep.subr.bf16.mxu0 0
        %3201 = vmatpush2.bf16.msra.mxu0 0
        %3202 = vmatprep.subr.bf16.mxu0 0
        %3203 = vmatpush2.bf16.msra.mxu0 0
        %3204 = vmatprep.subr.bf16.mxu0 0
        %3205 = vmatpush2.bf16.msra.mxu0 0
        %3206 = vmatprep.subr.bf16.mxu0 0
        %3207 = vmatpush2.bf16.msra.mxu0 0
        %3208 = vmatprep.subr.bf16.mxu0 0
        %3209 = vmatpush2.bf16.msra.mxu0 0
        %3210 = vmatprep.mubr.bf16.mxu0 0
        %3211 = vmatmul.mubr.bf16.gmra.mxu0 %v3167
        %v3212 = vpop.f32.mrf.mxu0
        %v3213 = vadd.f32 0.0, %v3212
        %v3214 = vpop.f32.mrf.mxu0
        %v3215 = vadd.f32 0.0, %v3214
        %v3216 = vpop.f32.mrf.mxu0
        %v3217 = vpop.f32.mrf.mxu0
        %3218 = vdwg.mxu0
        %3219 = vmatprep.subr.bf16.mxu0 0
        %3220 = vmatpush1.bf16.msra.mxu0 0
        %3221 = vmatprep.subr.bf16.mxu0 0
        %3222 = vmatpush1.bf16.msra.mxu0 0
        %3223 = vmatprep.subr.bf16.mxu0 0
        %3224 = vmatpush1.bf16.msra.mxu0 0
        %3225 = vmatprep.subr.bf16.mxu0 0
        %3226 = vmatpush1.bf16.msra.mxu0 0
        %3227 = vmatprep.subr.bf16.mxu0 0
        %3228 = vmatpush1.bf16.msra.mxu0 0
        %3229 = vmatprep.subr.bf16.mxu0 0
        %3230 = vmatpush1.bf16.msra.mxu0 0
        %3231 = vmatprep.subr.bf16.mxu0 0
        %3232 = vmatpush1.bf16.msra.mxu0 0
        %3233 = vmatprep.subr.bf16.mxu0 0
        %3234 = vmatpush1.bf16.msra.mxu0 %v3176
        %3235 = vmatprep.subr.bf16.mxu0 0
        %3236 = vmatpush2.bf16.msra.mxu0 0
        %3237 = vmatprep.subr.bf16.mxu0 0
        %3238 = vmatpush2.bf16.msra.mxu0 0
        %3239 = vmatprep.subr.bf16.mxu0 0
        %3240 = vmatpush2.bf16.msra.mxu0 0
        %3241 = vmatprep.subr.bf16.mxu0 0
        %3242 = vmatpush2.bf16.msra.mxu0 0
        %3243 = vmatprep.subr.bf16.mxu0 0
        %3244 = vmatpush2.bf16.msra.mxu0 0
        %3245 = vmatprep.subr.bf16.mxu0 0
        %3246 = vmatpush2.bf16.msra.mxu0 0
        %3247 = vmatprep.subr.bf16.mxu0 0
        %3248 = vmatpush2.bf16.msra.mxu0 0
        %3249 = vmatprep.subr.bf16.mxu0 0
        %3250 = vmatpush2.bf16.msra.mxu0 0
        %3251 = vmatprep.mubr.bf16.mxu0 0
        %3252 = vmatmul.mubr.bf16.gmra.mxu0 %v3167
        %v3253 = vpop.f32.mrf.mxu0
        %v3254 = vadd.f32 0.0, %v3253
        %v3255 = vpop.f32.mrf.mxu0
        %v3256 = vpop.f32.mrf.mxu0
        %v3257 = vpop.f32.mrf.mxu0
        %3258 = vdwg.mxu0
        %v3259 = vadd.f32 %v3151, %v3213
        %v3260 = vadd.f32 %v3152, %v3215
        %v3261 = vadd.f32 %v3153, %v3254
        %3262 = vrot.lane.b32.xlu0 %v2074, 32
        %v3263 = vpop.permute.xlu0 %3262
        %3264 = vrot.lane.b32.xlu0 %v216, 124
        %v3265 = vpop.permute.xlu0 %3264
        %3266 = vrot.lane.b32.xlu0 %v217, 124
        %v3267 = vpop.permute.xlu0 %3266
        %3268 = vrot.lane.b32.xlu0 %v218, 124
        %v3269 = vpop.permute.xlu0 %3268
        %3270 = vrot.lane.b32.xlu0 %v219, 124
        %v3271 = vpop.permute.xlu0 %3270
        %vm3272 = vcmask 1014784
        %v3273 = vsel %vm3272, %v3265, %v3267
        %v3274 = vsel %vm3272, %v3267, %v3269
        %v3275 = vsel %vm3272, %v3269, %v3271
        %v3277 = vsel %vm232, %v3263, 0
        %v3280 = vsel %vm236, %v3273, 0
        %v3283 = vsel %vm236, %v3274, 0
        %v3286 = vsel %vm236, %v3275, 0
        %3288 = vmatprep.subr.bf16.mxu0 0
        %3289 = vmatpush1.bf16.msra.mxu0 0
        %3290 = vmatprep.subr.bf16.mxu0 0
        %3291 = vmatpush1.bf16.msra.mxu0 0
        %3292 = vmatprep.subr.bf16.mxu0 0
        %3293 = vmatpush1.bf16.msra.mxu0 0
        %3294 = vmatprep.subr.bf16.mxu0 0
        %3295 = vmatpush1.bf16.msra.mxu0 0
        %3296 = vmatprep.subr.bf16.mxu0 0
        %3297 = vmatpush1.bf16.msra.mxu0 0
        %3298 = vmatprep.subr.bf16.mxu0 0
        %3299 = vmatpush1.bf16.msra.mxu0 0
        %3300 = vmatprep.subr.bf16.mxu0 0
        %3301 = vmatpush1.bf16.msra.mxu0 0
        %3302 = vmatprep.subr.bf16.mxu0 %v3283
        %3303 = vmatpush1.bf16.msra.mxu0 %v3280
        %3304 = vmatprep.subr.bf16.mxu0 0
        %3305 = vmatpush2.bf16.msra.mxu0 0
        %3306 = vmatprep.subr.bf16.mxu0 0
        %3307 = vmatpush2.bf16.msra.mxu0 0
        %3308 = vmatprep.subr.bf16.mxu0 0
        %3309 = vmatpush2.bf16.msra.mxu0 0
        %3310 = vmatprep.subr.bf16.mxu0 0
        %3311 = vmatpush2.bf16.msra.mxu0 0
        %3312 = vmatprep.subr.bf16.mxu0 0
        %3313 = vmatpush2.bf16.msra.mxu0 0
        %3314 = vmatprep.subr.bf16.mxu0 0
        %3315 = vmatpush2.bf16.msra.mxu0 0
        %3316 = vmatprep.subr.bf16.mxu0 0
        %3317 = vmatpush2.bf16.msra.mxu0 0
        %3318 = vmatprep.subr.bf16.mxu0 0
        %3319 = vmatpush2.bf16.msra.mxu0 0
        %3320 = vmatprep.mubr.bf16.mxu0 0
        %3321 = vmatmul.mubr.bf16.gmra.mxu0 %v3277
        %v3322 = vpop.f32.mrf.mxu0
        %v3323 = vadd.f32 0.0, %v3322
        %v3324 = vpop.f32.mrf.mxu0
        %v3325 = vadd.f32 0.0, %v3324
        %v3326 = vpop.f32.mrf.mxu0
        %v3327 = vpop.f32.mrf.mxu0
        %3328 = vdwg.mxu0
        %3329 = vmatprep.subr.bf16.mxu0 0
        %3330 = vmatpush1.bf16.msra.mxu0 0
        %3331 = vmatprep.subr.bf16.mxu0 0
        %3332 = vmatpush1.bf16.msra.mxu0 0
        %3333 = vmatprep.subr.bf16.mxu0 0
        %3334 = vmatpush1.bf16.msra.mxu0 0
        %3335 = vmatprep.subr.bf16.mxu0 0
        %3336 = vmatpush1.bf16.msra.mxu0 0
        %3337 = vmatprep.subr.bf16.mxu0 0
        %3338 = vmatpush1.bf16.msra.mxu0 0
        %3339 = vmatprep.subr.bf16.mxu0 0
        %3340 = vmatpush1.bf16.msra.mxu0 0
        %3341 = vmatprep.subr.bf16.mxu0 0
        %3342 = vmatpush1.bf16.msra.mxu0 0
        %3343 = vmatprep.subr.bf16.mxu0 0
        %3344 = vmatpush1.bf16.msra.mxu0 %v3286
        %3345 = vmatprep.subr.bf16.mxu0 0
        %3346 = vmatpush2.bf16.msra.mxu0 0
        %3347 = vmatprep.subr.bf16.mxu0 0
        %3348 = vmatpush2.bf16.msra.mxu0 0
        %3349 = vmatprep.subr.bf16.mxu0 0
        %3350 = vmatpush2.bf16.msra.mxu0 0
        %3351 = vmatprep.subr.bf16.mxu0 0
        %3352 = vmatpush2.bf16.msra.mxu0 0
        %3353 = vmatprep.subr.bf16.mxu0 0
        %3354 = vmatpush2.bf16.msra.mxu0 0
        %3355 = vmatprep.subr.bf16.mxu0 0
        %3356 = vmatpush2.bf16.msra.mxu0 0
        %3357 = vmatprep.subr.bf16.mxu0 0
        %3358 = vmatpush2.bf16.msra.mxu0 0
        %3359 = vmatprep.subr.bf16.mxu0 0
        %3360 = vmatpush2.bf16.msra.mxu0 0
        %3361 = vmatprep.mubr.bf16.mxu0 0
        %3362 = vmatmul.mubr.bf16.gmra.mxu0 %v3277
        %v3363 = vpop.f32.mrf.mxu0
        %v3364 = vadd.f32 0.0, %v3363
        %v3365 = vpop.f32.mrf.mxu0
        %v3366 = vpop.f32.mrf.mxu0
        %v3367 = vpop.f32.mrf.mxu0
        %3368 = vdwg.mxu0
        %v3369 = vadd.f32 %v3259, %v3323
        %v3370 = vadd.f32 %v3260, %v3325
        %v3371 = vadd.f32 %v3261, %v3364
        %3372 = vrot.lane.b32.xlu0 %v2074, 24
        %v3373 = vpop.permute.xlu0 %3372
        %3374 = vrot.lane.b32.xlu0 %v216, 120
        %v3375 = vpop.permute.xlu0 %3374
        %3376 = vrot.lane.b32.xlu0 %v217, 120
        %v3377 = vpop.permute.xlu0 %3376
        %3378 = vrot.lane.b32.xlu0 %v218, 120
        %v3379 = vpop.permute.xlu0 %3378
        %3380 = vrot.lane.b32.xlu0 %v219, 120
        %v3381 = vpop.permute.xlu0 %3380
        %vm3382 = vcmask 982016
        %v3383 = vsel %vm3382, %v3375, %v3377
        %v3384 = vsel %vm3382, %v3377, %v3379
        %v3385 = vsel %vm3382, %v3379, %v3381
        %v3387 = vsel %vm232, %v3373, 0
        %v3390 = vsel %vm236, %v3383, 0
        %v3393 = vsel %vm236, %v3384, 0
        %v3396 = vsel %vm236, %v3385, 0
        %3398 = vmatprep.subr.bf16.mxu0 0
        %3399 = vmatpush1.bf16.msra.mxu0 0
        %3400 = vmatprep.subr.bf16.mxu0 0
        %3401 = vmatpush1.bf16.msra.mxu0 0
        %3402 = vmatprep.subr.bf16.mxu0 0
        %3403 = vmatpush1.bf16.msra.mxu0 0
        %3404 = vmatprep.subr.bf16.mxu0 0
        %3405 = vmatpush1.bf16.msra.mxu0 0
        %3406 = vmatprep.subr.bf16.mxu0 0
        %3407 = vmatpush1.bf16.msra.mxu0 0
        %3408 = vmatprep.subr.bf16.mxu0 0
        %3409 = vmatpush1.bf16.msra.mxu0 0
        %3410 = vmatprep.subr.bf16.mxu0 0
        %3411 = vmatpush1.bf16.msra.mxu0 0
        %3412 = vmatprep.subr.bf16.mxu0 %v3393
        %3413 = vmatpush1.bf16.msra.mxu0 %v3390
        %3414 = vmatprep.subr.bf16.mxu0 0
        %3415 = vmatpush2.bf16.msra.mxu0 0
        %3416 = vmatprep.subr.bf16.mxu0 0
        %3417 = vmatpush2.bf16.msra.mxu0 0
        %3418 = vmatprep.subr.bf16.mxu0 0
        %3419 = vmatpush2.bf16.msra.mxu0 0
        %3420 = vmatprep.subr.bf16.mxu0 0
        %3421 = vmatpush2.bf16.msra.mxu0 0
        %3422 = vmatprep.subr.bf16.mxu0 0
        %3423 = vmatpush2.bf16.msra.mxu0 0
        %3424 = vmatprep.subr.bf16.mxu0 0
        %3425 = vmatpush2.bf16.msra.mxu0 0
        %3426 = vmatprep.subr.bf16.mxu0 0
        %3427 = vmatpush2.bf16.msra.mxu0 0
        %3428 = vmatprep.subr.bf16.mxu0 0
        %3429 = vmatpush2.bf16.msra.mxu0 0
        %3430 = vmatprep.mubr.bf16.mxu0 0
        %3431 = vmatmul.mubr.bf16.gmra.mxu0 %v3387
        %v3432 = vpop.f32.mrf.mxu0
        %v3433 = vadd.f32 0.0, %v3432
        %v3434 = vpop.f32.mrf.mxu0
        %v3435 = vadd.f32 0.0, %v3434
        %v3436 = vpop.f32.mrf.mxu0
        %v3437 = vpop.f32.mrf.mxu0
        %3438 = vdwg.mxu0
        %3439 = vmatprep.subr.bf16.mxu0 0
        %3440 = vmatpush1.bf16.msra.mxu0 0
        %3441 = vmatprep.subr.bf16.mxu0 0
        %3442 = vmatpush1.bf16.msra.mxu0 0
        %3443 = vmatprep.subr.bf16.mxu0 0
        %3444 = vmatpush1.bf16.msra.mxu0 0
        %3445 = vmatprep.subr.bf16.mxu0 0
        %3446 = vmatpush1.bf16.msra.mxu0 0
        %3447 = vmatprep.subr.bf16.mxu0 0
        %3448 = vmatpush1.bf16.msra.mxu0 0
        %3449 = vmatprep.subr.bf16.mxu0 0
        %3450 = vmatpush1.bf16.msra.mxu0 0
        %3451 = vmatprep.subr.bf16.mxu0 0
        %3452 = vmatpush1.bf16.msra.mxu0 0
        %3453 = vmatprep.subr.bf16.mxu0 0
        %3454 = vmatpush1.bf16.msra.mxu0 %v3396
        %3455 = vmatprep.subr.bf16.mxu0 0
        %3456 = vmatpush2.bf16.msra.mxu0 0
        %3457 = vmatprep.subr.bf16.mxu0 0
        %3458 = vmatpush2.bf16.msra.mxu0 0
        %3459 = vmatprep.subr.bf16.mxu0 0
        %3460 = vmatpush2.bf16.msra.mxu0 0
        %3461 = vmatprep.subr.bf16.mxu0 0
        %3462 = vmatpush2.bf16.msra.mxu0 0
        %3463 = vmatprep.subr.bf16.mxu0 0
        %3464 = vmatpush2.bf16.msra.mxu0 0
        %3465 = vmatprep.subr.bf16.mxu0 0
        %3466 = vmatpush2.bf16.msra.mxu0 0
        %3467 = vmatprep.subr.bf16.mxu0 0
        %3468 = vmatpush2.bf16.msra.mxu0 0
        %3469 = vmatprep.subr.bf16.mxu0 0
        %3470 = vmatpush2.bf16.msra.mxu0 0
        %3471 = vmatprep.mubr.bf16.mxu0 0
        %3472 = vmatmul.mubr.bf16.gmra.mxu0 %v3387
        %v3473 = vpop.f32.mrf.mxu0
        %v3474 = vadd.f32 0.0, %v3473
        %v3475 = vpop.f32.mrf.mxu0
        %v3476 = vpop.f32.mrf.mxu0
        %v3477 = vpop.f32.mrf.mxu0
        %3478 = vdwg.mxu0
        %v3479 = vadd.f32 %v3369, %v3433
        %v3480 = vadd.f32 %v3370, %v3435
        %v3481 = vadd.f32 %v3371, %v3474
        %3482 = vrot.lane.b32.xlu0 %v2074, 16
        %v3483 = vpop.permute.xlu0 %3482
        %3484 = vrot.lane.b32.xlu0 %v216, 32
        %v3485 = vpop.permute.xlu0 %3484
        %3486 = vrot.lane.b32.xlu0 %v217, 32
        %v3487 = vpop.permute.xlu0 %3486
        %3488 = vrot.lane.b32.xlu0 %v218, 32
        %v3489 = vpop.permute.xlu0 %3488
        %3490 = vrot.lane.b32.xlu0 %v219, 32
        %v3491 = vpop.permute.xlu0 %3490
        %vm3492 = vcmask 261120
        %v3493 = vsel %vm3492, %v3485, %v3487
        %v3494 = vsel %vm3492, %v3487, %v3489
        %v3495 = vsel %vm3492, %v3489, %v3491
        %v3497 = vsel %vm232, %v3483, 0
        %v3500 = vsel %vm236, %v3493, 0
        %v3503 = vsel %vm236, %v3494, 0
        %v3506 = vsel %vm236, %v3495, 0
        %3508 = vmatprep.subr.bf16.mxu0 0
        %3509 = vmatpush1.bf16.msra.mxu0 0
        %3510 = vmatprep.subr.bf16.mxu0 0
        %3511 = vmatpush1.bf16.msra.mxu0 0
        %3512 = vmatprep.subr.bf16.mxu0 0
        %3513 = vmatpush1.bf16.msra.mxu0 0
        %3514 = vmatprep.subr.bf16.mxu0 0
        %3515 = vmatpush1.bf16.msra.mxu0 0
        %3516 = vmatprep.subr.bf16.mxu0 0
        %3517 = vmatpush1.bf16.msra.mxu0 0
        %3518 = vmatprep.subr.bf16.mxu0 0
        %3519 = vmatpush1.bf16.msra.mxu0 0
        %3520 = vmatprep.subr.bf16.mxu0 0
        %3521 = vmatpush1.bf16.msra.mxu0 0
        %3522 = vmatprep.subr.bf16.mxu0 %v3503
        %3523 = vmatpush1.bf16.msra.mxu0 %v3500
        %3524 = vmatprep.subr.bf16.mxu0 0
        %3525 = vmatpush2.bf16.msra.mxu0 0
        %3526 = vmatprep.subr.bf16.mxu0 0
        %3527 = vmatpush2.bf16.msra.mxu0 0
        %3528 = vmatprep.subr.bf16.mxu0 0
        %3529 = vmatpush2.bf16.msra.mxu0 0
        %3530 = vmatprep.subr.bf16.mxu0 0
        %3531 = vmatpush2.bf16.msra.mxu0 0
        %3532 = vmatprep.subr.bf16.mxu0 0
        %3533 = vmatpush2.bf16.msra.mxu0 0
        %3534 = vmatprep.subr.bf16.mxu0 0
        %3535 = vmatpush2.bf16.msra.mxu0 0
        %3536 = vmatprep.subr.bf16.mxu0 0
        %3537 = vmatpush2.bf16.msra.mxu0 0
        %3538 = vmatprep.subr.bf16.mxu0 0
        %3539 = vmatpush2.bf16.msra.mxu0 0
        %3540 = vmatprep.mubr.bf16.mxu0 0
        %3541 = vmatmul.mubr.bf16.gmra.mxu0 %v3497
        %v3542 = vpop.f32.mrf.mxu0
        %v3543 = vadd.f32 0.0, %v3542
        %v3544 = vpop.f32.mrf.mxu0
        %v3545 = vadd.f32 0.0, %v3544
        %v3546 = vpop.f32.mrf.mxu0
        %v3547 = vpop.f32.mrf.mxu0
        %3548 = vdwg.mxu0
        %3549 = vmatprep.subr.bf16.mxu0 0
        %3550 = vmatpush1.bf16.msra.mxu0 0
        %3551 = vmatprep.subr.bf16.mxu0 0
        %3552 = vmatpush1.bf16.msra.mxu0 0
        %3553 = vmatprep.subr.bf16.mxu0 0
        %3554 = vmatpush1.bf16.msra.mxu0 0
        %3555 = vmatprep.subr.bf16.mxu0 0
        %3556 = vmatpush1.bf16.msra.mxu0 0
        %3557 = vmatprep.subr.bf16.mxu0 0
        %3558 = vmatpush1.bf16.msra.mxu0 0
        %3559 = vmatprep.subr.bf16.mxu0 0
        %3560 = vmatpush1.bf16.msra.mxu0 0
        %3561 = vmatprep.subr.bf16.mxu0 0
        %3562 = vmatpush1.bf16.msra.mxu0 0
        %3563 = vmatprep.subr.bf16.mxu0 0
        %3564 = vmatpush1.bf16.msra.mxu0 %v3506
        %3565 = vmatprep.subr.bf16.mxu0 0
        %3566 = vmatpush2.bf16.msra.mxu0 0
        %3567 = vmatprep.subr.bf16.mxu0 0
        %3568 = vmatpush2.bf16.msra.mxu0 0
        %3569 = vmatprep.subr.bf16.mxu0 0
        %3570 = vmatpush2.bf16.msra.mxu0 0
        %3571 = vmatprep.subr.bf16.mxu0 0
        %3572 = vmatpush2.bf16.msra.mxu0 0
        %3573 = vmatprep.subr.bf16.mxu0 0
        %3574 = vmatpush2.bf16.msra.mxu0 0
        %3575 = vmatprep.subr.bf16.mxu0 0
        %3576 = vmatpush2.bf16.msra.mxu0 0
        %3577 = vmatprep.subr.bf16.mxu0 0
        %3578 = vmatpush2.bf16.msra.mxu0 0
        %3579 = vmatprep.subr.bf16.mxu0 0
        %3580 = vmatpush2.bf16.msra.mxu0 0
        %3581 = vmatprep.mubr.bf16.mxu0 0
        %3582 = vmatmul.mubr.bf16.gmra.mxu0 %v3497
        %v3583 = vpop.f32.mrf.mxu0
        %v3584 = vadd.f32 0.0, %v3583
        %v3585 = vpop.f32.mrf.mxu0
        %v3586 = vpop.f32.mrf.mxu0
        %v3587 = vpop.f32.mrf.mxu0
        %3588 = vdwg.mxu0
        %v3589 = vadd.f32 %v3479, %v3543
        %v3590 = vadd.f32 %v3480, %v3545
        %v3591 = vadd.f32 %v3481, %v3584
        %3592 = vrot.lane.b32.xlu0 %v2074, 8
        %v3593 = vpop.permute.xlu0 %3592
        %v3595 = vsel %vm232, %v3593, 0
        %3597 = vmatprep.subr.bf16.mxu0 0
        %3598 = vmatpush1.bf16.msra.mxu0 0
        %3599 = vmatprep.subr.bf16.mxu0 0
        %3600 = vmatpush1.bf16.msra.mxu0 0
        %3601 = vmatprep.subr.bf16.mxu0 0
        %3602 = vmatpush1.bf16.msra.mxu0 0
        %3603 = vmatprep.subr.bf16.mxu0 0
        %3604 = vmatpush1.bf16.msra.mxu0 0
        %3605 = vmatprep.subr.bf16.mxu0 0
        %3606 = vmatpush1.bf16.msra.mxu0 0
        %3607 = vmatprep.subr.bf16.mxu0 0
        %3608 = vmatpush1.bf16.msra.mxu0 0
        %3609 = vmatprep.subr.bf16.mxu0 0
        %3610 = vmatpush1.bf16.msra.mxu0 0
        %3611 = vmatprep.subr.bf16.mxu0 %v673
        %3612 = vmatpush1.bf16.msra.mxu0 %v670
        %3613 = vmatprep.subr.bf16.mxu0 0
        %3614 = vmatpush2.bf16.msra.mxu0 0
        %3615 = vmatprep.subr.bf16.mxu0 0
        %3616 = vmatpush2.bf16.msra.mxu0 0
        %3617 = vmatprep.subr.bf16.mxu0 0
        %3618 = vmatpush2.bf16.msra.mxu0 0
        %3619 = vmatprep.subr.bf16.mxu0 0
        %3620 = vmatpush2.bf16.msra.mxu0 0
        %3621 = vmatprep.subr.bf16.mxu0 0
        %3622 = vmatpush2.bf16.msra.mxu0 0
        %3623 = vmatprep.subr.bf16.mxu0 0
        %3624 = vmatpush2.bf16.msra.mxu0 0
        %3625 = vmatprep.subr.bf16.mxu0 0
        %3626 = vmatpush2.bf16.msra.mxu0 0
        %3627 = vmatprep.subr.bf16.mxu0 0
        %3628 = vmatpush2.bf16.msra.mxu0 0
        %3629 = vmatprep.mubr.bf16.mxu0 0
        %3630 = vmatmul.mubr.bf16.gmra.mxu0 %v3595
        %v3631 = vpop.f32.mrf.mxu0
        %v3632 = vadd.f32 0.0, %v3631
        %v3633 = vpop.f32.mrf.mxu0
        %v3634 = vadd.f32 0.0, %v3633
        %v3635 = vpop.f32.mrf.mxu0
        %v3636 = vpop.f32.mrf.mxu0
        %3637 = vdwg.mxu0
        %3638 = vmatprep.subr.bf16.mxu0 0
        %3639 = vmatpush1.bf16.msra.mxu0 0
        %3640 = vmatprep.subr.bf16.mxu0 0
        %3641 = vmatpush1.bf16.msra.mxu0 0
        %3642 = vmatprep.subr.bf16.mxu0 0
        %3643 = vmatpush1.bf16.msra.mxu0 0
        %3644 = vmatprep.subr.bf16.mxu0 0
        %3645 = vmatpush1.bf16.msra.mxu0 0
        %3646 = vmatprep.subr.bf16.mxu0 0
        %3647 = vmatpush1.bf16.msra.mxu0 0
        %3648 = vmatprep.subr.bf16.mxu0 0
        %3649 = vmatpush1.bf16.msra.mxu0 0
        %3650 = vmatprep.subr.bf16.mxu0 0
        %3651 = vmatpush1.bf16.msra.mxu0 0
        %3652 = vmatprep.subr.bf16.mxu0 0
        %3653 = vmatpush1.bf16.msra.mxu0 %v676
        %3654 = vmatprep.subr.bf16.mxu0 0
        %3655 = vmatpush2.bf16.msra.mxu0 0
        %3656 = vmatprep.subr.bf16.mxu0 0
        %3657 = vmatpush2.bf16.msra.mxu0 0
        %3658 = vmatprep.subr.bf16.mxu0 0
        %3659 = vmatpush2.bf16.msra.mxu0 0
        %3660 = vmatprep.subr.bf16.mxu0 0
        %3661 = vmatpush2.bf16.msra.mxu0 0
        %3662 = vmatprep.subr.bf16.mxu0 0
        %3663 = vmatpush2.bf16.msra.mxu0 0
        %3664 = vmatprep.subr.bf16.mxu0 0
        %3665 = vmatpush2.bf16.msra.mxu0 0
        %3666 = vmatprep.subr.bf16.mxu0 0
        %3667 = vmatpush2.bf16.msra.mxu0 0
        %3668 = vmatprep.subr.bf16.mxu0 0
        %3669 = vmatpush2.bf16.msra.mxu0 0
        %3670 = vmatprep.mubr.bf16.mxu0 0
        %3671 = vmatmul.mubr.bf16.gmra.mxu0 %v3595
        %v3672 = vpop.f32.mrf.mxu0
        %v3673 = vadd.f32 0.0, %v3672
        %v3674 = vpop.f32.mrf.mxu0
        %v3675 = vpop.f32.mrf.mxu0
        %v3676 = vpop.f32.mrf.mxu0
        %3677 = vdwg.mxu0
        %v3678 = vadd.f32 %v3589, %v3632
        %v3679 = vadd.f32 %v3590, %v3634
        %v3680 = vadd.f32 %v3591, %v3673
        %v3681 = vld [vmem:[#allocation5 + $0x8] sm:$0xf]
        %3682 = vrot.lane.b32.xlu0 %v216, 24
        %v3683 = vpop.permute.xlu0 %3682
        %3684 = vrot.lane.b32.xlu0 %v217, 24
        %v3685 = vpop.permute.xlu0 %3684
        %3686 = vrot.lane.b32.xlu0 %v218, 24
        %v3687 = vpop.permute.xlu0 %3686
        %3688 = vrot.lane.b32.xlu0 %v219, 24
        %v3689 = vpop.permute.xlu0 %3688
        %vm3690 = vcmask 195584
        %v3691 = vsel %vm3690, %v3683, %v3685
        %v3692 = vsel %vm3690, %v3685, %v3687
        %v3693 = vsel %vm3690, %v3687, %v3689
        %v3695 = vsel %vm232, %v3681, 0
        %v3698 = vsel %vm236, %v3691, 0
        %v3701 = vsel %vm236, %v3692, 0
        %v3704 = vsel %vm236, %v3693, 0
        %3706 = vmatprep.subr.bf16.mxu0 0
        %3707 = vmatpush1.bf16.msra.mxu0 0
        %3708 = vmatprep.subr.bf16.mxu0 0
        %3709 = vmatpush1.bf16.msra.mxu0 0
        %3710 = vmatprep.subr.bf16.mxu0 0
        %3711 = vmatpush1.bf16.msra.mxu0 0
        %3712 = vmatprep.subr.bf16.mxu0 0
        %3713 = vmatpush1.bf16.msra.mxu0 0
        %3714 = vmatprep.subr.bf16.mxu0 0
        %3715 = vmatpush1.bf16.msra.mxu0 0
        %3716 = vmatprep.subr.bf16.mxu0 0
        %3717 = vmatpush1.bf16.msra.mxu0 0
        %3718 = vmatprep.subr.bf16.mxu0 0
        %3719 = vmatpush1.bf16.msra.mxu0 0
        %3720 = vmatprep.subr.bf16.mxu0 %v3701
        %3721 = vmatpush1.bf16.msra.mxu0 %v3698
        %3722 = vmatprep.subr.bf16.mxu0 0
        %3723 = vmatpush2.bf16.msra.mxu0 0
        %3724 = vmatprep.subr.bf16.mxu0 0
        %3725 = vmatpush2.bf16.msra.mxu0 0
        %3726 = vmatprep.subr.bf16.mxu0 0
        %3727 = vmatpush2.bf16.msra.mxu0 0
        %3728 = vmatprep.subr.bf16.mxu0 0
        %3729 = vmatpush2.bf16.msra.mxu0 0
        %3730 = vmatprep.subr.bf16.mxu0 0
        %3731 = vmatpush2.bf16.msra.mxu0 0
        %3732 = vmatprep.subr.bf16.mxu0 0
        %3733 = vmatpush2.bf16.msra.mxu0 0
        %3734 = vmatprep.subr.bf16.mxu0 0
        %3735 = vmatpush2.bf16.msra.mxu0 0
        %3736 = vmatprep.subr.bf16.mxu0 0
        %3737 = vmatpush2.bf16.msra.mxu0 0
        %3738 = vmatprep.mubr.bf16.mxu0 0
        %3739 = vmatmul.mubr.bf16.gmra.mxu0 %v3695
        %v3740 = vpop.f32.mrf.mxu0
        %v3741 = vadd.f32 0.0, %v3740
        %v3742 = vpop.f32.mrf.mxu0
        %v3743 = vadd.f32 0.0, %v3742
        %v3744 = vpop.f32.mrf.mxu0
        %v3745 = vpop.f32.mrf.mxu0
        %3746 = vdwg.mxu0
        %3747 = vmatprep.subr.bf16.mxu0 0
        %3748 = vmatpush1.bf16.msra.mxu0 0
        %3749 = vmatprep.subr.bf16.mxu0 0
        %3750 = vmatpush1.bf16.msra.mxu0 0
        %3751 = vmatprep.subr.bf16.mxu0 0
        %3752 = vmatpush1.bf16.msra.mxu0 0
        %3753 = vmatprep.subr.bf16.mxu0 0
        %3754 = vmatpush1.bf16.msra.mxu0 0
        %3755 = vmatprep.subr.bf16.mxu0 0
        %3756 = vmatpush1.bf16.msra.mxu0 0
        %3757 = vmatprep.subr.bf16.mxu0 0
        %3758 = vmatpush1.bf16.msra.mxu0 0
        %3759 = vmatprep.subr.bf16.mxu0 0
        %3760 = vmatpush1.bf16.msra.mxu0 0
        %3761 = vmatprep.subr.bf16.mxu0 0
        %3762 = vmatpush1.bf16.msra.mxu0 %v3704
        %3763 = vmatprep.subr.bf16.mxu0 0
        %3764 = vmatpush2.bf16.msra.mxu0 0
        %3765 = vmatprep.subr.bf16.mxu0 0
        %3766 = vmatpush2.bf16.msra.mxu0 0
        %3767 = vmatprep.subr.bf16.mxu0 0
        %3768 = vmatpush2.bf16.msra.mxu0 0
        %3769 = vmatprep.subr.bf16.mxu0 0
        %3770 = vmatpush2.bf16.msra.mxu0 0
        %3771 = vmatprep.subr.bf16.mxu0 0
        %3772 = vmatpush2.bf16.msra.mxu0 0
        %3773 = vmatprep.subr.bf16.mxu0 0
        %3774 = vmatpush2.bf16.msra.mxu0 0
        %3775 = vmatprep.subr.bf16.mxu0 0
        %3776 = vmatpush2.bf16.msra.mxu0 0
        %3777 = vmatprep.subr.bf16.mxu0 0
        %3778 = vmatpush2.bf16.msra.mxu0 0
        %3779 = vmatprep.mubr.bf16.mxu0 0
        %3780 = vmatmul.mubr.bf16.gmra.mxu0 %v3695
        %v3781 = vpop.f32.mrf.mxu0
        %v3782 = vadd.f32 0.0, %v3781
        %v3783 = vpop.f32.mrf.mxu0
        %v3784 = vpop.f32.mrf.mxu0
        %v3785 = vpop.f32.mrf.mxu0
        %3786 = vdwg.mxu0
        %v3787 = vadd.f32 %v3678, %v3741
        %v3788 = vadd.f32 %v3679, %v3743
        %v3789 = vadd.f32 %v3680, %v3782
        %v3791 = vunpack.c.l.b16 %v3681
        %v3792 = vpack.c.b16 %v3791, %v3791
        %3793 = vrot.lane.b32.xlu0 %v3792, 120
        %v3794 = vpop.permute.xlu0 %3793
        %3795 = vrot.lane.b32.xlu0 %v1851, 64
        %v3796 = vpop.permute.xlu0 %3795
        %3797 = vrot.lane.b32.xlu0 %v1852, 64
        %v3798 = vpop.permute.xlu0 %3797
        %3799 = vrot.lane.b32.xlu0 %v1853, 64
        %v3800 = vpop.permute.xlu0 %3799
        %3801 = vrot.lane.b32.xlu0 %v1854, 64
        %v3802 = vpop.permute.xlu0 %3801
        %vm3803 = vcmask 523264
        %v3804 = vsel %vm3803, %v3796, %v3798
        %v3805 = vsel %vm3803, %v3798, %v3800
        %v3806 = vsel %vm3803, %v3800, %v3802
        %v3808 = vsel %vm232, %v3794, 0
        %v3811 = vsel %vm236, %v3804, 0
        %v3814 = vsel %vm236, %v3805, 0
        %v3817 = vsel %vm236, %v3806, 0
        %3819 = vmatprep.subr.bf16.mxu0 0
        %3820 = vmatpush1.bf16.msra.mxu0 0
        %3821 = vmatprep.subr.bf16.mxu0 0
        %3822 = vmatpush1.bf16.msra.mxu0 0
        %3823 = vmatprep.subr.bf16.mxu0 0
        %3824 = vmatpush1.bf16.msra.mxu0 0
        %3825 = vmatprep.subr.bf16.mxu0 0
        %3826 = vmatpush1.bf16.msra.mxu0 0
        %3827 = vmatprep.subr.bf16.mxu0 0
        %3828 = vmatpush1.bf16.msra.mxu0 0
        %3829 = vmatprep.subr.bf16.mxu0 0
        %3830 = vmatpush1.bf16.msra.mxu0 0
        %3831 = vmatprep.subr.bf16.mxu0 0
        %3832 = vmatpush1.bf16.msra.mxu0 0
        %3833 = vmatprep.subr.bf16.mxu0 %v3814
        %3834 = vmatpush1.bf16.msra.mxu0 %v3811
        %3835 = vmatprep.subr.bf16.mxu0 0
        %3836 = vmatpush2.bf16.msra.mxu0 0
        %3837 = vmatprep.subr.bf16.mxu0 0
        %3838 = vmatpush2.bf16.msra.mxu0 0
        %3839 = vmatprep.subr.bf16.mxu0 0
        %3840 = vmatpush2.bf16.msra.mxu0 0
        %3841 = vmatprep.subr.bf16.mxu0 0
        %3842 = vmatpush2.bf16.msra.mxu0 0
        %3843 = vmatprep.subr.bf16.mxu0 0
        %3844 = vmatpush2.bf16.msra.mxu0 0
        %3845 = vmatprep.subr.bf16.mxu0 0
        %3846 = vmatpush2.bf16.msra.mxu0 0
        %3847 = vmatprep.subr.bf16.mxu0 0
        %3848 = vmatpush2.bf16.msra.mxu0 0
        %3849 = vmatprep.subr.bf16.mxu0 0
        %3850 = vmatpush2.bf16.msra.mxu0 0
        %3851 = vmatprep.mubr.bf16.mxu0 0
        %3852 = vmatmul.mubr.bf16.gmra.mxu0 %v3808
        %v3853 = vpop.f32.mrf.mxu0
        %v3854 = vadd.f32 0.0, %v3853
        %v3855 = vpop.f32.mrf.mxu0
        %v3856 = vadd.f32 0.0, %v3855
        %v3857 = vpop.f32.mrf.mxu0
        %v3858 = vpop.f32.mrf.mxu0
        %3859 = vdwg.mxu0
        %3860 = vmatprep.subr.bf16.mxu0 0
        %3861 = vmatpush1.bf16.msra.mxu0 0
        %3862 = vmatprep.subr.bf16.mxu0 0
        %3863 = vmatpush1.bf16.msra.mxu0 0
        %3864 = vmatprep.subr.bf16.mxu0 0
        %3865 = vmatpush1.bf16.msra.mxu0 0
        %3866 = vmatprep.subr.bf16.mxu0 0
        %3867 = vmatpush1.bf16.msra.mxu0 0
        %3868 = vmatprep.subr.bf16.mxu0 0
        %3869 = vmatpush1.bf16.msra.mxu0 0
        %3870 = vmatprep.subr.bf16.mxu0 0
        %3871 = vmatpush1.bf16.msra.mxu0 0
        %3872 = vmatprep.subr.bf16.mxu0 0
        %3873 = vmatpush1.bf16.msra.mxu0 0
        %3874 = vmatprep.subr.bf16.mxu0 0
        %3875 = vmatpush1.bf16.msra.mxu0 %v3817
        %3876 = vmatprep.subr.bf16.mxu0 0
        %3877 = vmatpush2.bf16.msra.mxu0 0
        %3878 = vmatprep.subr.bf16.mxu0 0
        %3879 = vmatpush2.bf16.msra.mxu0 0
        %3880 = vmatprep.subr.bf16.mxu0 0
        %3881 = vmatpush2.bf16.msra.mxu0 0
        %3882 = vmatprep.subr.bf16.mxu0 0
        %3883 = vmatpush2.bf16.msra.mxu0 0
        %3884 = vmatprep.subr.bf16.mxu0 0
        %3885 = vmatpush2.bf16.msra.mxu0 0
        %3886 = vmatprep.subr.bf16.mxu0 0
        %3887 = vmatpush2.bf16.msra.mxu0 0
        %3888 = vmatprep.subr.bf16.mxu0 0
        %3889 = vmatpush2.bf16.msra.mxu0 0
        %3890 = vmatprep.subr.bf16.mxu0 0
        %3891 = vmatpush2.bf16.msra.mxu0 0
        %3892 = vmatprep.mubr.bf16.mxu0 0
        %3893 = vmatmul.mubr.bf16.gmra.mxu0 %v3808
        %v3894 = vpop.f32.mrf.mxu0
        %v3895 = vadd.f32 0.0, %v3894
        %v3896 = vpop.f32.mrf.mxu0
        %v3897 = vpop.f32.mrf.mxu0
        %v3898 = vpop.f32.mrf.mxu0
        %3899 = vdwg.mxu0
        %v3900 = vadd.f32 %v3787, %v3854
        %v3901 = vadd.f32 %v3788, %v3856
        %v3902 = vadd.f32 %v3789, %v3895
        %3903 = vrot.lane.b32.xlu0 %v3792, 112
        %v3904 = vpop.permute.xlu0 %3903
        %3905 = vrot.lane.b32.xlu0 %v1851, 60
        %v3906 = vpop.permute.xlu0 %3905
        %3907 = vrot.lane.b32.xlu0 %v1852, 60
        %v3908 = vpop.permute.xlu0 %3907
        %3909 = vrot.lane.b32.xlu0 %v1853, 60
        %v3910 = vpop.permute.xlu0 %3909
        %3911 = vrot.lane.b32.xlu0 %v1854, 60
        %v3912 = vpop.permute.xlu0 %3911
        %vm3913 = vcmask 490496
        %v3914 = vsel %vm3913, %v3906, %v3908
        %v3915 = vsel %vm3913, %v3908, %v3910
        %v3916 = vsel %vm3913, %v3910, %v3912
        %v3918 = vsel %vm232, %v3904, 0
        %v3921 = vsel %vm236, %v3914, 0
        %v3924 = vsel %vm236, %v3915, 0
        %v3927 = vsel %vm236, %v3916, 0
        %3929 = vmatprep.subr.bf16.mxu0 0
        %3930 = vmatpush1.bf16.msra.mxu0 0
        %3931 = vmatprep.subr.bf16.mxu0 0
        %3932 = vmatpush1.bf16.msra.mxu0 0
        %3933 = vmatprep.subr.bf16.mxu0 0
        %3934 = vmatpush1.bf16.msra.mxu0 0
        %3935 = vmatprep.subr.bf16.mxu0 0
        %3936 = vmatpush1.bf16.msra.mxu0 0
        %3937 = vmatprep.subr.bf16.mxu0 0
        %3938 = vmatpush1.bf16.msra.mxu0 0
        %3939 = vmatprep.subr.bf16.mxu0 0
        %3940 = vmatpush1.bf16.msra.mxu0 0
        %3941 = vmatprep.subr.bf16.mxu0 0
        %3942 = vmatpush1.bf16.msra.mxu0 0
        %3943 = vmatprep.subr.bf16.mxu0 %v3924
        %3944 = vmatpush1.bf16.msra.mxu0 %v3921
        %3945 = vmatprep.subr.bf16.mxu0 0
        %3946 = vmatpush2.bf16.msra.mxu0 0
        %3947 = vmatprep.subr.bf16.mxu0 0
        %3948 = vmatpush2.bf16.msra.mxu0 0
        %3949 = vmatprep.subr.bf16.mxu0 0
        %3950 = vmatpush2.bf16.msra.mxu0 0
        %3951 = vmatprep.subr.bf16.mxu0 0
        %3952 = vmatpush2.bf16.msra.mxu0 0
        %3953 = vmatprep.subr.bf16.mxu0 0
        %3954 = vmatpush2.bf16.msra.mxu0 0
        %3955 = vmatprep.subr.bf16.mxu0 0
        %3956 = vmatpush2.bf16.msra.mxu0 0
        %3957 = vmatprep.subr.bf16.mxu0 0
        %3958 = vmatpush2.bf16.msra.mxu0 0
        %3959 = vmatprep.subr.bf16.mxu0 0
        %3960 = vmatpush2.bf16.msra.mxu0 0
        %3961 = vmatprep.mubr.bf16.mxu0 0
        %3962 = vmatmul.mubr.bf16.gmra.mxu0 %v3918
        %v3963 = vpop.f32.mrf.mxu0
        %v3964 = vadd.f32 0.0, %v3963
        %v3965 = vpop.f32.mrf.mxu0
        %v3966 = vadd.f32 0.0, %v3965
        %v3967 = vpop.f32.mrf.mxu0
        %v3968 = vpop.f32.mrf.mxu0
        %3969 = vdwg.mxu0
        %3970 = vmatprep.subr.bf16.mxu0 0
        %3971 = vmatpush1.bf16.msra.mxu0 0
        %3972 = vmatprep.subr.bf16.mxu0 0
        %3973 = vmatpush1.bf16.msra.mxu0 0
        %3974 = vmatprep.subr.bf16.mxu0 0
        %3975 = vmatpush1.bf16.msra.mxu0 0
        %3976 = vmatprep.subr.bf16.mxu0 0
        %3977 = vmatpush1.bf16.msra.mxu0 0
        %3978 = vmatprep.subr.bf16.mxu0 0
        %3979 = vmatpush1.bf16.msra.mxu0 0
        %3980 = vmatprep.subr.bf16.mxu0 0
        %3981 = vmatpush1.bf16.msra.mxu0 0
        %3982 = vmatprep.subr.bf16.mxu0 0
        %3983 = vmatpush1.bf16.msra.mxu0 0
        %3984 = vmatprep.subr.bf16.mxu0 0
        %3985 = vmatpush1.bf16.msra.mxu0 %v3927
        %3986 = vmatprep.subr.bf16.mxu0 0
        %3987 = vmatpush2.bf16.msra.mxu0 0
        %3988 = vmatprep.subr.bf16.mxu0 0
        %3989 = vmatpush2.bf16.msra.mxu0 0
        %3990 = vmatprep.subr.bf16.mxu0 0
        %3991 = vmatpush2.bf16.msra.mxu0 0
        %3992 = vmatprep.subr.bf16.mxu0 0
        %3993 = vmatpush2.bf16.msra.mxu0 0
        %3994 = vmatprep.subr.bf16.mxu0 0
        %3995 = vmatpush2.bf16.msra.mxu0 0
        %3996 = vmatprep.subr.bf16.mxu0 0
        %3997 = vmatpush2.bf16.msra.mxu0 0
        %3998 = vmatprep.subr.bf16.mxu0 0
        %3999 = vmatpush2.bf16.msra.mxu0 0
        %4000 = vmatprep.subr.bf16.mxu0 0
        %4001 = vmatpush2.bf16.msra.mxu0 0
        %4002 = vmatprep.mubr.bf16.mxu0 0
        %4003 = vmatmul.mubr.bf16.gmra.mxu0 %v3918
        %v4004 = vpop.f32.mrf.mxu0
        %v4005 = vadd.f32 0.0, %v4004
        %v4006 = vpop.f32.mrf.mxu0
        %v4007 = vpop.f32.mrf.mxu0
        %v4008 = vpop.f32.mrf.mxu0
        %4009 = vdwg.mxu0
        %v4010 = vadd.f32 %v3900, %v3964
        %v4011 = vadd.f32 %v3901, %v3966
        %v4012 = vadd.f32 %v3902, %v4005
        %4013 = vrot.lane.b32.xlu0 %v3792, 104
        %v4014 = vpop.permute.xlu0 %4013
        %4015 = vrot.lane.b32.xlu0 %v1851, 56
        %v4016 = vpop.permute.xlu0 %4015
        %4017 = vrot.lane.b32.xlu0 %v1852, 56
        %v4018 = vpop.permute.xlu0 %4017
        %4019 = vrot.lane.b32.xlu0 %v1853, 56
        %v4020 = vpop.permute.xlu0 %4019
        %4021 = vrot.lane.b32.xlu0 %v1854, 56
        %v4022 = vpop.permute.xlu0 %4021
        %vm4023 = vcmask 457728
        %v4024 = vsel %vm4023, %v4016, %v4018
        %v4025 = vsel %vm4023, %v4018, %v4020
        %v4026 = vsel %vm4023, %v4020, %v4022
        %v4028 = vsel %vm232, %v4014, 0
        %v4031 = vsel %vm236, %v4024, 0
        %v4034 = vsel %vm236, %v4025, 0
        %v4037 = vsel %vm236, %v4026, 0
        %4039 = vmatprep.subr.bf16.mxu0 0
        %4040 = vmatpush1.bf16.msra.mxu0 0
        %4041 = vmatprep.subr.bf16.mxu0 0
        %4042 = vmatpush1.bf16.msra.mxu0 0
        %4043 = vmatprep.subr.bf16.mxu0 0
        %4044 = vmatpush1.bf16.msra.mxu0 0
        %4045 = vmatprep.subr.bf16.mxu0 0
        %4046 = vmatpush1.bf16.msra.mxu0 0
        %4047 = vmatprep.subr.bf16.mxu0 0
        %4048 = vmatpush1.bf16.msra.mxu0 0
        %4049 = vmatprep.subr.bf16.mxu0 0
        %4050 = vmatpush1.bf16.msra.mxu0 0
        %4051 = vmatprep.subr.bf16.mxu0 0
        %4052 = vmatpush1.bf16.msra.mxu0 0
        %4053 = vmatprep.subr.bf16.mxu0 %v4034
        %4054 = vmatpush1.bf16.msra.mxu0 %v4031
        %4055 = vmatprep.subr.bf16.mxu0 0
        %4056 = vmatpush2.bf16.msra.mxu0 0
        %4057 = vmatprep.subr.bf16.mxu0 0
        %4058 = vmatpush2.bf16.msra.mxu0 0
        %4059 = vmatprep.subr.bf16.mxu0 0
        %4060 = vmatpush2.bf16.msra.mxu0 0
        %4061 = vmatprep.subr.bf16.mxu0 0
        %4062 = vmatpush2.bf16.msra.mxu0 0
        %4063 = vmatprep.subr.bf16.mxu0 0
        %4064 = vmatpush2.bf16.msra.mxu0 0
        %4065 = vmatprep.subr.bf16.mxu0 0
        %4066 = vmatpush2.bf16.msra.mxu0 0
        %4067 = vmatprep.subr.bf16.mxu0 0
        %4068 = vmatpush2.bf16.msra.mxu0 0
        %4069 = vmatprep.subr.bf16.mxu0 0
        %4070 = vmatpush2.bf16.msra.mxu0 0
        %4071 = vmatprep.mubr.bf16.mxu0 0
        %4072 = vmatmul.mubr.bf16.gmra.mxu0 %v4028
        %v4073 = vpop.f32.mrf.mxu0
        %v4074 = vadd.f32 0.0, %v4073
        %v4075 = vpop.f32.mrf.mxu0
        %v4076 = vadd.f32 0.0, %v4075
        %v4077 = vpop.f32.mrf.mxu0
        %v4078 = vpop.f32.mrf.mxu0
        %4079 = vdwg.mxu0
        %4080 = vmatprep.subr.bf16.mxu0 0
        %4081 = vmatpush1.bf16.msra.mxu0 0
        %4082 = vmatprep.subr.bf16.mxu0 0
        %4083 = vmatpush1.bf16.msra.mxu0 0
        %4084 = vmatprep.subr.bf16.mxu0 0
        %4085 = vmatpush1.bf16.msra.mxu0 0
        %4086 = vmatprep.subr.bf16.mxu0 0
        %4087 = vmatpush1.bf16.msra.mxu0 0
        %4088 = vmatprep.subr.bf16.mxu0 0
        %4089 = vmatpush1.bf16.msra.mxu0 0
        %4090 = vmatprep.subr.bf16.mxu0 0
        %4091 = vmatpush1.bf16.msra.mxu0 0
        %4092 = vmatprep.subr.bf16.mxu0 0
        %4093 = vmatpush1.bf16.msra.mxu0 0
        %4094 = vmatprep.subr.bf16.mxu0 0
        %4095 = vmatpush1.bf16.msra.mxu0 %v4037
        %4096 = vmatprep.subr.bf16.mxu0 0
        %4097 = vmatpush2.bf16.msra.mxu0 0
        %4098 = vmatprep.subr.bf16.mxu0 0
        %4099 = vmatpush2.bf16.msra.mxu0 0
        %4100 = vmatprep.subr.bf16.mxu0 0
        %4101 = vmatpush2.bf16.msra.mxu0 0
        %4102 = vmatprep.subr.bf16.mxu0 0
        %4103 = vmatpush2.bf16.msra.mxu0 0
        %4104 = vmatprep.subr.bf16.mxu0 0
        %4105 = vmatpush2.bf16.msra.mxu0 0
        %4106 = vmatprep.subr.bf16.mxu0 0
        %4107 = vmatpush2.bf16.msra.mxu0 0
        %4108 = vmatprep.subr.bf16.mxu0 0
        %4109 = vmatpush2.bf16.msra.mxu0 0
        %4110 = vmatprep.subr.bf16.mxu0 0
        %4111 = vmatpush2.bf16.msra.mxu0 0
        %4112 = vmatprep.mubr.bf16.mxu0 0
        %4113 = vmatmul.mubr.bf16.gmra.mxu0 %v4028
        %v4114 = vpop.f32.mrf.mxu0
        %v4115 = vadd.f32 0.0, %v4114
        %v4116 = vpop.f32.mrf.mxu0
        %v4117 = vpop.f32.mrf.mxu0
        %v4118 = vpop.f32.mrf.mxu0
        %4119 = vdwg.mxu0
        %v4120 = vadd.f32 %v4010, %v4074
        %v4121 = vadd.f32 %v4011, %v4076
        %v4122 = vadd.f32 %v4012, %v4115
        %4124 = vset.pattern.permute.xlu0 0
        %4125 = vperm.xlu0 %4124, %v201
        %v4126 = vpop.permute.xlu0 %4125
        %v4128 = vadd.f32 %v4120, %v4126
        %v4129 = vadd.f32 %v4121, %v4126
        %v4130 = vadd.f32 %v4122, %v4126
        %4131 = vst [vmem:[%s199] sm:$0xff] %v4128
        %4132 = vst [vmem:[%s199 + $0x8] sm:$0xff] %v4129
        %4133 = vst [vmem:[%s199 + $0x10] sm:$0xff] %v4130
        %s4134 = sand.u32 %s97, 1
        %s4135 = scalar_lea.sflag [#allocation4], %s4134
        %s4136 = sand.u32 %s97, 1
        %s4137 = smul.addr %s4136, 24
        %s4138 = scalar_lea.vmem [#allocation7], %s4137
        // Predicated region
        $region41: #{tpu_custom_call.1} parent=31 // pred_check
          %p4139 = pneg %p107
        $region42: #{tpu_custom_call.1} parent=31 // pred_check_branch
          %4141 = sbr.rel (%p4139) target = $region44
        $region43: #{tpu_custom_call.1} parent=31 // pred_region
          %s4143 = ssub.s32 384, 384
          %4144 = vsyncadd %s4135, %s4143
          %s4145 = smul.addr %s21, 3
          %s4146 = smul.addr %s4145, 128
          %s4147 = scalar_lea.hbm %s3, %s4146
          %s4149 = sshll.u32 %s4138, 4
          %s4150 = int_to_ptr.vmem [resolvable:$true] %s4149
          %4152 = dma.vmem_to_hbm [thread:$0]  %s4150, 384, %s4147, %s4135
        $region44: #{tpu_custom_call.1} parent=31 // pred_fallthru
          _
      $region32: #{tpu_custom_call.1} parent=5 // pred_fallthru
        _
      %p4153 = scmp.le.s32.totalorder 2, %s16
      // Predicated region
      $region45: #{tpu_custom_call.1} parent=5 // pred_check
        %p4154 = pneg %p4153
      $region46: #{tpu_custom_call.1} parent=5 // pred_check_branch
        %4156 = sbr.rel (%p4154) target = $region48
      $region47: #{tpu_custom_call.1} parent=5 // pred_region
        %s4157 = ssub.s32 %s16, 2
        // Predicated region
        $region49: #{tpu_custom_call.1} parent=47 // pred_check
          %p4158 = pneg %p113
        $region50: #{tpu_custom_call.1} parent=47 // pred_check_branch
          %4160 = sbr.rel (%p4158) target = $region52
        $region51: #{tpu_custom_call.1} parent=47 // pred_region
          %s4161 = sand.u32 %s98, 1
          %s4162 = scalar_lea.sflag [#allocation4], %s4161
          %s4163 = sand.u32 %s98, 1
          %s4164 = smul.addr %s4163, 24
          %s4165 = scalar_lea.vmem [#allocation7], %s4164
          %4166 = dma.done %s4162, 384
        $region52: #{tpu_custom_call.1} parent=47 // pred_fallthru
          _
      $region48: #{tpu_custom_call.1} parent=5 // pred_fallthru
        _
    $region6: #{tpu_custom_call.1} parent=1 // loop_footer
      %s20 = sadd.s32 1, %s16
    $region7: #{tpu_custom_call.1} parent=1 // loop_footer_branch
      %15 = sbr.rel target = $region3
    $region8: #{tpu_custom_call.1} parent=1 // loop_exit
      _
    %4167 = vsyncpa [#allocation3], 1
    %s4168 = scalar_lea.sflag [#allocation3], 1
    %4169 = vsyncpa %s4168, 1
    %4170 = vsyncpa [#allocation6], 1
    %4171 = vsyncpa [#allocation4], 1
    %s4172 = scalar_lea.sflag [#allocation4], 1
    %4173 = vsyncpa %s4172, 1

</llo_original>
